<compile_context>
chip_gen: v7x
topology: tpu7x:2x2x1
jax: 0.10.0
libtpu: 0.0.40
codegen_flags: <defaults>
</compile_context>

<pallas_src>
import functools

import jax
import jax.numpy as jnp
from jax.experimental import pallas as pl
from jax.experimental.pallas import tpu as pltpu


def _round_up(n, m):
    return ((n + m - 1) // m) * m


# ----------------------------------------------------------------------------
# Kernel: all S Monte-Carlo forward passes in one invocation.
# ----------------------------------------------------------------------------
def _bayes_mlp_kernel(x_ref, p_ref, e_ref, o_ref, *, d_in, hidden, r1, r2):
    # x_ref: (d_in, B, C)   input pre-broadcast along lanes (wrapper-side)
    # p_ref: (2, R, C)      {mu, sigma} packed slab (resident)
    # e_ref: (S, R, C)      per-sample standard-normal draws (resident)
    # o_ref: (S, B, C)      outputs (columns >= d_out are exactly zero)
    mu = p_ref[0]                           # (R, C)
    sigma = p_ref[1]                        # (R, C)
    eps = e_ref[...]                        # (S, R, C)

    # Sample every weight/bias of all 3 layers for all S draws: one VPU pass.
    sampled = mu + sigma * eps              # (S, R, C)

    # ---- layer 1: K = d_in broadcast multiply-adds on the VPU (no MXU) ----
    h = sampled[:, d_in:d_in + 1, :]        # bias row -> (S, 1, C)
    for k in range(d_in):                   # static unroll (d_in small)
        h = h + x_ref[k][None, :, :] * sampled[:, k:k + 1, :]
    h = jnp.maximum(h, 0.0)                 # (S, B, C)

    # ---- layer 2: batched-over-samples matmul on the MXU, ReLU ----
    w2 = sampled[:, r1:r1 + hidden, :]                  # (S, C, C), 8-aligned
    b2 = sampled[:, r1 + hidden:r1 + hidden + 1, :]     # (S, 1, C)
    h = jnp.einsum("sbk,sko->sbo", h, w2,
                   preferred_element_type=jnp.float32) + b2
    h = jnp.maximum(h, 0.0)

    # ---- layer 3: batched matmul, no ReLU. Columns >= d_out are zero because
    # mu = sigma = eps = 0 in the lane padding; sliced away by the wrapper. ----
    w3 = sampled[:, r2:r2 + hidden, :]
    b3 = sampled[:, r2 + hidden:r2 + hidden + 1, :]
    o_ref[...] = jnp.einsum("sbk,sko->sbo", h, w3,
                            preferred_element_type=jnp.float32) + b3


# ----------------------------------------------------------------------------
# Wrapper-side packing (one-time per parameter set / per eps batch).
# ----------------------------------------------------------------------------
def _pack_layer(w, b, lane_width, sublane_rows):
    """w: (out, in) PyTorch layout -> pre-transposed (in, out); b: bias.
    Returns an (sublane_rows, lane_width) block: weight rows + one bias row,
    zero-padded to an 8-row boundary and to lane_width lanes."""
    blk = jnp.concatenate([w.T, b.reshape(1, -1)], axis=0)   # (in+1, out)
    rpad = sublane_rows - blk.shape[0]
    cpad = lane_width - blk.shape[1]
    return jnp.pad(blk, ((0, rpad), (0, cpad)))


def pack_param_slab(params):
    """(2, R, C) slab holding {mu, sigma}; sigma = exp(logsigma) hoisted here."""
    hidden, d_in = params["w1_mu"].shape
    d_out = params["w3_mu"].shape[0]
    assert d_out <= hidden, "packing assumes output_dim <= hidden_dim"
    C = hidden
    r_l1 = _round_up(d_in + 1, 8)
    r_l23 = _round_up(hidden + 1, 8)

    def slab(get_w, get_b):
        return jnp.concatenate(
            [
                _pack_layer(get_w("w1"), get_b("b1"), C, r_l1),
                _pack_layer(get_w("w2"), get_b("b2"), C, r_l23),
                _pack_layer(get_w("w3"), get_b("b3"), C, r_l23),
            ],
            axis=0,
        )

    mu = slab(lambda n: params[n + "_mu"], lambda n: params[n + "_mu"])
    sigma = slab(lambda n: jnp.exp(params[n + "_logsigma"]),
                 lambda n: jnp.exp(params[n + "_logsigma"]))
    return jnp.stack([mu, sigma], axis=0)      # (2, R, C)


def pack_eps_slab(eps_list, hidden, d_in):
    """(S, R, C) slab of per-sample eps draws, same row layout as params."""
    C = hidden
    r_l1 = _round_up(d_in + 1, 8)
    r_l23 = _round_up(hidden + 1, 8)
    slabs = [
        jnp.concatenate(
            [
                _pack_layer(e["w1_eps"], e["b1_eps"], C, r_l1),
                _pack_layer(e["w2_eps"], e["b2_eps"], C, r_l23),
                _pack_layer(e["w3_eps"], e["b3_eps"], C, r_l23),
            ],
            axis=0,
        )
        for e in eps_list
    ]
    return jnp.stack(slabs, axis=0)            # (S, R, C)


# ----------------------------------------------------------------------------
# Forward: S stochastic forward passes in ONE pallas_call invocation.
# ----------------------------------------------------------------------------
def bayesian_nn_flipout_forward(x, params, eps_list):
    """Returns (S, B, D_out): one forward pass per eps draw. S=1 reproduces the
    module's single stochastic forward()."""
    B, d_in = x.shape
    hidden = params["w1_mu"].shape[0]
    d_out = params["w3_mu"].shape[0]
    C = hidden

    p_slab = pack_param_slab(params)                 # (2, R, C)
    e_slab = pack_eps_slab(eps_list, hidden, d_in)   # (S, R, C)
    S, R, _ = e_slab.shape

    r1 = _round_up(d_in + 1, 8)                      # layer-2 block start row
    r2 = r1 + _round_up(hidden + 1, 8)               # layer-3 block start row

    # Pre-broadcast x to (d_in, B, C) so layer 1 is pure in-kernel VPU FMAs.
    x_bc = jnp.broadcast_to(
        jnp.transpose(x).astype(jnp.float32)[:, :, None], (d_in, B, C)
    )

    kernel = functools.partial(
        _bayes_mlp_kernel, d_in=d_in, hidden=hidden, r1=r1, r2=r2
    )

    out = pl.pallas_call(
        kernel,
        out_shape=jax.ShapeDtypeStruct((S, B, C), jnp.float32),
        grid=(1,),                                   # single invocation
        in_specs=[
            pl.BlockSpec((d_in, B, C), lambda i: (0, 0, 0)),   # x: resident
            pl.BlockSpec((2, R, C), lambda i: (0, 0, 0)),      # {mu, sigma}
            pl.BlockSpec((S, R, C), lambda i: (0, 0, 0)),      # all eps draws
        ],
        out_specs=pl.BlockSpec((S, B, C), lambda i: (0, 0, 0)),
        compiler_params=pltpu.CompilerParams(
            dimension_semantics=("arbitrary",),
        ),
    )(x_bc, p_slab, e_slab)

    return out[:, :, :d_out]


# ----------------------------------------------------------------------------
# Init / eps sampling / pure-JAX reference (mirrors the PyTorch module).
# ----------------------------------------------------------------------------
def init_params(key, input_dim, hidden_dim, output_dim):
    """weight_mu, bias_mu ~ N(0, 0.9); logsigma filled with -2.5 (PyTorch init)."""
    ks = jax.random.split(key, 6)
    p = {}
    p["w1_mu"] = 0.9 * jax.random.normal(ks[0], (hidden_dim, input_dim), jnp.float32)
    p["w1_logsigma"] = jnp.full((hidden_dim, input_dim), -2.5, jnp.float32)
    p["b1_mu"] = 0.9 * jax.random.normal(ks[1], (1, hidden_dim), jnp.float32)
    p["b1_logsigma"] = jnp.full((1, hidden_dim), -2.5, jnp.float32)
    p["w2_mu"] = 0.9 * jax.random.normal(ks[2], (hidden_dim, hidden_dim), jnp.float32)
    p["w2_logsigma"] = jnp.full((hidden_dim, hidden_dim), -2.5, jnp.float32)
    p["b2_mu"] = 0.9 * jax.random.normal(ks[3], (1, hidden_dim), jnp.float32)
    p["b2_logsigma"] = jnp.full((1, hidden_dim), -2.5, jnp.float32)
    p["w3_mu"] = 0.9 * jax.random.normal(ks[4], (output_dim, hidden_dim), jnp.float32)
    p["w3_logsigma"] = jnp.full((output_dim, hidden_dim), -2.5, jnp.float32)
    p["b3_mu"] = 0.9 * jax.random.normal(ks[5], (1, output_dim), jnp.float32)
    p["b3_logsigma"] = jnp.full((1, output_dim), -2.5, jnp.float32)
    return p


def sample_eps(key, params):
    """Deterministic stand-in for torch.randn_like on each sampled parameter."""
    ks = jax.random.split(key, 6)
    return {
        "w1_eps": jax.random.normal(ks[0], params["w1_mu"].shape, jnp.float32),
        "b1_eps": jax.random.normal(ks[1], params["b1_mu"].shape, jnp.float32),
        "w2_eps": jax.random.normal(ks[2], params["w2_mu"].shape, jnp.float32),
        "b2_eps": jax.random.normal(ks[3], params["b2_mu"].shape, jnp.float32),
        "w3_eps": jax.random.normal(ks[4], params["w3_mu"].shape, jnp.float32),
        "b3_eps": jax.random.normal(ks[5], params["b3_mu"].shape, jnp.float32),
    }


def _reference_forward(x, params, eps):
    def layer(h, wm, wls, we, bm, bls, be, relu):
        w = wm + jnp.exp(wls) * we
        b = bm + jnp.exp(bls) * be
        y = h @ w.T + b
        return jnp.maximum(y, 0.0) if relu else y

    h = layer(x, params["w1_mu"], params["w1_logsigma"], eps["w1_eps"],
              params["b1_mu"], params["b1_logsigma"], eps["b1_eps"], True)
    h = layer(h, params["w2_mu"], params["w2_logsigma"], eps["w2_eps"],
              params["b2_mu"], params["b2_logsigma"], eps["b2_eps"], True)
    return layer(h, params["w3_mu"], params["w3_logsigma"], eps["w3_eps"],
                 params["b3_mu"], params["b3_logsigma"], eps["b3_eps"], False)


if __name__ == "__main__":
    # Two-moons setup: input_dim=2, hidden_dim=32, output_dim=2.
    INPUT_DIM, HIDDEN_DIM, OUTPUT_DIM = 2, 32, 2
    BATCH, N_SAMPLES = 8, 16

    key = jax.random.PRNGKey(0)
    k_x, k_p, k_e = jax.random.split(key, 3)

    x = jax.random.normal(k_x, (BATCH, INPUT_DIM), jnp.float32)
    params = init_params(k_p, INPUT_DIM, HIDDEN_DIM, OUTPUT_DIM)
    eps_list = [sample_eps(k, params) for k in jax.random.split(k_e, N_SAMPLES)]

    out = bayesian_nn_flipout_forward(x, params, eps_list)   # (S, B, D_out)
    out = jax.block_until_ready(out)

    ref = jnp.stack([_reference_forward(x, params, e) for e in eps_list])
    assert out.shape == (N_SAMPLES, BATCH, OUTPUT_DIM)
    assert jnp.allclose(out, ref, atol=1e-4, rtol=1e-5), "mismatch vs reference"

    # predict_mean_and_variance-style summary over the S kernel samples
    # (plain JAX reduction over the kernel's stacked output).
    mean = out.mean(axis=0)
    var = out.var(axis=0, ddof=1)
    jax.block_until_ready((mean, var))

    # TODO(synk): kl_divergence() is a training-loss utility (closed-form Normal
    # KL over parameters), not part of the forward hot path; left in plain JAX.

    print("KERNEL_OK")
</pallas_src>

<mosaic_0001>
module attributes {stable_mosaic.version = 11 : i64} {
  func.func @_bayes_mlp_kernel(%arg0: i32, %arg1: memref<2x8x32xf32, #tpu.memory_space<vmem>>, %arg2: memref<2x88x32xf32, #tpu.memory_space<vmem>>, %arg3: memref<16x88x32xf32, #tpu.memory_space<vmem>>, %arg4: memref<16x8x32xf32, #tpu.memory_space<vmem>>) attributes {dimension_semantics = [#tpu.dimension_semantics<arbitrary>], iteration_bounds = array<i64: 1>, scalar_prefetch = 0 : i64, scratch_operands = 0 : i64, tpu.core_type = #tpu.core_type<tc>, window_params = [{pipeline_mode = #tpu.pipeline_mode<synchronous>, transform_indices = @transform_0, window_bounds = array<i64: 2, 8, 32>}, {pipeline_mode = #tpu.pipeline_mode<synchronous>, transform_indices = @transform_1, window_bounds = array<i64: 2, 88, 32>}, {pipeline_mode = #tpu.pipeline_mode<synchronous>, transform_indices = @transform_2, window_bounds = array<i64: 16, 88, 32>}, {pipeline_mode = #tpu.pipeline_mode<synchronous>, transform_indices = @transform_3, window_bounds = array<i64: 16, 8, 32>}]} {
    %c0 = arith.constant 0 : index
    %c0_0 = arith.constant 0 : index
    %c0_1 = arith.constant 0 : index
    %0 = vector.load %arg2[%c0, %c0_0, %c0_1] : memref<2x88x32xf32, #tpu.memory_space<vmem>>, vector<1x88x32xf32>
    %1 = vector.shape_cast %0 : vector<1x88x32xf32> to vector<88x32xf32>
    %c1 = arith.constant 1 : index
    %c0_2 = arith.constant 0 : index
    %c0_3 = arith.constant 0 : index
    %2 = vector.load %arg2[%c1, %c0_2, %c0_3] : memref<2x88x32xf32, #tpu.memory_space<vmem>>, vector<1x88x32xf32>
    %3 = vector.shape_cast %2 : vector<1x88x32xf32> to vector<88x32xf32>
    %c0_4 = arith.constant 0 : index
    %c0_5 = arith.constant 0 : index
    %c0_6 = arith.constant 0 : index
    %4 = vector.load %arg3[%c0_4, %c0_5, %c0_6] : memref<16x88x32xf32, #tpu.memory_space<vmem>>, vector<16x88x32xf32>
    %5 = vector.shape_cast %3 : vector<88x32xf32> to vector<1x88x32xf32>
    %6 = vector.broadcast %5 : vector<1x88x32xf32> to vector<16x88x32xf32>
    %7 = arith.mulf %6, %4 : vector<16x88x32xf32>
    %8 = vector.shape_cast %1 : vector<88x32xf32> to vector<1x88x32xf32>
    %9 = vector.broadcast %8 : vector<1x88x32xf32> to vector<16x88x32xf32>
    %10 = arith.addf %9, %7 : vector<16x88x32xf32>
    %11 = vector.extract_strided_slice %10 {offsets = [0, 2, 0], sizes = [16, 1, 32], strides = [1, 1, 1]} : vector<16x88x32xf32> to vector<16x1x32xf32>
    %c0_7 = arith.constant 0 : index
    %c0_8 = arith.constant 0 : index
    %c0_9 = arith.constant 0 : index
    %12 = vector.load %arg1[%c0_7, %c0_8, %c0_9] : memref<2x8x32xf32, #tpu.memory_space<vmem>>, vector<1x8x32xf32>
    %13 = vector.shape_cast %12 : vector<1x8x32xf32> to vector<8x32xf32>
    %14 = vector.shape_cast %13 : vector<8x32xf32> to vector<1x8x32xf32>
    %15 = vector.extract_strided_slice %10 {offsets = [0, 0, 0], sizes = [16, 1, 32], strides = [1, 1, 1]} : vector<16x88x32xf32> to vector<16x1x32xf32>
    %16 = vector.broadcast %14 : vector<1x8x32xf32> to vector<16x8x32xf32>
    %17 = vector.broadcast %15 : vector<16x1x32xf32> to vector<16x8x32xf32>
    %18 = arith.mulf %16, %17 : vector<16x8x32xf32>
    %19 = vector.broadcast %11 : vector<16x1x32xf32> to vector<16x8x32xf32>
    %20 = arith.addf %19, %18 : vector<16x8x32xf32>
    %c1_10 = arith.constant 1 : index
    %c0_11 = arith.constant 0 : index
    %c0_12 = arith.constant 0 : index
    %21 = vector.load %arg1[%c1_10, %c0_11, %c0_12] : memref<2x8x32xf32, #tpu.memory_space<vmem>>, vector<1x8x32xf32>
    %22 = vector.shape_cast %21 : vector<1x8x32xf32> to vector<8x32xf32>
    %23 = vector.shape_cast %22 : vector<8x32xf32> to vector<1x8x32xf32>
    %24 = vector.extract_strided_slice %10 {offsets = [0, 1, 0], sizes = [16, 1, 32], strides = [1, 1, 1]} : vector<16x88x32xf32> to vector<16x1x32xf32>
    %25 = vector.broadcast %23 : vector<1x8x32xf32> to vector<16x8x32xf32>
    %26 = vector.broadcast %24 : vector<16x1x32xf32> to vector<16x8x32xf32>
    %27 = arith.mulf %25, %26 : vector<16x8x32xf32>
    %28 = arith.addf %20, %27 : vector<16x8x32xf32>
    %cst = arith.constant 0.000000e+00 : f32
    %29 = vector.broadcast %cst : f32 to vector<16x8x32xf32>
    %30 = arith.maximumf %28, %29 : vector<16x8x32xf32>
    %31 = vector.extract_strided_slice %10 {offsets = [0, 8, 0], sizes = [16, 32, 32], strides = [1, 1, 1]} : vector<16x88x32xf32> to vector<16x32x32xf32>
    %32 = vector.extract_strided_slice %10 {offsets = [0, 40, 0], sizes = [16, 1, 32], strides = [1, 1, 1]} : vector<16x88x32xf32> to vector<16x1x32xf32>
    "tpu.trace_start"() <{level = 10 : i32, message = "sbk,sko->sbo"}> : () -> ()
    %cst_13 = arith.constant dense<0.000000e+00> : vector<16x8x32xf32>
    %33 = tpu.matmul %30, %31, %cst_13 {dimension_numbers = #tpu.dot_dimension_numbers<[2], [1], [1], [2], [0, 0, 0, 1, 1, 2], [0], [0]>} : vector<16x8x32xf32>, vector<16x32x32xf32>, vector<16x8x32xf32> -> vector<16x8x32xf32>
    "tpu.trace_stop"() : () -> ()
    %34 = vector.broadcast %32 : vector<16x1x32xf32> to vector<16x8x32xf32>
    %35 = arith.addf %33, %34 : vector<16x8x32xf32>
    %cst_14 = arith.constant 0.000000e+00 : f32
    %36 = vector.broadcast %cst_14 : f32 to vector<16x8x32xf32>
    %37 = arith.maximumf %35, %36 : vector<16x8x32xf32>
    %38 = vector.extract_strided_slice %10 {offsets = [0, 48, 0], sizes = [16, 32, 32], strides = [1, 1, 1]} : vector<16x88x32xf32> to vector<16x32x32xf32>
    %39 = vector.extract_strided_slice %10 {offsets = [0, 80, 0], sizes = [16, 1, 32], strides = [1, 1, 1]} : vector<16x88x32xf32> to vector<16x1x32xf32>
    "tpu.trace_start"() <{level = 10 : i32, message = "sbk,sko->sbo"}> : () -> ()
    %cst_15 = arith.constant dense<0.000000e+00> : vector<16x8x32xf32>
    %40 = tpu.matmul %37, %38, %cst_15 {dimension_numbers = #tpu.dot_dimension_numbers<[2], [1], [1], [2], [0, 0, 0, 1, 1, 2], [0], [0]>} : vector<16x8x32xf32>, vector<16x32x32xf32>, vector<16x8x32xf32> -> vector<16x8x32xf32>
    "tpu.trace_stop"() : () -> ()
    %41 = vector.broadcast %39 : vector<16x1x32xf32> to vector<16x8x32xf32>
    %42 = arith.addf %40, %41 : vector<16x8x32xf32>
    %c0_16 = arith.constant 0 : index
    %c0_17 = arith.constant 0 : index
    %c0_18 = arith.constant 0 : index
    %43 = vector.load %arg4[%c0_16, %c0_17, %c0_18] : memref<16x8x32xf32, #tpu.memory_space<vmem>>, vector<16x8x32xf32>
    tpu.vector_store %arg4[%c0_16, %c0_17, %c0_18], %42 {strides = array<i32>} : memref<16x8x32xf32, #tpu.memory_space<vmem>>, vector<16x8x32xf32>,
    return
  }
  func.func @transform_0(%arg0: i32) -> (i32, i32, i32) {
    %c0_i32 = arith.constant 0 : i32
    %c0_i32_0 = arith.constant 0 : i32
    %c0_i32_1 = arith.constant 0 : i32
    %c0_i32_2 = arith.constant 0 : i32
    return %c0_i32, %c0_i32_0, %c0_i32_1 : i32, i32, i32
  }
  func.func @transform_1(%arg0: i32) -> (i32, i32, i32) {
    %c0_i32 = arith.constant 0 : i32
    %c0_i32_0 = arith.constant 0 : i32
    %c0_i32_1 = arith.constant 0 : i32
    %c0_i32_2 = arith.constant 0 : i32
    return %c0_i32, %c0_i32_0, %c0_i32_1 : i32, i32, i32
  }
  func.func @transform_2(%arg0: i32) -> (i32, i32, i32) {
    %c0_i32 = arith.constant 0 : i32
    %c0_i32_0 = arith.constant 0 : i32
    %c0_i32_1 = arith.constant 0 : i32
    %c0_i32_2 = arith.constant 0 : i32
    return %c0_i32, %c0_i32_0, %c0_i32_1 : i32, i32, i32
  }
  func.func @transform_3(%arg0: i32) -> (i32, i32, i32) {
    %c0_i32 = arith.constant 0 : i32
    %c0_i32_0 = arith.constant 0 : i32
    %c0_i32_1 = arith.constant 0 : i32
    %c0_i32_2 = arith.constant 0 : i32
    return %c0_i32, %c0_i32_0, %c0_i32_1 : i32, i32, i32
  }
}

</mosaic_0001>

<llo_original>
// kernel: tpu_custom_call.1
$region0: #{tpu_custom_call.1}
  #allocation0 [shape = 'u32[]', space=smem, size = 0x4, offset = 0x4, fixed_abs, tag = 'smem constant byte address 0x4 - core index']
  #allocation1 [shape = 'u32[144,128]{1,0:T(1,128)}', space=vmem, size = 0x12000, scoped, tag = 'internal scratch']
  %s0 = inlined_call_operand.vmem [shape: f32[2,8,32], index: 0, kind: input, shape index: {}]
  %s1 = inlined_call_operand.vmem [shape: f32[2,88,32], index: 1, kind: input, shape index: {}]
  %s2 = inlined_call_operand.vmem [shape: f32[16,88,32], index: 2, kind: input, shape index: {}]
  %s3 = inlined_call_operand.hbm [shape: f32[16,8,32], index: 3, kind: output, shape index: {}]
  %s4 = sld [smem:[#allocation0]]
  $region22: #{tpu_custom_call.1} parent=0
    _
  %s6 = ssub.s32 1, %s4
  %s7 = scalar_select 0, %s6, %s4
  $region1: #{tpu_custom_call.1} parent=0
    #allocation2 [shape = 'u8[65536]{0}', space=vmem, size = 0x10000, scoped, tag = 'output window, operand 0, single buffered']
    #allocation3 [shape = 's32[1]{0}', space=sflag, size = 0x4, scoped, tag = 'scoped memory for tpu_custom_call.1']
    %8 = vsyncpa [#allocation3], 0
    // Predicated region
    $region2: #{tpu_custom_call.1} parent=1 // pred_check
      _
    $region3: #{tpu_custom_call.1} parent=1 // pred_check_branch
      %10 = sbr.rel (0) target = $region5
    $region4: #{tpu_custom_call.1} parent=1 // pred_region
      _
    $region5: #{tpu_custom_call.1} parent=1 // pred_fallthru
      _
    // Predicated region
    $region6: #{tpu_custom_call.1} parent=1 // pred_check
      _
    $region7: #{tpu_custom_call.1} parent=1 // pred_check_branch
      %12 = sbr.rel (0) target = $region9
    $region8: #{tpu_custom_call.1} parent=1 // pred_region
      _
    $region9: #{tpu_custom_call.1} parent=1 // pred_fallthru
      _
    // Predicated region
    $region10: #{tpu_custom_call.1} parent=1 // pred_check
      _
    $region11: #{tpu_custom_call.1} parent=1 // pred_check_branch
      %14 = sbr.rel (0) target = $region13
    $region12: #{tpu_custom_call.1} parent=1 // pred_region
      _
    $region13: #{tpu_custom_call.1} parent=1 // pred_fallthru
      _
    %v15 = vld [vmem:[%s1] sm:$0xff]
    %v16 = vld [vmem:[%s1 + $0x8] sm:$0xff]
    %v17 = vld [vmem:[%s1 + $0x10] sm:$0xff]
    %v18 = vld [vmem:[%s1 + $0x18] sm:$0xff]
    %v19 = vld [vmem:[%s1 + $0x20] sm:$0xff]
    %v20 = vld [vmem:[%s1 + $0x28] sm:$0xff]
    %v21 = vld [vmem:[%s1 + $0x30] sm:$0xff]
    %v22 = vld [vmem:[%s1 + $0x38] sm:$0xff]
    %v23 = vld [vmem:[%s1 + $0x40] sm:$0xff]
    %v24 = vld [vmem:[%s1 + $0x48] sm:$0xff]
    %v25 = vld [vmem:[%s1 + $0x50] sm:$0xff]
    %s26 = scalar_lea.vmem %s1, 88
    %v27 = vld [vmem:[%s26] sm:$0xff]
    %v28 = vld [vmem:[%s26 + $0x8] sm:$0xff]
    %v29 = vld [vmem:[%s26 + $0x10] sm:$0xff]
    %v30 = vld [vmem:[%s26 + $0x18] sm:$0xff]
    %v31 = vld [vmem:[%s26 + $0x20] sm:$0xff]
    %v32 = vld [vmem:[%s26 + $0x28] sm:$0xff]
    %v33 = vld [vmem:[%s26 + $0x30] sm:$0xff]
    %v34 = vld [vmem:[%s26 + $0x38] sm:$0xff]
    %v35 = vld [vmem:[%s26 + $0x40] sm:$0xff]
    %v36 = vld [vmem:[%s26 + $0x48] sm:$0xff]
    %v37 = vld [vmem:[%s26 + $0x50] sm:$0xff]
    %v38 = vld [vmem:[%s2] sm:$0xff]
    %v39 = vld [vmem:[%s2 + $0x8] sm:$0xff]
    %v40 = vld [vmem:[%s2 + $0x10] sm:$0xff]
    %v41 = vld [vmem:[%s2 + $0x18] sm:$0xff]
    %v42 = vld [vmem:[%s2 + $0x20] sm:$0xff]
    %v43 = vld [vmem:[%s2 + $0x28] sm:$0xff]
    %v44 = vld [vmem:[%s2 + $0x30] sm:$0xff]
    %v45 = vld [vmem:[%s2 + $0x38] sm:$0xff]
    %v46 = vld [vmem:[%s2 + $0x40] sm:$0xff]
    %v47 = vld [vmem:[%s2 + $0x48] sm:$0xff]
    %v48 = vld [vmem:[%s2 + $0x50] sm:$0xff]
    %v49 = vld [vmem:[%s2 + $0x58] sm:$0xff]
    %v50 = vld [vmem:[%s2 + $0x60] sm:$0xff]
    %v51 = vld [vmem:[%s2 + $0x68] sm:$0xff]
    %v52 = vld [vmem:[%s2 + $0x70] sm:$0xff]
    %v53 = vld [vmem:[%s2 + $0x78] sm:$0xff]
    %v54 = vld [vmem:[%s2 + $0x80] sm:$0xff]
    %v55 = vld [vmem:[%s2 + $0x88] sm:$0xff]
    %v56 = vld [vmem:[%s2 + $0x90] sm:$0xff]
    %v57 = vld [vmem:[%s2 + $0x98] sm:$0xff]
    %v58 = vld [vmem:[%s2 + $0xa0] sm:$0xff]
    %v59 = vld [vmem:[%s2 + $0xa8] sm:$0xff]
    %v60 = vld [vmem:[%s2 + $0xb0] sm:$0xff]
    %v61 = vld [vmem:[%s2 + $0xb8] sm:$0xff]
    %v62 = vld [vmem:[%s2 + $0xc0] sm:$0xff]
    %v63 = vld [vmem:[%s2 + $0xc8] sm:$0xff]
    %v64 = vld [vmem:[%s2 + $0xd0] sm:$0xff]
    %v65 = vld [vmem:[%s2 + $0xd8] sm:$0xff]
    %v66 = vld [vmem:[%s2 + $0xe0] sm:$0xff]
    %v67 = vld [vmem:[%s2 + $0xe8] sm:$0xff]
    %v68 = vld [vmem:[%s2 + $0xf0] sm:$0xff]
    %v69 = vld [vmem:[%s2 + $0xf8] sm:$0xff]
    %v70 = vld [vmem:[%s2 + $0x100] sm:$0xff]
    %v71 = vld [vmem:[%s2 + $0x108] sm:$0xff]
    %v72 = vld [vmem:[%s2 + $0x110] sm:$0xff]
    %v73 = vld [vmem:[%s2 + $0x118] sm:$0xff]
    %v74 = vld [vmem:[%s2 + $0x120] sm:$0xff]
    %v75 = vld [vmem:[%s2 + $0x128] sm:$0xff]
    %v76 = vld [vmem:[%s2 + $0x130] sm:$0xff]
    %v77 = vld [vmem:[%s2 + $0x138] sm:$0xff]
    %v78 = vld [vmem:[%s2 + $0x140] sm:$0xff]
    %v79 = vld [vmem:[%s2 + $0x148] sm:$0xff]
    %v80 = vld [vmem:[%s2 + $0x150] sm:$0xff]
    %v81 = vld [vmem:[%s2 + $0x158] sm:$0xff]
    %v82 = vld [vmem:[%s2 + $0x160] sm:$0xff]
    %v83 = vld [vmem:[%s2 + $0x168] sm:$0xff]
    %v84 = vld [vmem:[%s2 + $0x170] sm:$0xff]
    %v85 = vld [vmem:[%s2 + $0x178] sm:$0xff]
    %v86 = vld [vmem:[%s2 + $0x180] sm:$0xff]
    %v87 = vld [vmem:[%s2 + $0x188] sm:$0xff]
    %v88 = vld [vmem:[%s2 + $0x190] sm:$0xff]
    %v89 = vld [vmem:[%s2 + $0x198] sm:$0xff]
    %v90 = vld [vmem:[%s2 + $0x1a0] sm:$0xff]
    %v91 = vld [vmem:[%s2 + $0x1a8] sm:$0xff]
    %v92 = vld [vmem:[%s2 + $0x1b0] sm:$0xff]
    %v93 = vld [vmem:[%s2 + $0x1b8] sm:$0xff]
    %v94 = vld [vmem:[%s2 + $0x1c0] sm:$0xff]
    %v95 = vld [vmem:[%s2 + $0x1c8] sm:$0xff]
    %v96 = vld [vmem:[%s2 + $0x1d0] sm:$0xff]
    %v97 = vld [vmem:[%s2 + $0x1d8] sm:$0xff]
    %v98 = vld [vmem:[%s2 + $0x1e0] sm:$0xff]
    %v99 = vld [vmem:[%s2 + $0x1e8] sm:$0xff]
    %v100 = vld [vmem:[%s2 + $0x1f0] sm:$0xff]
    %v101 = vld [vmem:[%s2 + $0x1f8] sm:$0xff]
    %v102 = vld [vmem:[%s2 + $0x200] sm:$0xff]
    %v103 = vld [vmem:[%s2 + $0x208] sm:$0xff]
    %v104 = vld [vmem:[%s2 + $0x210] sm:$0xff]
    %v105 = vld [vmem:[%s2 + $0x218] sm:$0xff]
    %v106 = vld [vmem:[%s2 + $0x220] sm:$0xff]
    %v107 = vld [vmem:[%s2 + $0x228] sm:$0xff]
    %v108 = vld [vmem:[%s2 + $0x230] sm:$0xff]
    %v109 = vld [vmem:[%s2 + $0x238] sm:$0xff]
    %v110 = vld [vmem:[%s2 + $0x240] sm:$0xff]
    %v111 = vld [vmem:[%s2 + $0x248] sm:$0xff]
    %v112 = vld [vmem:[%s2 + $0x250] sm:$0xff]
    %v113 = vld [vmem:[%s2 + $0x258] sm:$0xff]
    %v114 = vld [vmem:[%s2 + $0x260] sm:$0xff]
    %v115 = vld [vmem:[%s2 + $0x268] sm:$0xff]
    %v116 = vld [vmem:[%s2 + $0x270] sm:$0xff]
    %v117 = vld [vmem:[%s2 + $0x278] sm:$0xff]
    %v118 = vld [vmem:[%s2 + $0x280] sm:$0xff]
    %v119 = vld [vmem:[%s2 + $0x288] sm:$0xff]
    %v120 = vld [vmem:[%s2 + $0x290] sm:$0xff]
    %v121 = vld [vmem:[%s2 + $0x298] sm:$0xff]
    %v122 = vld [vmem:[%s2 + $0x2a0] sm:$0xff]
    %v123 = vld [vmem:[%s2 + $0x2a8] sm:$0xff]
    %v124 = vld [vmem:[%s2 + $0x2b0] sm:$0xff]
    %v125 = vld [vmem:[%s2 + $0x2b8] sm:$0xff]
    %v126 = vld [vmem:[%s2 + $0x2c0] sm:$0xff]
    %v127 = vld [vmem:[%s2 + $0x2c8] sm:$0xff]
    %v128 = vld [vmem:[%s2 + $0x2d0] sm:$0xff]
    %v129 = vld [vmem:[%s2 + $0x2d8] sm:$0xff]
    %v130 = vld [vmem:[%s2 + $0x2e0] sm:$0xff]
    %v131 = vld [vmem:[%s2 + $0x2e8] sm:$0xff]
    %v132 = vld [vmem:[%s2 + $0x2f0] sm:$0xff]
    %v133 = vld [vmem:[%s2 + $0x2f8] sm:$0xff]
    %v134 = vld [vmem:[%s2 + $0x300] sm:$0xff]
    %v135 = vld [vmem:[%s2 + $0x308] sm:$0xff]
    %v136 = vld [vmem:[%s2 + $0x310] sm:$0xff]
    %v137 = vld [vmem:[%s2 + $0x318] sm:$0xff]
    %v138 = vld [vmem:[%s2 + $0x320] sm:$0xff]
    %v139 = vld [vmem:[%s2 + $0x328] sm:$0xff]
    %v140 = vld [vmem:[%s2 + $0x330] sm:$0xff]
    %v141 = vld [vmem:[%s2 + $0x338] sm:$0xff]
    %v142 = vld [vmem:[%s2 + $0x340] sm:$0xff]
    %v143 = vld [vmem:[%s2 + $0x348] sm:$0xff]
    %v144 = vld [vmem:[%s2 + $0x350] sm:$0xff]
    %v145 = vld [vmem:[%s2 + $0x358] sm:$0xff]
    %v146 = vld [vmem:[%s2 + $0x360] sm:$0xff]
    %v147 = vld [vmem:[%s2 + $0x368] sm:$0xff]
    %v148 = vld [vmem:[%s2 + $0x370] sm:$0xff]
    %v149 = vld [vmem:[%s2 + $0x378] sm:$0xff]
    %v150 = vld [vmem:[%s2 + $0x380] sm:$0xff]
    %v151 = vld [vmem:[%s2 + $0x388] sm:$0xff]
    %v152 = vld [vmem:[%s2 + $0x390] sm:$0xff]
    %v153 = vld [vmem:[%s2 + $0x398] sm:$0xff]
    %v154 = vld [vmem:[%s2 + $0x3a0] sm:$0xff]
    %v155 = vld [vmem:[%s2 + $0x3a8] sm:$0xff]
    %v156 = vld [vmem:[%s2 + $0x3b0] sm:$0xff]
    %v157 = vld [vmem:[%s2 + $0x3b8] sm:$0xff]
    %v158 = vld [vmem:[%s2 + $0x3c0] sm:$0xff]
    %v159 = vld [vmem:[%s2 + $0x3c8] sm:$0xff]
    %v160 = vld [vmem:[%s2 + $0x3d0] sm:$0xff]
    %v161 = vld [vmem:[%s2 + $0x3d8] sm:$0xff]
    %v162 = vld [vmem:[%s2 + $0x3e0] sm:$0xff]
    %v163 = vld [vmem:[%s2 + $0x3e8] sm:$0xff]
    %v164 = vld [vmem:[%s2 + $0x3f0] sm:$0xff]
    %v165 = vld [vmem:[%s2 + $0x3f8] sm:$0xff]
    %v166 = vld [vmem:[%s2 + $0x400] sm:$0xff]
    %v167 = vld [vmem:[%s2 + $0x408] sm:$0xff]
    %v168 = vld [vmem:[%s2 + $0x410] sm:$0xff]
    %v169 = vld [vmem:[%s2 + $0x418] sm:$0xff]
    %v170 = vld [vmem:[%s2 + $0x420] sm:$0xff]
    %v171 = vld [vmem:[%s2 + $0x428] sm:$0xff]
    %v172 = vld [vmem:[%s2 + $0x430] sm:$0xff]
    %v173 = vld [vmem:[%s2 + $0x438] sm:$0xff]
    %v174 = vld [vmem:[%s2 + $0x440] sm:$0xff]
    %v175 = vld [vmem:[%s2 + $0x448] sm:$0xff]
    %v176 = vld [vmem:[%s2 + $0x450] sm:$0xff]
    %v177 = vld [vmem:[%s2 + $0x458] sm:$0xff]
    %v178 = vld [vmem:[%s2 + $0x460] sm:$0xff]
    %v179 = vld [vmem:[%s2 + $0x468] sm:$0xff]
    %v180 = vld [vmem:[%s2 + $0x470] sm:$0xff]
    %v181 = vld [vmem:[%s2 + $0x478] sm:$0xff]
    %v182 = vld [vmem:[%s2 + $0x480] sm:$0xff]
    %v183 = vld [vmem:[%s2 + $0x488] sm:$0xff]
    %v184 = vld [vmem:[%s2 + $0x490] sm:$0xff]
    %v185 = vld [vmem:[%s2 + $0x498] sm:$0xff]
    %v186 = vld [vmem:[%s2 + $0x4a0] sm:$0xff]
    %v187 = vld [vmem:[%s2 + $0x4a8] sm:$0xff]
    %v188 = vld [vmem:[%s2 + $0x4b0] sm:$0xff]
    %v189 = vld [vmem:[%s2 + $0x4b8] sm:$0xff]
    %v190 = vld [vmem:[%s2 + $0x4c0] sm:$0xff]
    %v191 = vld [vmem:[%s2 + $0x4c8] sm:$0xff]
    %v192 = vld [vmem:[%s2 + $0x4d0] sm:$0xff]
    %v193 = vld [vmem:[%s2 + $0x4d8] sm:$0xff]
    %v194 = vld [vmem:[%s2 + $0x4e0] sm:$0xff]
    %v195 = vld [vmem:[%s2 + $0x4e8] sm:$0xff]
    %v196 = vld [vmem:[%s2 + $0x4f0] sm:$0xff]
    %v197 = vld [vmem:[%s2 + $0x4f8] sm:$0xff]
    %v198 = vld [vmem:[%s2 + $0x500] sm:$0xff]
    %v199 = vld [vmem:[%s2 + $0x508] sm:$0xff]
    %v200 = vld [vmem:[%s2 + $0x510] sm:$0xff]
    %v201 = vld [vmem:[%s2 + $0x518] sm:$0xff]
    %v202 = vld [vmem:[%s2 + $0x520] sm:$0xff]
    %v203 = vld [vmem:[%s2 + $0x528] sm:$0xff]
    %v204 = vld [vmem:[%s2 + $0x530] sm:$0xff]
    %v205 = vld [vmem:[%s2 + $0x538] sm:$0xff]
    %v206 = vld [vmem:[%s2 + $0x540] sm:$0xff]
    %v207 = vld [vmem:[%s2 + $0x548] sm:$0xff]
    %v208 = vld [vmem:[%s2 + $0x550] sm:$0xff]
    %v209 = vld [vmem:[%s2 + $0x558] sm:$0xff]
    %v210 = vld [vmem:[%s2 + $0x560] sm:$0xff]
    %v211 = vld [vmem:[%s2 + $0x568] sm:$0xff]
    %v212 = vld [vmem:[%s2 + $0x570] sm:$0xff]
    %v213 = vld [vmem:[%s2 + $0x578] sm:$0xff]
    %v214 = vmul.f32 %v27, %v38
    %v215 = vmul.f32 %v28, %v39
    %v216 = vmul.f32 %v29, %v40
    %v217 = vmul.f32 %v30, %v41
    %v218 = vmul.f32 %v31, %v42
    %v219 = vmul.f32 %v32, %v43
    %v220 = vmul.f32 %v33, %v44
    %v221 = vmul.f32 %v34, %v45
    %v222 = vmul.f32 %v35, %v46
    %v223 = vmul.f32 %v36, %v47
    %v224 = vmul.f32 %v37, %v48
    %v225 = vmul.f32 %v27, %v49
    %v226 = vmul.f32 %v28, %v50
    %v227 = vmul.f32 %v29, %v51
    %v228 = vmul.f32 %v30, %v52
    %v229 = vmul.f32 %v31, %v53
    %v230 = vmul.f32 %v32, %v54
    %v231 = vmul.f32 %v33, %v55
    %v232 = vmul.f32 %v34, %v56
    %v233 = vmul.f32 %v35, %v57
    %v234 = vmul.f32 %v36, %v58
    %v235 = vmul.f32 %v37, %v59
    %v236 = vmul.f32 %v27, %v60
    %v237 = vmul.f32 %v28, %v61
    %v238 = vmul.f32 %v29, %v62
    %v239 = vmul.f32 %v30, %v63
    %v240 = vmul.f32 %v31, %v64
    %v241 = vmul.f32 %v32, %v65
    %v242 = vmul.f32 %v33, %v66
    %v243 = vmul.f32 %v34, %v67
    %v244 = vmul.f32 %v35, %v68
    %v245 = vmul.f32 %v36, %v69
    %v246 = vmul.f32 %v37, %v70
    %v247 = vmul.f32 %v27, %v71
    %v248 = vmul.f32 %v28, %v72
    %v249 = vmul.f32 %v29, %v73
    %v250 = vmul.f32 %v30, %v74
    %v251 = vmul.f32 %v31, %v75
    %v252 = vmul.f32 %v32, %v76
    %v253 = vmul.f32 %v33, %v77
    %v254 = vmul.f32 %v34, %v78
    %v255 = vmul.f32 %v35, %v79
    %v256 = vmul.f32 %v36, %v80
    %v257 = vmul.f32 %v37, %v81
    %v258 = vmul.f32 %v27, %v82
    %v259 = vmul.f32 %v28, %v83
    %v260 = vmul.f32 %v29, %v84
    %v261 = vmul.f32 %v30, %v85
    %v262 = vmul.f32 %v31, %v86
    %v263 = vmul.f32 %v32, %v87
    %v264 = vmul.f32 %v33, %v88
    %v265 = vmul.f32 %v34, %v89
    %v266 = vmul.f32 %v35, %v90
    %v267 = vmul.f32 %v36, %v91
    %v268 = vmul.f32 %v37, %v92
    %v269 = vmul.f32 %v27, %v93
    %v270 = vmul.f32 %v28, %v94
    %v271 = vmul.f32 %v29, %v95
    %v272 = vmul.f32 %v30, %v96
    %v273 = vmul.f32 %v31, %v97
    %v274 = vmul.f32 %v32, %v98
    %v275 = vmul.f32 %v33, %v99
    %v276 = vmul.f32 %v34, %v100
    %v277 = vmul.f32 %v35, %v101
    %v278 = vmul.f32 %v36, %v102
    %v279 = vmul.f32 %v37, %v103
    %v280 = vmul.f32 %v27, %v104
    %v281 = vmul.f32 %v28, %v105
    %v282 = vmul.f32 %v29, %v106
    %v283 = vmul.f32 %v30, %v107
    %v284 = vmul.f32 %v31, %v108
    %v285 = vmul.f32 %v32, %v109
    %v286 = vmul.f32 %v33, %v110
    %v287 = vmul.f32 %v34, %v111
    %v288 = vmul.f32 %v35, %v112
    %v289 = vmul.f32 %v36, %v113
    %v290 = vmul.f32 %v37, %v114
    %v291 = vmul.f32 %v27, %v115
    %v292 = vmul.f32 %v28, %v116
    %v293 = vmul.f32 %v29, %v117
    %v294 = vmul.f32 %v30, %v118
    %v295 = vmul.f32 %v31, %v119
    %v296 = vmul.f32 %v32, %v120
    %v297 = vmul.f32 %v33, %v121
    %v298 = vmul.f32 %v34, %v122
    %v299 = vmul.f32 %v35, %v123
    %v300 = vmul.f32 %v36, %v124
    %v301 = vmul.f32 %v37, %v125
    %v302 = vmul.f32 %v27, %v126
    %v303 = vmul.f32 %v28, %v127
    %v304 = vmul.f32 %v29, %v128
    %v305 = vmul.f32 %v30, %v129
    %v306 = vmul.f32 %v31, %v130
    %v307 = vmul.f32 %v32, %v131
    %v308 = vmul.f32 %v33, %v132
    %v309 = vmul.f32 %v34, %v133
    %v310 = vmul.f32 %v35, %v134
    %v311 = vmul.f32 %v36, %v135
    %v312 = vmul.f32 %v37, %v136
    %v313 = vmul.f32 %v27, %v137
    %v314 = vmul.f32 %v28, %v138
    %v315 = vmul.f32 %v29, %v139
    %v316 = vmul.f32 %v30, %v140
    %v317 = vmul.f32 %v31, %v141
    %v318 = vmul.f32 %v32, %v142
    %v319 = vmul.f32 %v33, %v143
    %v320 = vmul.f32 %v34, %v144
    %v321 = vmul.f32 %v35, %v145
    %v322 = vmul.f32 %v36, %v146
    %v323 = vmul.f32 %v37, %v147
    %v324 = vmul.f32 %v27, %v148
    %v325 = vmul.f32 %v28, %v149
    %v326 = vmul.f32 %v29, %v150
    %v327 = vmul.f32 %v30, %v151
    %v328 = vmul.f32 %v31, %v152
    %v329 = vmul.f32 %v32, %v153
    %v330 = vmul.f32 %v33, %v154
    %v331 = vmul.f32 %v34, %v155
    %v332 = vmul.f32 %v35, %v156
    %v333 = vmul.f32 %v36, %v157
    %v334 = vmul.f32 %v37, %v158
    %v335 = vmul.f32 %v27, %v159
    %v336 = vmul.f32 %v28, %v160
    %v337 = vmul.f32 %v29, %v161
    %v338 = vmul.f32 %v30, %v162
    %v339 = vmul.f32 %v31, %v163
    %v340 = vmul.f32 %v32, %v164
    %v341 = vmul.f32 %v33, %v165
    %v342 = vmul.f32 %v34, %v166
    %v343 = vmul.f32 %v35, %v167
    %v344 = vmul.f32 %v36, %v168
    %v345 = vmul.f32 %v37, %v169
    %v346 = vmul.f32 %v27, %v170
    %v347 = vmul.f32 %v28, %v171
    %v348 = vmul.f32 %v29, %v172
    %v349 = vmul.f32 %v30, %v173
    %v350 = vmul.f32 %v31, %v174
    %v351 = vmul.f32 %v32, %v175
    %v352 = vmul.f32 %v33, %v176
    %v353 = vmul.f32 %v34, %v177
    %v354 = vmul.f32 %v35, %v178
    %v355 = vmul.f32 %v36, %v179
    %v356 = vmul.f32 %v37, %v180
    %v357 = vmul.f32 %v27, %v181
    %v358 = vmul.f32 %v28, %v182
    %v359 = vmul.f32 %v29, %v183
    %v360 = vmul.f32 %v30, %v184
    %v361 = vmul.f32 %v31, %v185
    %v362 = vmul.f32 %v32, %v186
    %v363 = vmul.f32 %v33, %v187
    %v364 = vmul.f32 %v34, %v188
    %v365 = vmul.f32 %v35, %v189
    %v366 = vmul.f32 %v36, %v190
    %v367 = vmul.f32 %v37, %v191
    %v368 = vmul.f32 %v27, %v192
    %v369 = vmul.f32 %v28, %v193
    %v370 = vmul.f32 %v29, %v194
    %v371 = vmul.f32 %v30, %v195
    %v372 = vmul.f32 %v31, %v196
    %v373 = vmul.f32 %v32, %v197
    %v374 = vmul.f32 %v33, %v198
    %v375 = vmul.f32 %v34, %v199
    %v376 = vmul.f32 %v35, %v200
    %v377 = vmul.f32 %v36, %v201
    %v378 = vmul.f32 %v37, %v202
    %v379 = vmul.f32 %v27, %v203
    %v380 = vmul.f32 %v28, %v204
    %v381 = vmul.f32 %v29, %v205
    %v382 = vmul.f32 %v30, %v206
    %v383 = vmul.f32 %v31, %v207
    %v384 = vmul.f32 %v32, %v208
    %v385 = vmul.f32 %v33, %v209
    %v386 = vmul.f32 %v34, %v210
    %v387 = vmul.f32 %v35, %v211
    %v388 = vmul.f32 %v36, %v212
    %v389 = vmul.f32 %v37, %v213
    %v390 = vadd.f32 %v15, %v214
    %v391 = vadd.f32 %v16, %v215
    %v392 = vadd.f32 %v17, %v216
    %v393 = vadd.f32 %v18, %v217
    %v394 = vadd.f32 %v19, %v218
    %v395 = vadd.f32 %v20, %v219
    %v396 = vadd.f32 %v21, %v220
    %v397 = vadd.f32 %v22, %v221
    %v398 = vadd.f32 %v23, %v222
    %v399 = vadd.f32 %v24, %v223
    %v400 = vadd.f32 %v25, %v224
    %v401 = vadd.f32 %v15, %v225
    %v402 = vadd.f32 %v16, %v226
    %v403 = vadd.f32 %v17, %v227
    %v404 = vadd.f32 %v18, %v228
    %v405 = vadd.f32 %v19, %v229
    %v406 = vadd.f32 %v20, %v230
    %v407 = vadd.f32 %v21, %v231
    %v408 = vadd.f32 %v22, %v232
    %v409 = vadd.f32 %v23, %v233
    %v410 = vadd.f32 %v24, %v234
    %v411 = vadd.f32 %v25, %v235
    %v412 = vadd.f32 %v15, %v236
    %v413 = vadd.f32 %v16, %v237
    %v414 = vadd.f32 %v17, %v238
    %v415 = vadd.f32 %v18, %v239
    %v416 = vadd.f32 %v19, %v240
    %v417 = vadd.f32 %v20, %v241
    %v418 = vadd.f32 %v21, %v242
    %v419 = vadd.f32 %v22, %v243
    %v420 = vadd.f32 %v23, %v244
    %v421 = vadd.f32 %v24, %v245
    %v422 = vadd.f32 %v25, %v246
    %v423 = vadd.f32 %v15, %v247
    %v424 = vadd.f32 %v16, %v248
    %v425 = vadd.f32 %v17, %v249
    %v426 = vadd.f32 %v18, %v250
    %v427 = vadd.f32 %v19, %v251
    %v428 = vadd.f32 %v20, %v252
    %v429 = vadd.f32 %v21, %v253
    %v430 = vadd.f32 %v22, %v254
    %v431 = vadd.f32 %v23, %v255
    %v432 = vadd.f32 %v24, %v256
    %v433 = vadd.f32 %v25, %v257
    %v434 = vadd.f32 %v15, %v258
    %v435 = vadd.f32 %v16, %v259
    %v436 = vadd.f32 %v17, %v260
    %v437 = vadd.f32 %v18, %v261
    %v438 = vadd.f32 %v19, %v262
    %v439 = vadd.f32 %v20, %v263
    %v440 = vadd.f32 %v21, %v264
    %v441 = vadd.f32 %v22, %v265
    %v442 = vadd.f32 %v23, %v266
    %v443 = vadd.f32 %v24, %v267
    %v444 = vadd.f32 %v25, %v268
    %v445 = vadd.f32 %v15, %v269
    %v446 = vadd.f32 %v16, %v270
    %v447 = vadd.f32 %v17, %v271
    %v448 = vadd.f32 %v18, %v272
    %v449 = vadd.f32 %v19, %v273
    %v450 = vadd.f32 %v20, %v274
    %v451 = vadd.f32 %v21, %v275
    %v452 = vadd.f32 %v22, %v276
    %v453 = vadd.f32 %v23, %v277
    %v454 = vadd.f32 %v24, %v278
    %v455 = vadd.f32 %v25, %v279
    %v456 = vadd.f32 %v15, %v280
    %v457 = vadd.f32 %v16, %v281
    %v458 = vadd.f32 %v17, %v282
    %v459 = vadd.f32 %v18, %v283
    %v460 = vadd.f32 %v19, %v284
    %v461 = vadd.f32 %v20, %v285
    %v462 = vadd.f32 %v21, %v286
    %v463 = vadd.f32 %v22, %v287
    %v464 = vadd.f32 %v23, %v288
    %v465 = vadd.f32 %v24, %v289
    %v466 = vadd.f32 %v25, %v290
    %v467 = vadd.f32 %v15, %v291
    %v468 = vadd.f32 %v16, %v292
    %v469 = vadd.f32 %v17, %v293
    %v470 = vadd.f32 %v18, %v294
    %v471 = vadd.f32 %v19, %v295
    %v472 = vadd.f32 %v20, %v296
    %v473 = vadd.f32 %v21, %v297
    %v474 = vadd.f32 %v22, %v298
    %v475 = vadd.f32 %v23, %v299
    %v476 = vadd.f32 %v24, %v300
    %v477 = vadd.f32 %v25, %v301
    %v478 = vadd.f32 %v15, %v302
    %v479 = vadd.f32 %v16, %v303
    %v480 = vadd.f32 %v17, %v304
    %v481 = vadd.f32 %v18, %v305
    %v482 = vadd.f32 %v19, %v306
    %v483 = vadd.f32 %v20, %v307
    %v484 = vadd.f32 %v21, %v308
    %v485 = vadd.f32 %v22, %v309
    %v486 = vadd.f32 %v23, %v310
    %v487 = vadd.f32 %v24, %v311
    %v488 = vadd.f32 %v25, %v312
    %v489 = vadd.f32 %v15, %v313
    %v490 = vadd.f32 %v16, %v314
    %v491 = vadd.f32 %v17, %v315
    %v492 = vadd.f32 %v18, %v316
    %v493 = vadd.f32 %v19, %v317
    %v494 = vadd.f32 %v20, %v318
    %v495 = vadd.f32 %v21, %v319
    %v496 = vadd.f32 %v22, %v320
    %v497 = vadd.f32 %v23, %v321
    %v498 = vadd.f32 %v24, %v322
    %v499 = vadd.f32 %v25, %v323
    %v500 = vadd.f32 %v15, %v324
    %v501 = vadd.f32 %v16, %v325
    %v502 = vadd.f32 %v17, %v326
    %v503 = vadd.f32 %v18, %v327
    %v504 = vadd.f32 %v19, %v328
    %v505 = vadd.f32 %v20, %v329
    %v506 = vadd.f32 %v21, %v330
    %v507 = vadd.f32 %v22, %v331
    %v508 = vadd.f32 %v23, %v332
    %v509 = vadd.f32 %v24, %v333
    %v510 = vadd.f32 %v25, %v334
    %v511 = vadd.f32 %v15, %v335
    %v512 = vadd.f32 %v16, %v336
    %v513 = vadd.f32 %v17, %v337
    %v514 = vadd.f32 %v18, %v338
    %v515 = vadd.f32 %v19, %v339
    %v516 = vadd.f32 %v20, %v340
    %v517 = vadd.f32 %v21, %v341
    %v518 = vadd.f32 %v22, %v342
    %v519 = vadd.f32 %v23, %v343
    %v520 = vadd.f32 %v24, %v344
    %v521 = vadd.f32 %v25, %v345
    %v522 = vadd.f32 %v15, %v346
    %v523 = vadd.f32 %v16, %v347
    %v524 = vadd.f32 %v17, %v348
    %v525 = vadd.f32 %v18, %v349
    %v526 = vadd.f32 %v19, %v350
    %v527 = vadd.f32 %v20, %v351
    %v528 = vadd.f32 %v21, %v352
    %v529 = vadd.f32 %v22, %v353
    %v530 = vadd.f32 %v23, %v354
    %v531 = vadd.f32 %v24, %v355
    %v532 = vadd.f32 %v25, %v356
    %v533 = vadd.f32 %v15, %v357
    %v534 = vadd.f32 %v16, %v358
    %v535 = vadd.f32 %v17, %v359
    %v536 = vadd.f32 %v18, %v360
    %v537 = vadd.f32 %v19, %v361
    %v538 = vadd.f32 %v20, %v362
    %v539 = vadd.f32 %v21, %v363
    %v540 = vadd.f32 %v22, %v364
    %v541 = vadd.f32 %v23, %v365
    %v542 = vadd.f32 %v24, %v366
    %v543 = vadd.f32 %v25, %v367
    %v544 = vadd.f32 %v15, %v368
    %v545 = vadd.f32 %v16, %v369
    %v546 = vadd.f32 %v17, %v370
    %v547 = vadd.f32 %v18, %v371
    %v548 = vadd.f32 %v19, %v372
    %v549 = vadd.f32 %v20, %v373
    %v550 = vadd.f32 %v21, %v374
    %v551 = vadd.f32 %v22, %v375
    %v552 = vadd.f32 %v23, %v376
    %v553 = vadd.f32 %v24, %v377
    %v554 = vadd.f32 %v25, %v378
    %v555 = vadd.f32 %v15, %v379
    %v556 = vadd.f32 %v16, %v380
    %v557 = vadd.f32 %v17, %v381
    %v558 = vadd.f32 %v18, %v382
    %v559 = vadd.f32 %v19, %v383
    %v560 = vadd.f32 %v20, %v384
    %v561 = vadd.f32 %v21, %v385
    %v562 = vadd.f32 %v22, %v386
    %v563 = vadd.f32 %v23, %v387
    %v564 = vadd.f32 %v24, %v388
    %v565 = vadd.f32 %v25, %v389
    %v566 = vld [vmem:[%s0] sm:$0xff]
    %v567 = vlaneseq
    %v568 = vshrl.u32 %v567, 7
    %v569 = vsub.s32 0, %v568
    %v570 = vrot.slane %v390, %v569
    %v571 = vlaneseq
    %v572 = vshrl.u32 %v571, 7
    %v573 = vsub.s32 0, %v572
    %v574 = vrot.slane %v401, %v573
    %v575 = vlaneseq
    %v576 = vshrl.u32 %v575, 7
    %v577 = vsub.s32 0, %v576
    %v578 = vrot.slane %v412, %v577
    %v579 = vlaneseq
    %v580 = vshrl.u32 %v579, 7
    %v581 = vsub.s32 0, %v580
    %v582 = vrot.slane %v423, %v581
    %v583 = vlaneseq
    %v584 = vshrl.u32 %v583, 7
    %v585 = vsub.s32 0, %v584
    %v586 = vrot.slane %v434, %v585
    %v587 = vlaneseq
    %v588 = vshrl.u32 %v587, 7
    %v589 = vsub.s32 0, %v588
    %v590 = vrot.slane %v445, %v589
    %v591 = vlaneseq
    %v592 = vshrl.u32 %v591, 7
    %v593 = vsub.s32 0, %v592
    %v594 = vrot.slane %v456, %v593
    %v595 = vlaneseq
    %v596 = vshrl.u32 %v595, 7
    %v597 = vsub.s32 0, %v596
    %v598 = vrot.slane %v467, %v597
    %v599 = vlaneseq
    %v600 = vshrl.u32 %v599, 7
    %v601 = vsub.s32 0, %v600
    %v602 = vrot.slane %v478, %v601
    %v603 = vlaneseq
    %v604 = vshrl.u32 %v603, 7
    %v605 = vsub.s32 0, %v604
    %v606 = vrot.slane %v489, %v605
    %v607 = vlaneseq
    %v608 = vshrl.u32 %v607, 7
    %v609 = vsub.s32 0, %v608
    %v610 = vrot.slane %v500, %v609
    %v611 = vlaneseq
    %v612 = vshrl.u32 %v611, 7
    %v613 = vsub.s32 0, %v612
    %v614 = vrot.slane %v511, %v613
    %v615 = vlaneseq
    %v616 = vshrl.u32 %v615, 7
    %v617 = vsub.s32 0, %v616
    %v618 = vrot.slane %v522, %v617
    %v619 = vlaneseq
    %v620 = vshrl.u32 %v619, 7
    %v621 = vsub.s32 0, %v620
    %v622 = vrot.slane %v533, %v621
    %v623 = vlaneseq
    %v624 = vshrl.u32 %v623, 7
    %v625 = vsub.s32 0, %v624
    %v626 = vrot.slane %v544, %v625
    %v627 = vlaneseq
    %v628 = vshrl.u32 %v627, 7
    %v629 = vsub.s32 0, %v628
    %v630 = vrot.slane %v555, %v629
    %v631 = vmul.f32 %v566, %v570
    %v632 = vmul.f32 %v566, %v574
    %v633 = vmul.f32 %v566, %v578
    %v634 = vmul.f32 %v566, %v582
    %v635 = vmul.f32 %v566, %v586
    %v636 = vmul.f32 %v566, %v590
    %v637 = vmul.f32 %v566, %v594
    %v638 = vmul.f32 %v566, %v598
    %v639 = vmul.f32 %v566, %v602
    %v640 = vmul.f32 %v566, %v606
    %v641 = vmul.f32 %v566, %v610
    %v642 = vmul.f32 %v566, %v614
    %v643 = vmul.f32 %v566, %v618
    %v644 = vmul.f32 %v566, %v622
    %v645 = vmul.f32 %v566, %v626
    %v646 = vmul.f32 %v566, %v630
    %v647 = vlaneseq
    %v648 = vshrl.u32 %v647, 7
    %v649 = vsub.s32 2, %v648
    %v650 = vrot.slane %v390, %v649
    %v651 = vlaneseq
    %v652 = vshrl.u32 %v651, 7
    %v653 = vsub.s32 2, %v652
    %v654 = vrot.slane %v401, %v653
    %v655 = vlaneseq
    %v656 = vshrl.u32 %v655, 7
    %v657 = vsub.s32 2, %v656
    %v658 = vrot.slane %v412, %v657
    %v659 = vlaneseq
    %v660 = vshrl.u32 %v659, 7
    %v661 = vsub.s32 2, %v660
    %v662 = vrot.slane %v423, %v661
    %v663 = vlaneseq
    %v664 = vshrl.u32 %v663, 7
    %v665 = vsub.s32 2, %v664
    %v666 = vrot.slane %v434, %v665
    %v667 = vlaneseq
    %v668 = vshrl.u32 %v667, 7
    %v669 = vsub.s32 2, %v668
    %v670 = vrot.slane %v445, %v669
    %v671 = vlaneseq
    %v672 = vshrl.u32 %v671, 7
    %v673 = vsub.s32 2, %v672
    %v674 = vrot.slane %v456, %v673
    %v675 = vlaneseq
    %v676 = vshrl.u32 %v675, 7
    %v677 = vsub.s32 2, %v676
    %v678 = vrot.slane %v467, %v677
    %v679 = vlaneseq
    %v680 = vshrl.u32 %v679, 7
    %v681 = vsub.s32 2, %v680
    %v682 = vrot.slane %v478, %v681
    %v683 = vlaneseq
    %v684 = vshrl.u32 %v683, 7
    %v685 = vsub.s32 2, %v684
    %v686 = vrot.slane %v489, %v685
    %v687 = vlaneseq
    %v688 = vshrl.u32 %v687, 7
    %v689 = vsub.s32 2, %v688
    %v690 = vrot.slane %v500, %v689
    %v691 = vlaneseq
    %v692 = vshrl.u32 %v691, 7
    %v693 = vsub.s32 2, %v692
    %v694 = vrot.slane %v511, %v693
    %v695 = vlaneseq
    %v696 = vshrl.u32 %v695, 7
    %v697 = vsub.s32 2, %v696
    %v698 = vrot.slane %v522, %v697
    %v699 = vlaneseq
    %v700 = vshrl.u32 %v699, 7
    %v701 = vsub.s32 2, %v700
    %v702 = vrot.slane %v533, %v701
    %v703 = vlaneseq
    %v704 = vshrl.u32 %v703, 7
    %v705 = vsub.s32 2, %v704
    %v706 = vrot.slane %v544, %v705
    %v707 = vlaneseq
    %v708 = vshrl.u32 %v707, 7
    %v709 = vsub.s32 2, %v708
    %v710 = vrot.slane %v555, %v709
    %v711 = vadd.f32 %v650, %v631
    %v712 = vadd.f32 %v654, %v632
    %v713 = vadd.f32 %v658, %v633
    %v714 = vadd.f32 %v662, %v634
    %v715 = vadd.f32 %v666, %v635
    %v716 = vadd.f32 %v670, %v636
    %v717 = vadd.f32 %v674, %v637
    %v718 = vadd.f32 %v678, %v638
    %v719 = vadd.f32 %v682, %v639
    %v720 = vadd.f32 %v686, %v640
    %v721 = vadd.f32 %v690, %v641
    %v722 = vadd.f32 %v694, %v642
    %v723 = vadd.f32 %v698, %v643
    %v724 = vadd.f32 %v702, %v644
    %v725 = vadd.f32 %v706, %v645
    %v726 = vadd.f32 %v710, %v646
    %s727 = scalar_lea.vmem %s0, 8
    %v728 = vld [vmem:[%s727] sm:$0xff]
    %v729 = vlaneseq
    %v730 = vshrl.u32 %v729, 7
    %v731 = vsub.s32 1, %v730
    %v732 = vrot.slane %v390, %v731
    %v733 = vlaneseq
    %v734 = vshrl.u32 %v733, 7
    %v735 = vsub.s32 1, %v734
    %v736 = vrot.slane %v401, %v735
    %v737 = vlaneseq
    %v738 = vshrl.u32 %v737, 7
    %v739 = vsub.s32 1, %v738
    %v740 = vrot.slane %v412, %v739
    %v741 = vlaneseq
    %v742 = vshrl.u32 %v741, 7
    %v743 = vsub.s32 1, %v742
    %v744 = vrot.slane %v423, %v743
    %v745 = vlaneseq
    %v746 = vshrl.u32 %v745, 7
    %v747 = vsub.s32 1, %v746
    %v748 = vrot.slane %v434, %v747
    %v749 = vlaneseq
    %v750 = vshrl.u32 %v749, 7
    %v751 = vsub.s32 1, %v750
    %v752 = vrot.slane %v445, %v751
    %v753 = vlaneseq
    %v754 = vshrl.u32 %v753, 7
    %v755 = vsub.s32 1, %v754
    %v756 = vrot.slane %v456, %v755
    %v757 = vlaneseq
    %v758 = vshrl.u32 %v757, 7
    %v759 = vsub.s32 1, %v758
    %v760 = vrot.slane %v467, %v759
    %v761 = vlaneseq
    %v762 = vshrl.u32 %v761, 7
    %v763 = vsub.s32 1, %v762
    %v764 = vrot.slane %v478, %v763
    %v765 = vlaneseq
    %v766 = vshrl.u32 %v765, 7
    %v767 = vsub.s32 1, %v766
    %v768 = vrot.slane %v489, %v767
    %v769 = vlaneseq
    %v770 = vshrl.u32 %v769, 7
    %v771 = vsub.s32 1, %v770
    %v772 = vrot.slane %v500, %v771
    %v773 = vlaneseq
    %v774 = vshrl.u32 %v773, 7
    %v775 = vsub.s32 1, %v774
    %v776 = vrot.slane %v511, %v775
    %v777 = vlaneseq
    %v778 = vshrl.u32 %v777, 7
    %v779 = vsub.s32 1, %v778
    %v780 = vrot.slane %v522, %v779
    %v781 = vlaneseq
    %v782 = vshrl.u32 %v781, 7
    %v783 = vsub.s32 1, %v782
    %v784 = vrot.slane %v533, %v783
    %v785 = vlaneseq
    %v786 = vshrl.u32 %v785, 7
    %v787 = vsub.s32 1, %v786
    %v788 = vrot.slane %v544, %v787
    %v789 = vlaneseq
    %v790 = vshrl.u32 %v789, 7
    %v791 = vsub.s32 1, %v790
    %v792 = vrot.slane %v555, %v791
    %v793 = vmul.f32 %v728, %v732
    %v794 = vmul.f32 %v728, %v736
    %v795 = vmul.f32 %v728, %v740
    %v796 = vmul.f32 %v728, %v744
    %v797 = vmul.f32 %v728, %v748
    %v798 = vmul.f32 %v728, %v752
    %v799 = vmul.f32 %v728, %v756
    %v800 = vmul.f32 %v728, %v760
    %v801 = vmul.f32 %v728, %v764
    %v802 = vmul.f32 %v728, %v768
    %v803 = vmul.f32 %v728, %v772
    %v804 = vmul.f32 %v728, %v776
    %v805 = vmul.f32 %v728, %v780
    %v806 = vmul.f32 %v728, %v784
    %v807 = vmul.f32 %v728, %v788
    %v808 = vmul.f32 %v728, %v792
    %v809 = vadd.f32 %v711, %v793
    %v810 = vadd.f32 %v712, %v794
    %v811 = vadd.f32 %v713, %v795
    %v812 = vadd.f32 %v714, %v796
    %v813 = vadd.f32 %v715, %v797
    %v814 = vadd.f32 %v716, %v798
    %v815 = vadd.f32 %v717, %v799
    %v816 = vadd.f32 %v718, %v800
    %v817 = vadd.f32 %v719, %v801
    %v818 = vadd.f32 %v720, %v802
    %v819 = vadd.f32 %v721, %v803
    %v820 = vadd.f32 %v722, %v804
    %v821 = vadd.f32 %v723, %v805
    %v822 = vadd.f32 %v724, %v806
    %v823 = vadd.f32 %v725, %v807
    %v824 = vadd.f32 %v726, %v808
    %v825 = vmax.f32 %v809, 0.0
    %v826 = vmax.f32 %v810, 0.0
    %v827 = vmax.f32 %v811, 0.0
    %v828 = vmax.f32 %v812, 0.0
    %v829 = vmax.f32 %v813, 0.0
    %v830 = vmax.f32 %v814, 0.0
    %v831 = vmax.f32 %v815, 0.0
    %v832 = vmax.f32 %v816, 0.0
    %v833 = vmax.f32 %v817, 0.0
    %v834 = vmax.f32 %v818, 0.0
    %v835 = vmax.f32 %v819, 0.0
    %v836 = vmax.f32 %v820, 0.0
    %v837 = vmax.f32 %v821, 0.0
    %v838 = vmax.f32 %v822, 0.0
    %v839 = vmax.f32 %v823, 0.0
    %v840 = vmax.f32 %v824, 0.0
    %v841 = vlaneseq
    %v842 = vshrl.u32 %v841, 7
    %v843 = vsub.s32 0, %v842
    %v844 = vrot.slane %v395, %v843
    %v845 = vlaneseq
    %v846 = vshrl.u32 %v845, 7
    %v847 = vsub.s32 0, %v846
    %v848 = vrot.slane %v406, %v847
    %v849 = vlaneseq
    %v850 = vshrl.u32 %v849, 7
    %v851 = vsub.s32 0, %v850
    %v852 = vrot.slane %v417, %v851
    %v853 = vlaneseq
    %v854 = vshrl.u32 %v853, 7
    %v855 = vsub.s32 0, %v854
    %v856 = vrot.slane %v428, %v855
    %v857 = vlaneseq
    %v858 = vshrl.u32 %v857, 7
    %v859 = vsub.s32 0, %v858
    %v860 = vrot.slane %v439, %v859
    %v861 = vlaneseq
    %v862 = vshrl.u32 %v861, 7
    %v863 = vsub.s32 0, %v862
    %v864 = vrot.slane %v450, %v863
    %v865 = vlaneseq
    %v866 = vshrl.u32 %v865, 7
    %v867 = vsub.s32 0, %v866
    %v868 = vrot.slane %v461, %v867
    %v869 = vlaneseq
    %v870 = vshrl.u32 %v869, 7
    %v871 = vsub.s32 0, %v870
    %v872 = vrot.slane %v472, %v871
    %v873 = vlaneseq
    %v874 = vshrl.u32 %v873, 7
    %v875 = vsub.s32 0, %v874
    %v876 = vrot.slane %v483, %v875
    %v877 = vlaneseq
    %v878 = vshrl.u32 %v877, 7
    %v879 = vsub.s32 0, %v878
    %v880 = vrot.slane %v494, %v879
    %v881 = vlaneseq
    %v882 = vshrl.u32 %v881, 7
    %v883 = vsub.s32 0, %v882
    %v884 = vrot.slane %v505, %v883
    %v885 = vlaneseq
    %v886 = vshrl.u32 %v885, 7
    %v887 = vsub.s32 0, %v886
    %v888 = vrot.slane %v516, %v887
    %v889 = vlaneseq
    %v890 = vshrl.u32 %v889, 7
    %v891 = vsub.s32 0, %v890
    %v892 = vrot.slane %v527, %v891
    %v893 = vlaneseq
    %v894 = vshrl.u32 %v893, 7
    %v895 = vsub.s32 0, %v894
    %v896 = vrot.slane %v538, %v895
    %v897 = vlaneseq
    %v898 = vshrl.u32 %v897, 7
    %v899 = vsub.s32 0, %v898
    %v900 = vrot.slane %v549, %v899
    %v901 = vlaneseq
    %v902 = vshrl.u32 %v901, 7
    %v903 = vsub.s32 0, %v902
    %v904 = vrot.slane %v560, %v903
    %vm905 = vcmask 261120
    %v907 = vsel %vm905, %v825, 0
    %909 = vmatprep.subr.mxu0 0.0
    %910 = vmatpush1.msra.mxu0 %v391
    %911 = vmatprep.subr.mxu0 0.0
    %912 = vmatpush1.msra.mxu0 %v392
    %913 = vmatprep.subr.mxu0 0.0
    %914 = vmatpush1.msra.mxu0 %v393
    %915 = vmatprep.subr.mxu0 0.0
    %916 = vmatpush1.msra.mxu0 %v394
    %917 = vmatprep.subr.mxu0 0.0
    %918 = vmatpush1.msra.mxu0 0.0
    %919 = vmatprep.subr.mxu0 0.0
    %920 = vmatpush1.msra.mxu0 0.0
    %921 = vmatprep.subr.mxu0 0.0
    %922 = vmatpush1.msra.mxu0 0.0
    %923 = vmatprep.subr.mxu0 0.0
    %924 = vmatpush1.msra.mxu0 0.0
    %925 = vmatprep.subr.mxu0 0.0
    %926 = vmatpush1.msra.mxu0 0.0
    %927 = vmatprep.subr.mxu0 0.0
    %928 = vmatpush1.msra.mxu0 0.0
    %929 = vmatprep.subr.mxu0 0.0
    %930 = vmatpush1.msra.mxu0 0.0
    %931 = vmatprep.subr.mxu0 0.0
    %932 = vmatpush1.msra.mxu0 0.0
    %933 = vmatprep.subr.mxu0 0.0
    %934 = vmatpush1.msra.mxu0 0.0
    %935 = vmatprep.subr.mxu0 0.0
    %936 = vmatpush1.msra.mxu0 0.0
    %937 = vmatprep.subr.mxu0 0.0
    %938 = vmatpush1.msra.mxu0 0.0
    %939 = vmatprep.subr.mxu0 0.0
    %940 = vmatpush1.msra.mxu0 0.0
    %941 = vmatprep.subr.mxu0 0.0
    %942 = vmatpush1.msra.mxu0 0.0
    %943 = vmatprep.subr.mxu0 0.0
    %944 = vmatpush1.msra.mxu0 0.0
    %945 = vmatprep.subr.mxu0 0.0
    %946 = vmatpush1.msra.mxu0 0.0
    %947 = vmatprep.subr.mxu0 0.0
    %948 = vmatpush1.msra.mxu0 0.0
    %949 = vmatprep.subr.mxu0 0.0
    %950 = vmatpush1.msra.mxu0 0.0
    %951 = vmatprep.subr.mxu0 0.0
    %952 = vmatpush1.msra.mxu0 0.0
    %953 = vmatprep.subr.mxu0 0.0
    %954 = vmatpush1.msra.mxu0 0.0
    %955 = vmatprep.subr.mxu0 0.0
    %956 = vmatpush1.msra.mxu0 0.0
    %957 = vmatprep.subr.mxu0 0.0
    %958 = vmatpush1.msra.mxu0 0.0
    %959 = vmatprep.subr.mxu0 0.0
    %960 = vmatpush1.msra.mxu0 0.0
    %961 = vmatprep.subr.mxu0 0.0
    %962 = vmatpush1.msra.mxu0 0.0
    %963 = vmatprep.subr.mxu0 0.0
    %964 = vmatpush1.msra.mxu0 0.0
    %965 = vmatprep.subr.mxu0 0.0
    %966 = vmatpush1.msra.mxu0 0.0
    %967 = vmatprep.subr.mxu0 0.0
    %968 = vmatpush1.msra.mxu0 0.0
    %969 = vmatprep.subr.mxu0 0.0
    %970 = vmatpush1.msra.mxu0 0.0
    %971 = vmatprep.subr.mxu0 0.0
    %972 = vmatpush1.msra.mxu0 0.0
    %973 = vmatprep.mubr.f32.mxu0 0.0
    %974 = vmatmul.mubr.f32.gmra.mrb[0].mxu0 %v907
    %v975 = vpop.f32.mrb[0].mxu0
    %v976 = vadd.f32 %v844, %v975
    %v977 = vpop.f32.mrb[0].mxu0
    %978 = vdwg.mxu0
    %v980 = vsel %vm905, %v826, 0
    %982 = vmatprep.subr.mxu0 0.0
    %983 = vmatpush1.msra.mxu0 %v402
    %984 = vmatprep.subr.mxu0 0.0
    %985 = vmatpush1.msra.mxu0 %v403
    %986 = vmatprep.subr.mxu0 0.0
    %987 = vmatpush1.msra.mxu0 %v404
    %988 = vmatprep.subr.mxu0 0.0
    %989 = vmatpush1.msra.mxu0 %v405
    %990 = vmatprep.subr.mxu0 0.0
    %991 = vmatpush1.msra.mxu0 0.0
    %992 = vmatprep.subr.mxu0 0.0
    %993 = vmatpush1.msra.mxu0 0.0
    %994 = vmatprep.subr.mxu0 0.0
    %995 = vmatpush1.msra.mxu0 0.0
    %996 = vmatprep.subr.mxu0 0.0
    %997 = vmatpush1.msra.mxu0 0.0
    %998 = vmatprep.subr.mxu0 0.0
    %999 = vmatpush1.msra.mxu0 0.0
    %1000 = vmatprep.subr.mxu0 0.0
    %1001 = vmatpush1.msra.mxu0 0.0
    %1002 = vmatprep.subr.mxu0 0.0
    %1003 = vmatpush1.msra.mxu0 0.0
    %1004 = vmatprep.subr.mxu0 0.0
    %1005 = vmatpush1.msra.mxu0 0.0
    %1006 = vmatprep.subr.mxu0 0.0
    %1007 = vmatpush1.msra.mxu0 0.0
    %1008 = vmatprep.subr.mxu0 0.0
    %1009 = vmatpush1.msra.mxu0 0.0
    %1010 = vmatprep.subr.mxu0 0.0
    %1011 = vmatpush1.msra.mxu0 0.0
    %1012 = vmatprep.subr.mxu0 0.0
    %1013 = vmatpush1.msra.mxu0 0.0
    %1014 = vmatprep.subr.mxu0 0.0
    %1015 = vmatpush1.msra.mxu0 0.0
    %1016 = vmatprep.subr.mxu0 0.0
    %1017 = vmatpush1.msra.mxu0 0.0
    %1018 = vmatprep.subr.mxu0 0.0
    %1019 = vmatpush1.msra.mxu0 0.0
    %1020 = vmatprep.subr.mxu0 0.0
    %1021 = vmatpush1.msra.mxu0 0.0
    %1022 = vmatprep.subr.mxu0 0.0
    %1023 = vmatpush1.msra.mxu0 0.0
    %1024 = vmatprep.subr.mxu0 0.0
    %1025 = vmatpush1.msra.mxu0 0.0
    %1026 = vmatprep.subr.mxu0 0.0
    %1027 = vmatpush1.msra.mxu0 0.0
    %1028 = vmatprep.subr.mxu0 0.0
    %1029 = vmatpush1.msra.mxu0 0.0
    %1030 = vmatprep.subr.mxu0 0.0
    %1031 = vmatpush1.msra.mxu0 0.0
    %1032 = vmatprep.subr.mxu0 0.0
    %1033 = vmatpush1.msra.mxu0 0.0
    %1034 = vmatprep.subr.mxu0 0.0
    %1035 = vmatpush1.msra.mxu0 0.0
    %1036 = vmatprep.subr.mxu0 0.0
    %1037 = vmatpush1.msra.mxu0 0.0
    %1038 = vmatprep.subr.mxu0 0.0
    %1039 = vmatpush1.msra.mxu0 0.0
    %1040 = vmatprep.subr.mxu0 0.0
    %1041 = vmatpush1.msra.mxu0 0.0
    %1042 = vmatprep.subr.mxu0 0.0
    %1043 = vmatpush1.msra.mxu0 0.0
    %1044 = vmatprep.subr.mxu0 0.0
    %1045 = vmatpush1.msra.mxu0 0.0
    %1046 = vmatprep.mubr.f32.mxu0 0.0
    %1047 = vmatmul.mubr.f32.gmra.mrb[0].mxu0 %v980
    %v1048 = vpop.f32.mrb[0].mxu0
    %v1049 = vadd.f32 %v848, %v1048
    %v1050 = vpop.f32.mrb[0].mxu0
    %1051 = vdwg.mxu0
    %v1053 = vsel %vm905, %v827, 0
    %1055 = vmatprep.subr.mxu0 0.0
    %1056 = vmatpush1.msra.mxu0 %v413
    %1057 = vmatprep.subr.mxu0 0.0
    %1058 = vmatpush1.msra.mxu0 %v414
    %1059 = vmatprep.subr.mxu0 0.0
    %1060 = vmatpush1.msra.mxu0 %v415
    %1061 = vmatprep.subr.mxu0 0.0
    %1062 = vmatpush1.msra.mxu0 %v416
    %1063 = vmatprep.subr.mxu0 0.0
    %1064 = vmatpush1.msra.mxu0 0.0
    %1065 = vmatprep.subr.mxu0 0.0
    %1066 = vmatpush1.msra.mxu0 0.0
    %1067 = vmatprep.subr.mxu0 0.0
    %1068 = vmatpush1.msra.mxu0 0.0
    %1069 = vmatprep.subr.mxu0 0.0
    %1070 = vmatpush1.msra.mxu0 0.0
    %1071 = vmatprep.subr.mxu0 0.0
    %1072 = vmatpush1.msra.mxu0 0.0
    %1073 = vmatprep.subr.mxu0 0.0
    %1074 = vmatpush1.msra.mxu0 0.0
    %1075 = vmatprep.subr.mxu0 0.0
    %1076 = vmatpush1.msra.mxu0 0.0
    %1077 = vmatprep.subr.mxu0 0.0
    %1078 = vmatpush1.msra.mxu0 0.0
    %1079 = vmatprep.subr.mxu0 0.0
    %1080 = vmatpush1.msra.mxu0 0.0
    %1081 = vmatprep.subr.mxu0 0.0
    %1082 = vmatpush1.msra.mxu0 0.0
    %1083 = vmatprep.subr.mxu0 0.0
    %1084 = vmatpush1.msra.mxu0 0.0
    %1085 = vmatprep.subr.mxu0 0.0
    %1086 = vmatpush1.msra.mxu0 0.0
    %1087 = vmatprep.subr.mxu0 0.0
    %1088 = vmatpush1.msra.mxu0 0.0
    %1089 = vmatprep.subr.mxu0 0.0
    %1090 = vmatpush1.msra.mxu0 0.0
    %1091 = vmatprep.subr.mxu0 0.0
    %1092 = vmatpush1.msra.mxu0 0.0
    %1093 = vmatprep.subr.mxu0 0.0
    %1094 = vmatpush1.msra.mxu0 0.0
    %1095 = vmatprep.subr.mxu0 0.0
    %1096 = vmatpush1.msra.mxu0 0.0
    %1097 = vmatprep.subr.mxu0 0.0
    %1098 = vmatpush1.msra.mxu0 0.0
    %1099 = vmatprep.subr.mxu0 0.0
    %1100 = vmatpush1.msra.mxu0 0.0
    %1101 = vmatprep.subr.mxu0 0.0
    %1102 = vmatpush1.msra.mxu0 0.0
    %1103 = vmatprep.subr.mxu0 0.0
    %1104 = vmatpush1.msra.mxu0 0.0
    %1105 = vmatprep.subr.mxu0 0.0
    %1106 = vmatpush1.msra.mxu0 0.0
    %1107 = vmatprep.subr.mxu0 0.0
    %1108 = vmatpush1.msra.mxu0 0.0
    %1109 = vmatprep.subr.mxu0 0.0
    %1110 = vmatpush1.msra.mxu0 0.0
    %1111 = vmatprep.subr.mxu0 0.0
    %1112 = vmatpush1.msra.mxu0 0.0
    %1113 = vmatprep.subr.mxu0 0.0
    %1114 = vmatpush1.msra.mxu0 0.0
    %1115 = vmatprep.subr.mxu0 0.0
    %1116 = vmatpush1.msra.mxu0 0.0
    %1117 = vmatprep.subr.mxu0 0.0
    %1118 = vmatpush1.msra.mxu0 0.0
    %1119 = vmatprep.mubr.f32.mxu0 0.0
    %1120 = vmatmul.mubr.f32.gmra.mrb[0].mxu0 %v1053
    %v1121 = vpop.f32.mrb[0].mxu0
    %v1122 = vadd.f32 %v852, %v1121
    %v1123 = vpop.f32.mrb[0].mxu0
    %1124 = vdwg.mxu0
    %v1126 = vsel %vm905, %v828, 0
    %1128 = vmatprep.subr.mxu0 0.0
    %1129 = vmatpush1.msra.mxu0 %v424
    %1130 = vmatprep.subr.mxu0 0.0
    %1131 = vmatpush1.msra.mxu0 %v425
    %1132 = vmatprep.subr.mxu0 0.0
    %1133 = vmatpush1.msra.mxu0 %v426
    %1134 = vmatprep.subr.mxu0 0.0
    %1135 = vmatpush1.msra.mxu0 %v427
    %1136 = vmatprep.subr.mxu0 0.0
    %1137 = vmatpush1.msra.mxu0 0.0
    %1138 = vmatprep.subr.mxu0 0.0
    %1139 = vmatpush1.msra.mxu0 0.0
    %1140 = vmatprep.subr.mxu0 0.0
    %1141 = vmatpush1.msra.mxu0 0.0
    %1142 = vmatprep.subr.mxu0 0.0
    %1143 = vmatpush1.msra.mxu0 0.0
    %1144 = vmatprep.subr.mxu0 0.0
    %1145 = vmatpush1.msra.mxu0 0.0
    %1146 = vmatprep.subr.mxu0 0.0
    %1147 = vmatpush1.msra.mxu0 0.0
    %1148 = vmatprep.subr.mxu0 0.0
    %1149 = vmatpush1.msra.mxu0 0.0
    %1150 = vmatprep.subr.mxu0 0.0
    %1151 = vmatpush1.msra.mxu0 0.0
    %1152 = vmatprep.subr.mxu0 0.0
    %1153 = vmatpush1.msra.mxu0 0.0
    %1154 = vmatprep.subr.mxu0 0.0
    %1155 = vmatpush1.msra.mxu0 0.0
    %1156 = vmatprep.subr.mxu0 0.0
    %1157 = vmatpush1.msra.mxu0 0.0
    %1158 = vmatprep.subr.mxu0 0.0
    %1159 = vmatpush1.msra.mxu0 0.0
    %1160 = vmatprep.subr.mxu0 0.0
    %1161 = vmatpush1.msra.mxu0 0.0
    %1162 = vmatprep.subr.mxu0 0.0
    %1163 = vmatpush1.msra.mxu0 0.0
    %1164 = vmatprep.subr.mxu0 0.0
    %1165 = vmatpush1.msra.mxu0 0.0
    %1166 = vmatprep.subr.mxu0 0.0
    %1167 = vmatpush1.msra.mxu0 0.0
    %1168 = vmatprep.subr.mxu0 0.0
    %1169 = vmatpush1.msra.mxu0 0.0
    %1170 = vmatprep.subr.mxu0 0.0
    %1171 = vmatpush1.msra.mxu0 0.0
    %1172 = vmatprep.subr.mxu0 0.0
    %1173 = vmatpush1.msra.mxu0 0.0
    %1174 = vmatprep.subr.mxu0 0.0
    %1175 = vmatpush1.msra.mxu0 0.0
    %1176 = vmatprep.subr.mxu0 0.0
    %1177 = vmatpush1.msra.mxu0 0.0
    %1178 = vmatprep.subr.mxu0 0.0
    %1179 = vmatpush1.msra.mxu0 0.0
    %1180 = vmatprep.subr.mxu0 0.0
    %1181 = vmatpush1.msra.mxu0 0.0
    %1182 = vmatprep.subr.mxu0 0.0
    %1183 = vmatpush1.msra.mxu0 0.0
    %1184 = vmatprep.subr.mxu0 0.0
    %1185 = vmatpush1.msra.mxu0 0.0
    %1186 = vmatprep.subr.mxu0 0.0
    %1187 = vmatpush1.msra.mxu0 0.0
    %1188 = vmatprep.subr.mxu0 0.0
    %1189 = vmatpush1.msra.mxu0 0.0
    %1190 = vmatprep.subr.mxu0 0.0
    %1191 = vmatpush1.msra.mxu0 0.0
    %1192 = vmatprep.mubr.f32.mxu0 0.0
    %1193 = vmatmul.mubr.f32.gmra.mrb[0].mxu0 %v1126
    %v1194 = vpop.f32.mrb[0].mxu0
    %v1195 = vadd.f32 %v856, %v1194
    %v1196 = vpop.f32.mrb[0].mxu0
    %1197 = vdwg.mxu0
    %v1199 = vsel %vm905, %v829, 0
    %1201 = vmatprep.subr.mxu0 0.0
    %1202 = vmatpush1.msra.mxu0 %v435
    %1203 = vmatprep.subr.mxu0 0.0
    %1204 = vmatpush1.msra.mxu0 %v436
    %1205 = vmatprep.subr.mxu0 0.0
    %1206 = vmatpush1.msra.mxu0 %v437
    %1207 = vmatprep.subr.mxu0 0.0
    %1208 = vmatpush1.msra.mxu0 %v438
    %1209 = vmatprep.subr.mxu0 0.0
    %1210 = vmatpush1.msra.mxu0 0.0
    %1211 = vmatprep.subr.mxu0 0.0
    %1212 = vmatpush1.msra.mxu0 0.0
    %1213 = vmatprep.subr.mxu0 0.0
    %1214 = vmatpush1.msra.mxu0 0.0
    %1215 = vmatprep.subr.mxu0 0.0
    %1216 = vmatpush1.msra.mxu0 0.0
    %1217 = vmatprep.subr.mxu0 0.0
    %1218 = vmatpush1.msra.mxu0 0.0
    %1219 = vmatprep.subr.mxu0 0.0
    %1220 = vmatpush1.msra.mxu0 0.0
    %1221 = vmatprep.subr.mxu0 0.0
    %1222 = vmatpush1.msra.mxu0 0.0
    %1223 = vmatprep.subr.mxu0 0.0
    %1224 = vmatpush1.msra.mxu0 0.0
    %1225 = vmatprep.subr.mxu0 0.0
    %1226 = vmatpush1.msra.mxu0 0.0
    %1227 = vmatprep.subr.mxu0 0.0
    %1228 = vmatpush1.msra.mxu0 0.0
    %1229 = vmatprep.subr.mxu0 0.0
    %1230 = vmatpush1.msra.mxu0 0.0
    %1231 = vmatprep.subr.mxu0 0.0
    %1232 = vmatpush1.msra.mxu0 0.0
    %1233 = vmatprep.subr.mxu0 0.0
    %1234 = vmatpush1.msra.mxu0 0.0
    %1235 = vmatprep.subr.mxu0 0.0
    %1236 = vmatpush1.msra.mxu0 0.0
    %1237 = vmatprep.subr.mxu0 0.0
    %1238 = vmatpush1.msra.mxu0 0.0
    %1239 = vmatprep.subr.mxu0 0.0
    %1240 = vmatpush1.msra.mxu0 0.0
    %1241 = vmatprep.subr.mxu0 0.0
    %1242 = vmatpush1.msra.mxu0 0.0
    %1243 = vmatprep.subr.mxu0 0.0
    %1244 = vmatpush1.msra.mxu0 0.0
    %1245 = vmatprep.subr.mxu0 0.0
    %1246 = vmatpush1.msra.mxu0 0.0
    %1247 = vmatprep.subr.mxu0 0.0
    %1248 = vmatpush1.msra.mxu0 0.0
    %1249 = vmatprep.subr.mxu0 0.0
    %1250 = vmatpush1.msra.mxu0 0.0
    %1251 = vmatprep.subr.mxu0 0.0
    %1252 = vmatpush1.msra.mxu0 0.0
    %1253 = vmatprep.subr.mxu0 0.0
    %1254 = vmatpush1.msra.mxu0 0.0
    %1255 = vmatprep.subr.mxu0 0.0
    %1256 = vmatpush1.msra.mxu0 0.0
    %1257 = vmatprep.subr.mxu0 0.0
    %1258 = vmatpush1.msra.mxu0 0.0
    %1259 = vmatprep.subr.mxu0 0.0
    %1260 = vmatpush1.msra.mxu0 0.0
    %1261 = vmatprep.subr.mxu0 0.0
    %1262 = vmatpush1.msra.mxu0 0.0
    %1263 = vmatprep.subr.mxu0 0.0
    %1264 = vmatpush1.msra.mxu0 0.0
    %1265 = vmatprep.mubr.f32.mxu0 0.0
    %1266 = vmatmul.mubr.f32.gmra.mrb[0].mxu0 %v1199
    %v1267 = vpop.f32.mrb[0].mxu0
    %v1268 = vadd.f32 %v860, %v1267
    %v1269 = vpop.f32.mrb[0].mxu0
    %1270 = vdwg.mxu0
    %v1272 = vsel %vm905, %v830, 0
    %1274 = vmatprep.subr.mxu0 0.0
    %1275 = vmatpush1.msra.mxu0 %v446
    %1276 = vmatprep.subr.mxu0 0.0
    %1277 = vmatpush1.msra.mxu0 %v447
    %1278 = vmatprep.subr.mxu0 0.0
    %1279 = vmatpush1.msra.mxu0 %v448
    %1280 = vmatprep.subr.mxu0 0.0
    %1281 = vmatpush1.msra.mxu0 %v449
    %1282 = vmatprep.subr.mxu0 0.0
    %1283 = vmatpush1.msra.mxu0 0.0
    %1284 = vmatprep.subr.mxu0 0.0
    %1285 = vmatpush1.msra.mxu0 0.0
    %1286 = vmatprep.subr.mxu0 0.0
    %1287 = vmatpush1.msra.mxu0 0.0
    %1288 = vmatprep.subr.mxu0 0.0
    %1289 = vmatpush1.msra.mxu0 0.0
    %1290 = vmatprep.subr.mxu0 0.0
    %1291 = vmatpush1.msra.mxu0 0.0
    %1292 = vmatprep.subr.mxu0 0.0
    %1293 = vmatpush1.msra.mxu0 0.0
    %1294 = vmatprep.subr.mxu0 0.0
    %1295 = vmatpush1.msra.mxu0 0.0
    %1296 = vmatprep.subr.mxu0 0.0
    %1297 = vmatpush1.msra.mxu0 0.0
    %1298 = vmatprep.subr.mxu0 0.0
    %1299 = vmatpush1.msra.mxu0 0.0
    %1300 = vmatprep.subr.mxu0 0.0
    %1301 = vmatpush1.msra.mxu0 0.0
    %1302 = vmatprep.subr.mxu0 0.0
    %1303 = vmatpush1.msra.mxu0 0.0
    %1304 = vmatprep.subr.mxu0 0.0
    %1305 = vmatpush1.msra.mxu0 0.0
    %1306 = vmatprep.subr.mxu0 0.0
    %1307 = vmatpush1.msra.mxu0 0.0
    %1308 = vmatprep.subr.mxu0 0.0
    %1309 = vmatpush1.msra.mxu0 0.0
    %1310 = vmatprep.subr.mxu0 0.0
    %1311 = vmatpush1.msra.mxu0 0.0
    %1312 = vmatprep.subr.mxu0 0.0
    %1313 = vmatpush1.msra.mxu0 0.0
    %1314 = vmatprep.subr.mxu0 0.0
    %1315 = vmatpush1.msra.mxu0 0.0
    %1316 = vmatprep.subr.mxu0 0.0
    %1317 = vmatpush1.msra.mxu0 0.0
    %1318 = vmatprep.subr.mxu0 0.0
    %1319 = vmatpush1.msra.mxu0 0.0
    %1320 = vmatprep.subr.mxu0 0.0
    %1321 = vmatpush1.msra.mxu0 0.0
    %1322 = vmatprep.subr.mxu0 0.0
    %1323 = vmatpush1.msra.mxu0 0.0
    %1324 = vmatprep.subr.mxu0 0.0
    %1325 = vmatpush1.msra.mxu0 0.0
    %1326 = vmatprep.subr.mxu0 0.0
    %1327 = vmatpush1.msra.mxu0 0.0
    %1328 = vmatprep.subr.mxu0 0.0
    %1329 = vmatpush1.msra.mxu0 0.0
    %1330 = vmatprep.subr.mxu0 0.0
    %1331 = vmatpush1.msra.mxu0 0.0
    %1332 = vmatprep.subr.mxu0 0.0
    %1333 = vmatpush1.msra.mxu0 0.0
    %1334 = vmatprep.subr.mxu0 0.0
    %1335 = vmatpush1.msra.mxu0 0.0
    %1336 = vmatprep.subr.mxu0 0.0
    %1337 = vmatpush1.msra.mxu0 0.0
    %1338 = vmatprep.mubr.f32.mxu0 0.0
    %1339 = vmatmul.mubr.f32.gmra.mrb[0].mxu0 %v1272
    %v1340 = vpop.f32.mrb[0].mxu0
    %v1341 = vadd.f32 %v864, %v1340
    %v1342 = vpop.f32.mrb[0].mxu0
    %1343 = vdwg.mxu0
    %v1345 = vsel %vm905, %v831, 0
    %1347 = vmatprep.subr.mxu0 0.0
    %1348 = vmatpush1.msra.mxu0 %v457
    %1349 = vmatprep.subr.mxu0 0.0
    %1350 = vmatpush1.msra.mxu0 %v458
    %1351 = vmatprep.subr.mxu0 0.0
    %1352 = vmatpush1.msra.mxu0 %v459
    %1353 = vmatprep.subr.mxu0 0.0
    %1354 = vmatpush1.msra.mxu0 %v460
    %1355 = vmatprep.subr.mxu0 0.0
    %1356 = vmatpush1.msra.mxu0 0.0
    %1357 = vmatprep.subr.mxu0 0.0
    %1358 = vmatpush1.msra.mxu0 0.0
    %1359 = vmatprep.subr.mxu0 0.0
    %1360 = vmatpush1.msra.mxu0 0.0
    %1361 = vmatprep.subr.mxu0 0.0
    %1362 = vmatpush1.msra.mxu0 0.0
    %1363 = vmatprep.subr.mxu0 0.0
    %1364 = vmatpush1.msra.mxu0 0.0
    %1365 = vmatprep.subr.mxu0 0.0
    %1366 = vmatpush1.msra.mxu0 0.0
    %1367 = vmatprep.subr.mxu0 0.0
    %1368 = vmatpush1.msra.mxu0 0.0
    %1369 = vmatprep.subr.mxu0 0.0
    %1370 = vmatpush1.msra.mxu0 0.0
    %1371 = vmatprep.subr.mxu0 0.0
    %1372 = vmatpush1.msra.mxu0 0.0
    %1373 = vmatprep.subr.mxu0 0.0
    %1374 = vmatpush1.msra.mxu0 0.0
    %1375 = vmatprep.subr.mxu0 0.0
    %1376 = vmatpush1.msra.mxu0 0.0
    %1377 = vmatprep.subr.mxu0 0.0
    %1378 = vmatpush1.msra.mxu0 0.0
    %1379 = vmatprep.subr.mxu0 0.0
    %1380 = vmatpush1.msra.mxu0 0.0
    %1381 = vmatprep.subr.mxu0 0.0
    %1382 = vmatpush1.msra.mxu0 0.0
    %1383 = vmatprep.subr.mxu0 0.0
    %1384 = vmatpush1.msra.mxu0 0.0
    %1385 = vmatprep.subr.mxu0 0.0
    %1386 = vmatpush1.msra.mxu0 0.0
    %1387 = vmatprep.subr.mxu0 0.0
    %1388 = vmatpush1.msra.mxu0 0.0
    %1389 = vmatprep.subr.mxu0 0.0
    %1390 = vmatpush1.msra.mxu0 0.0
    %1391 = vmatprep.subr.mxu0 0.0
    %1392 = vmatpush1.msra.mxu0 0.0
    %1393 = vmatprep.subr.mxu0 0.0
    %1394 = vmatpush1.msra.mxu0 0.0
    %1395 = vmatprep.subr.mxu0 0.0
    %1396 = vmatpush1.msra.mxu0 0.0
    %1397 = vmatprep.subr.mxu0 0.0
    %1398 = vmatpush1.msra.mxu0 0.0
    %1399 = vmatprep.subr.mxu0 0.0
    %1400 = vmatpush1.msra.mxu0 0.0
    %1401 = vmatprep.subr.mxu0 0.0
    %1402 = vmatpush1.msra.mxu0 0.0
    %1403 = vmatprep.subr.mxu0 0.0
    %1404 = vmatpush1.msra.mxu0 0.0
    %1405 = vmatprep.subr.mxu0 0.0
    %1406 = vmatpush1.msra.mxu0 0.0
    %1407 = vmatprep.subr.mxu0 0.0
    %1408 = vmatpush1.msra.mxu0 0.0
    %1409 = vmatprep.subr.mxu0 0.0
    %1410 = vmatpush1.msra.mxu0 0.0
    %1411 = vmatprep.mubr.f32.mxu0 0.0
    %1412 = vmatmul.mubr.f32.gmra.mrb[0].mxu0 %v1345
    %v1413 = vpop.f32.mrb[0].mxu0
    %v1414 = vadd.f32 %v868, %v1413
    %v1415 = vpop.f32.mrb[0].mxu0
    %1416 = vdwg.mxu0
    %v1418 = vsel %vm905, %v832, 0
    %1420 = vmatprep.subr.mxu0 0.0
    %1421 = vmatpush1.msra.mxu0 %v468
    %1422 = vmatprep.subr.mxu0 0.0
    %1423 = vmatpush1.msra.mxu0 %v469
    %1424 = vmatprep.subr.mxu0 0.0
    %1425 = vmatpush1.msra.mxu0 %v470
    %1426 = vmatprep.subr.mxu0 0.0
    %1427 = vmatpush1.msra.mxu0 %v471
    %1428 = vmatprep.subr.mxu0 0.0
    %1429 = vmatpush1.msra.mxu0 0.0
    %1430 = vmatprep.subr.mxu0 0.0
    %1431 = vmatpush1.msra.mxu0 0.0
    %1432 = vmatprep.subr.mxu0 0.0
    %1433 = vmatpush1.msra.mxu0 0.0
    %1434 = vmatprep.subr.mxu0 0.0
    %1435 = vmatpush1.msra.mxu0 0.0
    %1436 = vmatprep.subr.mxu0 0.0
    %1437 = vmatpush1.msra.mxu0 0.0
    %1438 = vmatprep.subr.mxu0 0.0
    %1439 = vmatpush1.msra.mxu0 0.0
    %1440 = vmatprep.subr.mxu0 0.0
    %1441 = vmatpush1.msra.mxu0 0.0
    %1442 = vmatprep.subr.mxu0 0.0
    %1443 = vmatpush1.msra.mxu0 0.0
    %1444 = vmatprep.subr.mxu0 0.0
    %1445 = vmatpush1.msra.mxu0 0.0
    %1446 = vmatprep.subr.mxu0 0.0
    %1447 = vmatpush1.msra.mxu0 0.0
    %1448 = vmatprep.subr.mxu0 0.0
    %1449 = vmatpush1.msra.mxu0 0.0
    %1450 = vmatprep.subr.mxu0 0.0
    %1451 = vmatpush1.msra.mxu0 0.0
    %1452 = vmatprep.subr.mxu0 0.0
    %1453 = vmatpush1.msra.mxu0 0.0
    %1454 = vmatprep.subr.mxu0 0.0
    %1455 = vmatpush1.msra.mxu0 0.0
    %1456 = vmatprep.subr.mxu0 0.0
    %1457 = vmatpush1.msra.mxu0 0.0
    %1458 = vmatprep.subr.mxu0 0.0
    %1459 = vmatpush1.msra.mxu0 0.0
    %1460 = vmatprep.subr.mxu0 0.0
    %1461 = vmatpush1.msra.mxu0 0.0
    %1462 = vmatprep.subr.mxu0 0.0
    %1463 = vmatpush1.msra.mxu0 0.0
    %1464 = vmatprep.subr.mxu0 0.0
    %1465 = vmatpush1.msra.mxu0 0.0
    %1466 = vmatprep.subr.mxu0 0.0
    %1467 = vmatpush1.msra.mxu0 0.0
    %1468 = vmatprep.subr.mxu0 0.0
    %1469 = vmatpush1.msra.mxu0 0.0
    %1470 = vmatprep.subr.mxu0 0.0
    %1471 = vmatpush1.msra.mxu0 0.0
    %1472 = vmatprep.subr.mxu0 0.0
    %1473 = vmatpush1.msra.mxu0 0.0
    %1474 = vmatprep.subr.mxu0 0.0
    %1475 = vmatpush1.msra.mxu0 0.0
    %1476 = vmatprep.subr.mxu0 0.0
    %1477 = vmatpush1.msra.mxu0 0.0
    %1478 = vmatprep.subr.mxu0 0.0
    %1479 = vmatpush1.msra.mxu0 0.0
    %1480 = vmatprep.subr.mxu0 0.0
    %1481 = vmatpush1.msra.mxu0 0.0
    %1482 = vmatprep.subr.mxu0 0.0
    %1483 = vmatpush1.msra.mxu0 0.0
    %1484 = vmatprep.mubr.f32.mxu0 0.0
    %1485 = vmatmul.mubr.f32.gmra.mrb[0].mxu0 %v1418
    %v1486 = vpop.f32.mrb[0].mxu0
    %v1487 = vadd.f32 %v872, %v1486
    %v1488 = vpop.f32.mrb[0].mxu0
    %1489 = vdwg.mxu0
    %v1491 = vsel %vm905, %v833, 0
    %1493 = vmatprep.subr.mxu0 0.0
    %1494 = vmatpush1.msra.mxu0 %v479
    %1495 = vmatprep.subr.mxu0 0.0
    %1496 = vmatpush1.msra.mxu0 %v480
    %1497 = vmatprep.subr.mxu0 0.0
    %1498 = vmatpush1.msra.mxu0 %v481
    %1499 = vmatprep.subr.mxu0 0.0
    %1500 = vmatpush1.msra.mxu0 %v482
    %1501 = vmatprep.subr.mxu0 0.0
    %1502 = vmatpush1.msra.mxu0 0.0
    %1503 = vmatprep.subr.mxu0 0.0
    %1504 = vmatpush1.msra.mxu0 0.0
    %1505 = vmatprep.subr.mxu0 0.0
    %1506 = vmatpush1.msra.mxu0 0.0
    %1507 = vmatprep.subr.mxu0 0.0
    %1508 = vmatpush1.msra.mxu0 0.0
    %1509 = vmatprep.subr.mxu0 0.0
    %1510 = vmatpush1.msra.mxu0 0.0
    %1511 = vmatprep.subr.mxu0 0.0
    %1512 = vmatpush1.msra.mxu0 0.0
    %1513 = vmatprep.subr.mxu0 0.0
    %1514 = vmatpush1.msra.mxu0 0.0
    %1515 = vmatprep.subr.mxu0 0.0
    %1516 = vmatpush1.msra.mxu0 0.0
    %1517 = vmatprep.subr.mxu0 0.0
    %1518 = vmatpush1.msra.mxu0 0.0
    %1519 = vmatprep.subr.mxu0 0.0
    %1520 = vmatpush1.msra.mxu0 0.0
    %1521 = vmatprep.subr.mxu0 0.0
    %1522 = vmatpush1.msra.mxu0 0.0
    %1523 = vmatprep.subr.mxu0 0.0
    %1524 = vmatpush1.msra.mxu0 0.0
    %1525 = vmatprep.subr.mxu0 0.0
    %1526 = vmatpush1.msra.mxu0 0.0
    %1527 = vmatprep.subr.mxu0 0.0
    %1528 = vmatpush1.msra.mxu0 0.0
    %1529 = vmatprep.subr.mxu0 0.0
    %1530 = vmatpush1.msra.mxu0 0.0
    %1531 = vmatprep.subr.mxu0 0.0
    %1532 = vmatpush1.msra.mxu0 0.0
    %1533 = vmatprep.subr.mxu0 0.0
    %1534 = vmatpush1.msra.mxu0 0.0
    %1535 = vmatprep.subr.mxu0 0.0
    %1536 = vmatpush1.msra.mxu0 0.0
    %1537 = vmatprep.subr.mxu0 0.0
    %1538 = vmatpush1.msra.mxu0 0.0
    %1539 = vmatprep.subr.mxu0 0.0
    %1540 = vmatpush1.msra.mxu0 0.0
    %1541 = vmatprep.subr.mxu0 0.0
    %1542 = vmatpush1.msra.mxu0 0.0
    %1543 = vmatprep.subr.mxu0 0.0
    %1544 = vmatpush1.msra.mxu0 0.0
    %1545 = vmatprep.subr.mxu0 0.0
    %1546 = vmatpush1.msra.mxu0 0.0
    %1547 = vmatprep.subr.mxu0 0.0
    %1548 = vmatpush1.msra.mxu0 0.0
    %1549 = vmatprep.subr.mxu0 0.0
    %1550 = vmatpush1.msra.mxu0 0.0
    %1551 = vmatprep.subr.mxu0 0.0
    %1552 = vmatpush1.msra.mxu0 0.0
    %1553 = vmatprep.subr.mxu0 0.0
    %1554 = vmatpush1.msra.mxu0 0.0
    %1555 = vmatprep.subr.mxu0 0.0
    %1556 = vmatpush1.msra.mxu0 0.0
    %1557 = vmatprep.mubr.f32.mxu0 0.0
    %1558 = vmatmul.mubr.f32.gmra.mrb[0].mxu0 %v1491
    %v1559 = vpop.f32.mrb[0].mxu0
    %v1560 = vadd.f32 %v876, %v1559
    %v1561 = vpop.f32.mrb[0].mxu0
    %1562 = vdwg.mxu0
    %v1564 = vsel %vm905, %v834, 0
    %1566 = vmatprep.subr.mxu0 0.0
    %1567 = vmatpush1.msra.mxu0 %v490
    %1568 = vmatprep.subr.mxu0 0.0
    %1569 = vmatpush1.msra.mxu0 %v491
    %1570 = vmatprep.subr.mxu0 0.0
    %1571 = vmatpush1.msra.mxu0 %v492
    %1572 = vmatprep.subr.mxu0 0.0
    %1573 = vmatpush1.msra.mxu0 %v493
    %1574 = vmatprep.subr.mxu0 0.0
    %1575 = vmatpush1.msra.mxu0 0.0
    %1576 = vmatprep.subr.mxu0 0.0
    %1577 = vmatpush1.msra.mxu0 0.0
    %1578 = vmatprep.subr.mxu0 0.0
    %1579 = vmatpush1.msra.mxu0 0.0
    %1580 = vmatprep.subr.mxu0 0.0
    %1581 = vmatpush1.msra.mxu0 0.0
    %1582 = vmatprep.subr.mxu0 0.0
    %1583 = vmatpush1.msra.mxu0 0.0
    %1584 = vmatprep.subr.mxu0 0.0
    %1585 = vmatpush1.msra.mxu0 0.0
    %1586 = vmatprep.subr.mxu0 0.0
    %1587 = vmatpush1.msra.mxu0 0.0
    %1588 = vmatprep.subr.mxu0 0.0
    %1589 = vmatpush1.msra.mxu0 0.0
    %1590 = vmatprep.subr.mxu0 0.0
    %1591 = vmatpush1.msra.mxu0 0.0
    %1592 = vmatprep.subr.mxu0 0.0
    %1593 = vmatpush1.msra.mxu0 0.0
    %1594 = vmatprep.subr.mxu0 0.0
    %1595 = vmatpush1.msra.mxu0 0.0
    %1596 = vmatprep.subr.mxu0 0.0
    %1597 = vmatpush1.msra.mxu0 0.0
    %1598 = vmatprep.subr.mxu0 0.0
    %1599 = vmatpush1.msra.mxu0 0.0
    %1600 = vmatprep.subr.mxu0 0.0
    %1601 = vmatpush1.msra.mxu0 0.0
    %1602 = vmatprep.subr.mxu0 0.0
    %1603 = vmatpush1.msra.mxu0 0.0
    %1604 = vmatprep.subr.mxu0 0.0
    %1605 = vmatpush1.msra.mxu0 0.0
    %1606 = vmatprep.subr.mxu0 0.0
    %1607 = vmatpush1.msra.mxu0 0.0
    %1608 = vmatprep.subr.mxu0 0.0
    %1609 = vmatpush1.msra.mxu0 0.0
    %1610 = vmatprep.subr.mxu0 0.0
    %1611 = vmatpush1.msra.mxu0 0.0
    %1612 = vmatprep.subr.mxu0 0.0
    %1613 = vmatpush1.msra.mxu0 0.0
    %1614 = vmatprep.subr.mxu0 0.0
    %1615 = vmatpush1.msra.mxu0 0.0
    %1616 = vmatprep.subr.mxu0 0.0
    %1617 = vmatpush1.msra.mxu0 0.0
    %1618 = vmatprep.subr.mxu0 0.0
    %1619 = vmatpush1.msra.mxu0 0.0
    %1620 = vmatprep.subr.mxu0 0.0
    %1621 = vmatpush1.msra.mxu0 0.0
    %1622 = vmatprep.subr.mxu0 0.0
    %1623 = vmatpush1.msra.mxu0 0.0
    %1624 = vmatprep.subr.mxu0 0.0
    %1625 = vmatpush1.msra.mxu0 0.0
    %1626 = vmatprep.subr.mxu0 0.0
    %1627 = vmatpush1.msra.mxu0 0.0
    %1628 = vmatprep.subr.mxu0 0.0
    %1629 = vmatpush1.msra.mxu0 0.0
    %1630 = vmatprep.mubr.f32.mxu0 0.0
    %1631 = vmatmul.mubr.f32.gmra.mrb[0].mxu0 %v1564
    %v1632 = vpop.f32.mrb[0].mxu0
    %v1633 = vadd.f32 %v880, %v1632
    %v1634 = vpop.f32.mrb[0].mxu0
    %1635 = vdwg.mxu0
    %v1637 = vsel %vm905, %v835, 0
    %1639 = vmatprep.subr.mxu0 0.0
    %1640 = vmatpush1.msra.mxu0 %v501
    %1641 = vmatprep.subr.mxu0 0.0
    %1642 = vmatpush1.msra.mxu0 %v502
    %1643 = vmatprep.subr.mxu0 0.0
    %1644 = vmatpush1.msra.mxu0 %v503
    %1645 = vmatprep.subr.mxu0 0.0
    %1646 = vmatpush1.msra.mxu0 %v504
    %1647 = vmatprep.subr.mxu0 0.0
    %1648 = vmatpush1.msra.mxu0 0.0
    %1649 = vmatprep.subr.mxu0 0.0
    %1650 = vmatpush1.msra.mxu0 0.0
    %1651 = vmatprep.subr.mxu0 0.0
    %1652 = vmatpush1.msra.mxu0 0.0
    %1653 = vmatprep.subr.mxu0 0.0
    %1654 = vmatpush1.msra.mxu0 0.0
    %1655 = vmatprep.subr.mxu0 0.0
    %1656 = vmatpush1.msra.mxu0 0.0
    %1657 = vmatprep.subr.mxu0 0.0
    %1658 = vmatpush1.msra.mxu0 0.0
    %1659 = vmatprep.subr.mxu0 0.0
    %1660 = vmatpush1.msra.mxu0 0.0
    %1661 = vmatprep.subr.mxu0 0.0
    %1662 = vmatpush1.msra.mxu0 0.0
    %1663 = vmatprep.subr.mxu0 0.0
    %1664 = vmatpush1.msra.mxu0 0.0
    %1665 = vmatprep.subr.mxu0 0.0
    %1666 = vmatpush1.msra.mxu0 0.0
    %1667 = vmatprep.subr.mxu0 0.0
    %1668 = vmatpush1.msra.mxu0 0.0
    %1669 = vmatprep.subr.mxu0 0.0
    %1670 = vmatpush1.msra.mxu0 0.0
    %1671 = vmatprep.subr.mxu0 0.0
    %1672 = vmatpush1.msra.mxu0 0.0
    %1673 = vmatprep.subr.mxu0 0.0
    %1674 = vmatpush1.msra.mxu0 0.0
    %1675 = vmatprep.subr.mxu0 0.0
    %1676 = vmatpush1.msra.mxu0 0.0
    %1677 = vmatprep.subr.mxu0 0.0
    %1678 = vmatpush1.msra.mxu0 0.0
    %1679 = vmatprep.subr.mxu0 0.0
    %1680 = vmatpush1.msra.mxu0 0.0
    %1681 = vmatprep.subr.mxu0 0.0
    %1682 = vmatpush1.msra.mxu0 0.0
    %1683 = vmatprep.subr.mxu0 0.0
    %1684 = vmatpush1.msra.mxu0 0.0
    %1685 = vmatprep.subr.mxu0 0.0
    %1686 = vmatpush1.msra.mxu0 0.0
    %1687 = vmatprep.subr.mxu0 0.0
    %1688 = vmatpush1.msra.mxu0 0.0
    %1689 = vmatprep.subr.mxu0 0.0
    %1690 = vmatpush1.msra.mxu0 0.0
    %1691 = vmatprep.subr.mxu0 0.0
    %1692 = vmatpush1.msra.mxu0 0.0
    %1693 = vmatprep.subr.mxu0 0.0
    %1694 = vmatpush1.msra.mxu0 0.0
    %1695 = vmatprep.subr.mxu0 0.0
    %1696 = vmatpush1.msra.mxu0 0.0
    %1697 = vmatprep.subr.mxu0 0.0
    %1698 = vmatpush1.msra.mxu0 0.0
    %1699 = vmatprep.subr.mxu0 0.0
    %1700 = vmatpush1.msra.mxu0 0.0
    %1701 = vmatprep.subr.mxu0 0.0
    %1702 = vmatpush1.msra.mxu0 0.0
    %1703 = vmatprep.mubr.f32.mxu0 0.0
    %1704 = vmatmul.mubr.f32.gmra.mrb[0].mxu0 %v1637
    %v1705 = vpop.f32.mrb[0].mxu0
    %v1706 = vadd.f32 %v884, %v1705
    %v1707 = vpop.f32.mrb[0].mxu0
    %1708 = vdwg.mxu0
    %v1710 = vsel %vm905, %v836, 0
    %1712 = vmatprep.subr.mxu0 0.0
    %1713 = vmatpush1.msra.mxu0 %v512
    %1714 = vmatprep.subr.mxu0 0.0
    %1715 = vmatpush1.msra.mxu0 %v513
    %1716 = vmatprep.subr.mxu0 0.0
    %1717 = vmatpush1.msra.mxu0 %v514
    %1718 = vmatprep.subr.mxu0 0.0
    %1719 = vmatpush1.msra.mxu0 %v515
    %1720 = vmatprep.subr.mxu0 0.0
    %1721 = vmatpush1.msra.mxu0 0.0
    %1722 = vmatprep.subr.mxu0 0.0
    %1723 = vmatpush1.msra.mxu0 0.0
    %1724 = vmatprep.subr.mxu0 0.0
    %1725 = vmatpush1.msra.mxu0 0.0
    %1726 = vmatprep.subr.mxu0 0.0
    %1727 = vmatpush1.msra.mxu0 0.0
    %1728 = vmatprep.subr.mxu0 0.0
    %1729 = vmatpush1.msra.mxu0 0.0
    %1730 = vmatprep.subr.mxu0 0.0
    %1731 = vmatpush1.msra.mxu0 0.0
    %1732 = vmatprep.subr.mxu0 0.0
    %1733 = vmatpush1.msra.mxu0 0.0
    %1734 = vmatprep.subr.mxu0 0.0
    %1735 = vmatpush1.msra.mxu0 0.0
    %1736 = vmatprep.subr.mxu0 0.0
    %1737 = vmatpush1.msra.mxu0 0.0
    %1738 = vmatprep.subr.mxu0 0.0
    %1739 = vmatpush1.msra.mxu0 0.0
    %1740 = vmatprep.subr.mxu0 0.0
    %1741 = vmatpush1.msra.mxu0 0.0
    %1742 = vmatprep.subr.mxu0 0.0
    %1743 = vmatpush1.msra.mxu0 0.0
    %1744 = vmatprep.subr.mxu0 0.0
    %1745 = vmatpush1.msra.mxu0 0.0
    %1746 = vmatprep.subr.mxu0 0.0
    %1747 = vmatpush1.msra.mxu0 0.0
    %1748 = vmatprep.subr.mxu0 0.0
    %1749 = vmatpush1.msra.mxu0 0.0
    %1750 = vmatprep.subr.mxu0 0.0
    %1751 = vmatpush1.msra.mxu0 0.0
    %1752 = vmatprep.subr.mxu0 0.0
    %1753 = vmatpush1.msra.mxu0 0.0
    %1754 = vmatprep.subr.mxu0 0.0
    %1755 = vmatpush1.msra.mxu0 0.0
    %1756 = vmatprep.subr.mxu0 0.0
    %1757 = vmatpush1.msra.mxu0 0.0
    %1758 = vmatprep.subr.mxu0 0.0
    %1759 = vmatpush1.msra.mxu0 0.0
    %1760 = vmatprep.subr.mxu0 0.0
    %1761 = vmatpush1.msra.mxu0 0.0
    %1762 = vmatprep.subr.mxu0 0.0
    %1763 = vmatpush1.msra.mxu0 0.0
    %1764 = vmatprep.subr.mxu0 0.0
    %1765 = vmatpush1.msra.mxu0 0.0
    %1766 = vmatprep.subr.mxu0 0.0
    %1767 = vmatpush1.msra.mxu0 0.0
    %1768 = vmatprep.subr.mxu0 0.0
    %1769 = vmatpush1.msra.mxu0 0.0
    %1770 = vmatprep.subr.mxu0 0.0
    %1771 = vmatpush1.msra.mxu0 0.0
    %1772 = vmatprep.subr.mxu0 0.0
    %1773 = vmatpush1.msra.mxu0 0.0
    %1774 = vmatprep.subr.mxu0 0.0
    %1775 = vmatpush1.msra.mxu0 0.0
    %1776 = vmatprep.mubr.f32.mxu0 0.0
    %1777 = vmatmul.mubr.f32.gmra.mrb[0].mxu0 %v1710
    %v1778 = vpop.f32.mrb[0].mxu0
    %v1779 = vadd.f32 %v888, %v1778
    %v1780 = vpop.f32.mrb[0].mxu0
    %1781 = vdwg.mxu0
    %v1783 = vsel %vm905, %v837, 0
    %1785 = vmatprep.subr.mxu0 0.0
    %1786 = vmatpush1.msra.mxu0 %v523
    %1787 = vmatprep.subr.mxu0 0.0
    %1788 = vmatpush1.msra.mxu0 %v524
    %1789 = vmatprep.subr.mxu0 0.0
    %1790 = vmatpush1.msra.mxu0 %v525
    %1791 = vmatprep.subr.mxu0 0.0
    %1792 = vmatpush1.msra.mxu0 %v526
    %1793 = vmatprep.subr.mxu0 0.0
    %1794 = vmatpush1.msra.mxu0 0.0
    %1795 = vmatprep.subr.mxu0 0.0
    %1796 = vmatpush1.msra.mxu0 0.0
    %1797 = vmatprep.subr.mxu0 0.0
    %1798 = vmatpush1.msra.mxu0 0.0
    %1799 = vmatprep.subr.mxu0 0.0
    %1800 = vmatpush1.msra.mxu0 0.0
    %1801 = vmatprep.subr.mxu0 0.0
    %1802 = vmatpush1.msra.mxu0 0.0
    %1803 = vmatprep.subr.mxu0 0.0
    %1804 = vmatpush1.msra.mxu0 0.0
    %1805 = vmatprep.subr.mxu0 0.0
    %1806 = vmatpush1.msra.mxu0 0.0
    %1807 = vmatprep.subr.mxu0 0.0
    %1808 = vmatpush1.msra.mxu0 0.0
    %1809 = vmatprep.subr.mxu0 0.0
    %1810 = vmatpush1.msra.mxu0 0.0
    %1811 = vmatprep.subr.mxu0 0.0
    %1812 = vmatpush1.msra.mxu0 0.0
    %1813 = vmatprep.subr.mxu0 0.0
    %1814 = vmatpush1.msra.mxu0 0.0
    %1815 = vmatprep.subr.mxu0 0.0
    %1816 = vmatpush1.msra.mxu0 0.0
    %1817 = vmatprep.subr.mxu0 0.0
    %1818 = vmatpush1.msra.mxu0 0.0
    %1819 = vmatprep.subr.mxu0 0.0
    %1820 = vmatpush1.msra.mxu0 0.0
    %1821 = vmatprep.subr.mxu0 0.0
    %1822 = vmatpush1.msra.mxu0 0.0
    %1823 = vmatprep.subr.mxu0 0.0
    %1824 = vmatpush1.msra.mxu0 0.0
    %1825 = vmatprep.subr.mxu0 0.0
    %1826 = vmatpush1.msra.mxu0 0.0
    %1827 = vmatprep.subr.mxu0 0.0
    %1828 = vmatpush1.msra.mxu0 0.0
    %1829 = vmatprep.subr.mxu0 0.0
    %1830 = vmatpush1.msra.mxu0 0.0
    %1831 = vmatprep.subr.mxu0 0.0
    %1832 = vmatpush1.msra.mxu0 0.0
    %1833 = vmatprep.subr.mxu0 0.0
    %1834 = vmatpush1.msra.mxu0 0.0
    %1835 = vmatprep.subr.mxu0 0.0
    %1836 = vmatpush1.msra.mxu0 0.0
    %1837 = vmatprep.subr.mxu0 0.0
    %1838 = vmatpush1.msra.mxu0 0.0
    %1839 = vmatprep.subr.mxu0 0.0
    %1840 = vmatpush1.msra.mxu0 0.0
    %1841 = vmatprep.subr.mxu0 0.0
    %1842 = vmatpush1.msra.mxu0 0.0
    %1843 = vmatprep.subr.mxu0 0.0
    %1844 = vmatpush1.msra.mxu0 0.0
    %1845 = vmatprep.subr.mxu0 0.0
    %1846 = vmatpush1.msra.mxu0 0.0
    %1847 = vmatprep.subr.mxu0 0.0
    %1848 = vmatpush1.msra.mxu0 0.0
    %1849 = vmatprep.mubr.f32.mxu0 0.0
    %1850 = vmatmul.mubr.f32.gmra.mrb[0].mxu0 %v1783
    %v1851 = vpop.f32.mrb[0].mxu0
    %v1852 = vadd.f32 %v892, %v1851
    %v1853 = vpop.f32.mrb[0].mxu0
    %1854 = vdwg.mxu0
    %v1856 = vsel %vm905, %v838, 0
    %1858 = vmatprep.subr.mxu0 0.0
    %1859 = vmatpush1.msra.mxu0 %v534
    %1860 = vmatprep.subr.mxu0 0.0
    %1861 = vmatpush1.msra.mxu0 %v535
    %1862 = vmatprep.subr.mxu0 0.0
    %1863 = vmatpush1.msra.mxu0 %v536
    %1864 = vmatprep.subr.mxu0 0.0
    %1865 = vmatpush1.msra.mxu0 %v537
    %1866 = vmatprep.subr.mxu0 0.0
    %1867 = vmatpush1.msra.mxu0 0.0
    %1868 = vmatprep.subr.mxu0 0.0
    %1869 = vmatpush1.msra.mxu0 0.0
    %1870 = vmatprep.subr.mxu0 0.0
    %1871 = vmatpush1.msra.mxu0 0.0
    %1872 = vmatprep.subr.mxu0 0.0
    %1873 = vmatpush1.msra.mxu0 0.0
    %1874 = vmatprep.subr.mxu0 0.0
    %1875 = vmatpush1.msra.mxu0 0.0
    %1876 = vmatprep.subr.mxu0 0.0
    %1877 = vmatpush1.msra.mxu0 0.0
    %1878 = vmatprep.subr.mxu0 0.0
    %1879 = vmatpush1.msra.mxu0 0.0
    %1880 = vmatprep.subr.mxu0 0.0
    %1881 = vmatpush1.msra.mxu0 0.0
    %1882 = vmatprep.subr.mxu0 0.0
    %1883 = vmatpush1.msra.mxu0 0.0
    %1884 = vmatprep.subr.mxu0 0.0
    %1885 = vmatpush1.msra.mxu0 0.0
    %1886 = vmatprep.subr.mxu0 0.0
    %1887 = vmatpush1.msra.mxu0 0.0
    %1888 = vmatprep.subr.mxu0 0.0
    %1889 = vmatpush1.msra.mxu0 0.0
    %1890 = vmatprep.subr.mxu0 0.0
    %1891 = vmatpush1.msra.mxu0 0.0
    %1892 = vmatprep.subr.mxu0 0.0
    %1893 = vmatpush1.msra.mxu0 0.0
    %1894 = vmatprep.subr.mxu0 0.0
    %1895 = vmatpush1.msra.mxu0 0.0
    %1896 = vmatprep.subr.mxu0 0.0
    %1897 = vmatpush1.msra.mxu0 0.0
    %1898 = vmatprep.subr.mxu0 0.0
    %1899 = vmatpush1.msra.mxu0 0.0
    %1900 = vmatprep.subr.mxu0 0.0
    %1901 = vmatpush1.msra.mxu0 0.0
    %1902 = vmatprep.subr.mxu0 0.0
    %1903 = vmatpush1.msra.mxu0 0.0
    %1904 = vmatprep.subr.mxu0 0.0
    %1905 = vmatpush1.msra.mxu0 0.0
    %1906 = vmatprep.subr.mxu0 0.0
    %1907 = vmatpush1.msra.mxu0 0.0
    %1908 = vmatprep.subr.mxu0 0.0
    %1909 = vmatpush1.msra.mxu0 0.0
    %1910 = vmatprep.subr.mxu0 0.0
    %1911 = vmatpush1.msra.mxu0 0.0
    %1912 = vmatprep.subr.mxu0 0.0
    %1913 = vmatpush1.msra.mxu0 0.0
    %1914 = vmatprep.subr.mxu0 0.0
    %1915 = vmatpush1.msra.mxu0 0.0
    %1916 = vmatprep.subr.mxu0 0.0
    %1917 = vmatpush1.msra.mxu0 0.0
    %1918 = vmatprep.subr.mxu0 0.0
    %1919 = vmatpush1.msra.mxu0 0.0
    %1920 = vmatprep.subr.mxu0 0.0
    %1921 = vmatpush1.msra.mxu0 0.0
    %1922 = vmatprep.mubr.f32.mxu0 0.0
    %1923 = vmatmul.mubr.f32.gmra.mrb[0].mxu0 %v1856
    %v1924 = vpop.f32.mrb[0].mxu0
    %v1925 = vadd.f32 %v896, %v1924
    %v1926 = vpop.f32.mrb[0].mxu0
    %1927 = vdwg.mxu0
    %v1929 = vsel %vm905, %v839, 0
    %1931 = vmatprep.subr.mxu0 0.0
    %1932 = vmatpush1.msra.mxu0 %v545
    %1933 = vmatprep.subr.mxu0 0.0
    %1934 = vmatpush1.msra.mxu0 %v546
    %1935 = vmatprep.subr.mxu0 0.0
    %1936 = vmatpush1.msra.mxu0 %v547
    %1937 = vmatprep.subr.mxu0 0.0
    %1938 = vmatpush1.msra.mxu0 %v548
    %1939 = vmatprep.subr.mxu0 0.0
    %1940 = vmatpush1.msra.mxu0 0.0
    %1941 = vmatprep.subr.mxu0 0.0
    %1942 = vmatpush1.msra.mxu0 0.0
    %1943 = vmatprep.subr.mxu0 0.0
    %1944 = vmatpush1.msra.mxu0 0.0
    %1945 = vmatprep.subr.mxu0 0.0
    %1946 = vmatpush1.msra.mxu0 0.0
    %1947 = vmatprep.subr.mxu0 0.0
    %1948 = vmatpush1.msra.mxu0 0.0
    %1949 = vmatprep.subr.mxu0 0.0
    %1950 = vmatpush1.msra.mxu0 0.0
    %1951 = vmatprep.subr.mxu0 0.0
    %1952 = vmatpush1.msra.mxu0 0.0
    %1953 = vmatprep.subr.mxu0 0.0
    %1954 = vmatpush1.msra.mxu0 0.0
    %1955 = vmatprep.subr.mxu0 0.0
    %1956 = vmatpush1.msra.mxu0 0.0
    %1957 = vmatprep.subr.mxu0 0.0
    %1958 = vmatpush1.msra.mxu0 0.0
    %1959 = vmatprep.subr.mxu0 0.0
    %1960 = vmatpush1.msra.mxu0 0.0
    %1961 = vmatprep.subr.mxu0 0.0
    %1962 = vmatpush1.msra.mxu0 0.0
    %1963 = vmatprep.subr.mxu0 0.0
    %1964 = vmatpush1.msra.mxu0 0.0
    %1965 = vmatprep.subr.mxu0 0.0
    %1966 = vmatpush1.msra.mxu0 0.0
    %1967 = vmatprep.subr.mxu0 0.0
    %1968 = vmatpush1.msra.mxu0 0.0
    %1969 = vmatprep.subr.mxu0 0.0
    %1970 = vmatpush1.msra.mxu0 0.0
    %1971 = vmatprep.subr.mxu0 0.0
    %1972 = vmatpush1.msra.mxu0 0.0
    %1973 = vmatprep.subr.mxu0 0.0
    %1974 = vmatpush1.msra.mxu0 0.0
    %1975 = vmatprep.subr.mxu0 0.0
    %1976 = vmatpush1.msra.mxu0 0.0
    %1977 = vmatprep.subr.mxu0 0.0
    %1978 = vmatpush1.msra.mxu0 0.0
    %1979 = vmatprep.subr.mxu0 0.0
    %1980 = vmatpush1.msra.mxu0 0.0
    %1981 = vmatprep.subr.mxu0 0.0
    %1982 = vmatpush1.msra.mxu0 0.0
    %1983 = vmatprep.subr.mxu0 0.0
    %1984 = vmatpush1.msra.mxu0 0.0
    %1985 = vmatprep.subr.mxu0 0.0
    %1986 = vmatpush1.msra.mxu0 0.0
    %1987 = vmatprep.subr.mxu0 0.0
    %1988 = vmatpush1.msra.mxu0 0.0
    %1989 = vmatprep.subr.mxu0 0.0
    %1990 = vmatpush1.msra.mxu0 0.0
    %1991 = vmatprep.subr.mxu0 0.0
    %1992 = vmatpush1.msra.mxu0 0.0
    %1993 = vmatprep.subr.mxu0 0.0
    %1994 = vmatpush1.msra.mxu0 0.0
    %1995 = vmatprep.mubr.f32.mxu0 0.0
    %1996 = vmatmul.mubr.f32.gmra.mrb[0].mxu0 %v1929
    %v1997 = vpop.f32.mrb[0].mxu0
    %v1998 = vadd.f32 %v900, %v1997
    %v1999 = vpop.f32.mrb[0].mxu0
    %2000 = vdwg.mxu0
    %v2002 = vsel %vm905, %v840, 0
    %2004 = vmatprep.subr.mxu0 0.0
    %2005 = vmatpush1.msra.mxu0 %v556
    %2006 = vmatprep.subr.mxu0 0.0
    %2007 = vmatpush1.msra.mxu0 %v557
    %2008 = vmatprep.subr.mxu0 0.0
    %2009 = vmatpush1.msra.mxu0 %v558
    %2010 = vmatprep.subr.mxu0 0.0
    %2011 = vmatpush1.msra.mxu0 %v559
    %2012 = vmatprep.subr.mxu0 0.0
    %2013 = vmatpush1.msra.mxu0 0.0
    %2014 = vmatprep.subr.mxu0 0.0
    %2015 = vmatpush1.msra.mxu0 0.0
    %2016 = vmatprep.subr.mxu0 0.0
    %2017 = vmatpush1.msra.mxu0 0.0
    %2018 = vmatprep.subr.mxu0 0.0
    %2019 = vmatpush1.msra.mxu0 0.0
    %2020 = vmatprep.subr.mxu0 0.0
    %2021 = vmatpush1.msra.mxu0 0.0
    %2022 = vmatprep.subr.mxu0 0.0
    %2023 = vmatpush1.msra.mxu0 0.0
    %2024 = vmatprep.subr.mxu0 0.0
    %2025 = vmatpush1.msra.mxu0 0.0
    %2026 = vmatprep.subr.mxu0 0.0
    %2027 = vmatpush1.msra.mxu0 0.0
    %2028 = vmatprep.subr.mxu0 0.0
    %2029 = vmatpush1.msra.mxu0 0.0
    %2030 = vmatprep.subr.mxu0 0.0
    %2031 = vmatpush1.msra.mxu0 0.0
    %2032 = vmatprep.subr.mxu0 0.0
    %2033 = vmatpush1.msra.mxu0 0.0
    %2034 = vmatprep.subr.mxu0 0.0
    %2035 = vmatpush1.msra.mxu0 0.0
    %2036 = vmatprep.subr.mxu0 0.0
    %2037 = vmatpush1.msra.mxu0 0.0
    %2038 = vmatprep.subr.mxu0 0.0
    %2039 = vmatpush1.msra.mxu0 0.0
    %2040 = vmatprep.subr.mxu0 0.0
    %2041 = vmatpush1.msra.mxu0 0.0
    %2042 = vmatprep.subr.mxu0 0.0
    %2043 = vmatpush1.msra.mxu0 0.0
    %2044 = vmatprep.subr.mxu0 0.0
    %2045 = vmatpush1.msra.mxu0 0.0
    %2046 = vmatprep.subr.mxu0 0.0
    %2047 = vmatpush1.msra.mxu0 0.0
    %2048 = vmatprep.subr.mxu0 0.0
    %2049 = vmatpush1.msra.mxu0 0.0
    %2050 = vmatprep.subr.mxu0 0.0
    %2051 = vmatpush1.msra.mxu0 0.0
    %2052 = vmatprep.subr.mxu0 0.0
    %2053 = vmatpush1.msra.mxu0 0.0
    %2054 = vmatprep.subr.mxu0 0.0
    %2055 = vmatpush1.msra.mxu0 0.0
    %2056 = vmatprep.subr.mxu0 0.0
    %2057 = vmatpush1.msra.mxu0 0.0
    %2058 = vmatprep.subr.mxu0 0.0
    %2059 = vmatpush1.msra.mxu0 0.0
    %2060 = vmatprep.subr.mxu0 0.0
    %2061 = vmatpush1.msra.mxu0 0.0
    %2062 = vmatprep.subr.mxu0 0.0
    %2063 = vmatpush1.msra.mxu0 0.0
    %2064 = vmatprep.subr.mxu0 0.0
    %2065 = vmatpush1.msra.mxu0 0.0
    %2066 = vmatprep.subr.mxu0 0.0
    %2067 = vmatpush1.msra.mxu0 0.0
    %2068 = vmatprep.mubr.f32.mxu0 0.0
    %2069 = vmatmul.mubr.f32.gmra.mrb[0].mxu0 %v2002
    %v2070 = vpop.f32.mrb[0].mxu0
    %v2071 = vadd.f32 %v904, %v2070
    %v2072 = vpop.f32.mrb[0].mxu0
    %2073 = vdwg.mxu0
    %v2074 = vmax.f32 %v976, 0.0
    %v2075 = vmax.f32 %v1049, 0.0
    %v2076 = vmax.f32 %v1122, 0.0
    %v2077 = vmax.f32 %v1195, 0.0
    %v2078 = vmax.f32 %v1268, 0.0
    %v2079 = vmax.f32 %v1341, 0.0
    %v2080 = vmax.f32 %v1414, 0.0
    %v2081 = vmax.f32 %v1487, 0.0
    %v2082 = vmax.f32 %v1560, 0.0
    %v2083 = vmax.f32 %v1633, 0.0
    %v2084 = vmax.f32 %v1706, 0.0
    %v2085 = vmax.f32 %v1779, 0.0
    %v2086 = vmax.f32 %v1852, 0.0
    %v2087 = vmax.f32 %v1925, 0.0
    %v2088 = vmax.f32 %v1998, 0.0
    %v2089 = vmax.f32 %v2071, 0.0
    %v2090 = vlaneseq
    %v2091 = vshrl.u32 %v2090, 7
    %v2092 = vsub.s32 0, %v2091
    %v2093 = vrot.slane %v400, %v2092
    %v2094 = vlaneseq
    %v2095 = vshrl.u32 %v2094, 7
    %v2096 = vsub.s32 0, %v2095
    %v2097 = vrot.slane %v411, %v2096
    %v2098 = vlaneseq
    %v2099 = vshrl.u32 %v2098, 7
    %v2100 = vsub.s32 0, %v2099
    %v2101 = vrot.slane %v422, %v2100
    %v2102 = vlaneseq
    %v2103 = vshrl.u32 %v2102, 7
    %v2104 = vsub.s32 0, %v2103
    %v2105 = vrot.slane %v433, %v2104
    %v2106 = vlaneseq
    %v2107 = vshrl.u32 %v2106, 7
    %v2108 = vsub.s32 0, %v2107
    %v2109 = vrot.slane %v444, %v2108
    %v2110 = vlaneseq
    %v2111 = vshrl.u32 %v2110, 7
    %v2112 = vsub.s32 0, %v2111
    %v2113 = vrot.slane %v455, %v2112
    %v2114 = vlaneseq
    %v2115 = vshrl.u32 %v2114, 7
    %v2116 = vsub.s32 0, %v2115
    %v2117 = vrot.slane %v466, %v2116
    %v2118 = vlaneseq
    %v2119 = vshrl.u32 %v2118, 7
    %v2120 = vsub.s32 0, %v2119
    %v2121 = vrot.slane %v477, %v2120
    %v2122 = vlaneseq
    %v2123 = vshrl.u32 %v2122, 7
    %v2124 = vsub.s32 0, %v2123
    %v2125 = vrot.slane %v488, %v2124
    %v2126 = vlaneseq
    %v2127 = vshrl.u32 %v2126, 7
    %v2128 = vsub.s32 0, %v2127
    %v2129 = vrot.slane %v499, %v2128
    %v2130 = vlaneseq
    %v2131 = vshrl.u32 %v2130, 7
    %v2132 = vsub.s32 0, %v2131
    %v2133 = vrot.slane %v510, %v2132
    %v2134 = vlaneseq
    %v2135 = vshrl.u32 %v2134, 7
    %v2136 = vsub.s32 0, %v2135
    %v2137 = vrot.slane %v521, %v2136
    %v2138 = vlaneseq
    %v2139 = vshrl.u32 %v2138, 7
    %v2140 = vsub.s32 0, %v2139
    %v2141 = vrot.slane %v532, %v2140
    %v2142 = vlaneseq
    %v2143 = vshrl.u32 %v2142, 7
    %v2144 = vsub.s32 0, %v2143
    %v2145 = vrot.slane %v543, %v2144
    %v2146 = vlaneseq
    %v2147 = vshrl.u32 %v2146, 7
    %v2148 = vsub.s32 0, %v2147
    %v2149 = vrot.slane %v554, %v2148
    %v2150 = vlaneseq
    %v2151 = vshrl.u32 %v2150, 7
    %v2152 = vsub.s32 0, %v2151
    %v2153 = vrot.slane %v565, %v2152
    %v2155 = vsel %vm905, %v2074, 0
    %2157 = vmatprep.subr.mxu0 0.0
    %2158 = vmatpush1.msra.mxu0 %v396
    %2159 = vmatprep.subr.mxu0 0.0
    %2160 = vmatpush1.msra.mxu0 %v397
    %2161 = vmatprep.subr.mxu0 0.0
    %2162 = vmatpush1.msra.mxu0 %v398
    %2163 = vmatprep.subr.mxu0 0.0
    %2164 = vmatpush1.msra.mxu0 %v399
    %2165 = vmatprep.subr.mxu0 0.0
    %2166 = vmatpush1.msra.mxu0 0.0
    %2167 = vmatprep.subr.mxu0 0.0
    %2168 = vmatpush1.msra.mxu0 0.0
    %2169 = vmatprep.subr.mxu0 0.0
    %2170 = vmatpush1.msra.mxu0 0.0
    %2171 = vmatprep.subr.mxu0 0.0
    %2172 = vmatpush1.msra.mxu0 0.0
    %2173 = vmatprep.subr.mxu0 0.0
    %2174 = vmatpush1.msra.mxu0 0.0
    %2175 = vmatprep.subr.mxu0 0.0
    %2176 = vmatpush1.msra.mxu0 0.0
    %2177 = vmatprep.subr.mxu0 0.0
    %2178 = vmatpush1.msra.mxu0 0.0
    %2179 = vmatprep.subr.mxu0 0.0
    %2180 = vmatpush1.msra.mxu0 0.0
    %2181 = vmatprep.subr.mxu0 0.0
    %2182 = vmatpush1.msra.mxu0 0.0
    %2183 = vmatprep.subr.mxu0 0.0
    %2184 = vmatpush1.msra.mxu0 0.0
    %2185 = vmatprep.subr.mxu0 0.0
    %2186 = vmatpush1.msra.mxu0 0.0
    %2187 = vmatprep.subr.mxu0 0.0
    %2188 = vmatpush1.msra.mxu0 0.0
    %2189 = vmatprep.subr.mxu0 0.0
    %2190 = vmatpush1.msra.mxu0 0.0
    %2191 = vmatprep.subr.mxu0 0.0
    %2192 = vmatpush1.msra.mxu0 0.0
    %2193 = vmatprep.subr.mxu0 0.0
    %2194 = vmatpush1.msra.mxu0 0.0
    %2195 = vmatprep.subr.mxu0 0.0
    %2196 = vmatpush1.msra.mxu0 0.0
    %2197 = vmatprep.subr.mxu0 0.0
    %2198 = vmatpush1.msra.mxu0 0.0
    %2199 = vmatprep.subr.mxu0 0.0
    %2200 = vmatpush1.msra.mxu0 0.0
    %2201 = vmatprep.subr.mxu0 0.0
    %2202 = vmatpush1.msra.mxu0 0.0
    %2203 = vmatprep.subr.mxu0 0.0
    %2204 = vmatpush1.msra.mxu0 0.0
    %2205 = vmatprep.subr.mxu0 0.0
    %2206 = vmatpush1.msra.mxu0 0.0
    %2207 = vmatprep.subr.mxu0 0.0
    %2208 = vmatpush1.msra.mxu0 0.0
    %2209 = vmatprep.subr.mxu0 0.0
    %2210 = vmatpush1.msra.mxu0 0.0
    %2211 = vmatprep.subr.mxu0 0.0
    %2212 = vmatpush1.msra.mxu0 0.0
    %2213 = vmatprep.subr.mxu0 0.0
    %2214 = vmatpush1.msra.mxu0 0.0
    %2215 = vmatprep.subr.mxu0 0.0
    %2216 = vmatpush1.msra.mxu0 0.0
    %2217 = vmatprep.subr.mxu0 0.0
    %2218 = vmatpush1.msra.mxu0 0.0
    %2219 = vmatprep.subr.mxu0 0.0
    %2220 = vmatpush1.msra.mxu0 0.0
    %2221 = vmatprep.mubr.f32.mxu0 0.0
    %2222 = vmatmul.mubr.f32.gmra.mrb[0].mxu0 %v2155
    %v2223 = vpop.f32.mrb[0].mxu0
    %v2224 = vadd.f32 %v2093, %v2223
    %v2225 = vpop.f32.mrb[0].mxu0
    %2226 = vdwg.mxu0
    %v2228 = vsel %vm905, %v2075, 0
    %2230 = vmatprep.subr.mxu0 0.0
    %2231 = vmatpush1.msra.mxu0 %v407
    %2232 = vmatprep.subr.mxu0 0.0
    %2233 = vmatpush1.msra.mxu0 %v408
    %2234 = vmatprep.subr.mxu0 0.0
    %2235 = vmatpush1.msra.mxu0 %v409
    %2236 = vmatprep.subr.mxu0 0.0
    %2237 = vmatpush1.msra.mxu0 %v410
    %2238 = vmatprep.subr.mxu0 0.0
    %2239 = vmatpush1.msra.mxu0 0.0
    %2240 = vmatprep.subr.mxu0 0.0
    %2241 = vmatpush1.msra.mxu0 0.0
    %2242 = vmatprep.subr.mxu0 0.0
    %2243 = vmatpush1.msra.mxu0 0.0
    %2244 = vmatprep.subr.mxu0 0.0
    %2245 = vmatpush1.msra.mxu0 0.0
    %2246 = vmatprep.subr.mxu0 0.0
    %2247 = vmatpush1.msra.mxu0 0.0
    %2248 = vmatprep.subr.mxu0 0.0
    %2249 = vmatpush1.msra.mxu0 0.0
    %2250 = vmatprep.subr.mxu0 0.0
    %2251 = vmatpush1.msra.mxu0 0.0
    %2252 = vmatprep.subr.mxu0 0.0
    %2253 = vmatpush1.msra.mxu0 0.0
    %2254 = vmatprep.subr.mxu0 0.0
    %2255 = vmatpush1.msra.mxu0 0.0
    %2256 = vmatprep.subr.mxu0 0.0
    %2257 = vmatpush1.msra.mxu0 0.0
    %2258 = vmatprep.subr.mxu0 0.0
    %2259 = vmatpush1.msra.mxu0 0.0
    %2260 = vmatprep.subr.mxu0 0.0
    %2261 = vmatpush1.msra.mxu0 0.0
    %2262 = vmatprep.subr.mxu0 0.0
    %2263 = vmatpush1.msra.mxu0 0.0
    %2264 = vmatprep.subr.mxu0 0.0
    %2265 = vmatpush1.msra.mxu0 0.0
    %2266 = vmatprep.subr.mxu0 0.0
    %2267 = vmatpush1.msra.mxu0 0.0
    %2268 = vmatprep.subr.mxu0 0.0
    %2269 = vmatpush1.msra.mxu0 0.0
    %2270 = vmatprep.subr.mxu0 0.0
    %2271 = vmatpush1.msra.mxu0 0.0
    %2272 = vmatprep.subr.mxu0 0.0
    %2273 = vmatpush1.msra.mxu0 0.0
    %2274 = vmatprep.subr.mxu0 0.0
    %2275 = vmatpush1.msra.mxu0 0.0
    %2276 = vmatprep.subr.mxu0 0.0
    %2277 = vmatpush1.msra.mxu0 0.0
    %2278 = vmatprep.subr.mxu0 0.0
    %2279 = vmatpush1.msra.mxu0 0.0
    %2280 = vmatprep.subr.mxu0 0.0
    %2281 = vmatpush1.msra.mxu0 0.0
    %2282 = vmatprep.subr.mxu0 0.0
    %2283 = vmatpush1.msra.mxu0 0.0
    %2284 = vmatprep.subr.mxu0 0.0
    %2285 = vmatpush1.msra.mxu0 0.0
    %2286 = vmatprep.subr.mxu0 0.0
    %2287 = vmatpush1.msra.mxu0 0.0
    %2288 = vmatprep.subr.mxu0 0.0
    %2289 = vmatpush1.msra.mxu0 0.0
    %2290 = vmatprep.subr.mxu0 0.0
    %2291 = vmatpush1.msra.mxu0 0.0
    %2292 = vmatprep.subr.mxu0 0.0
    %2293 = vmatpush1.msra.mxu0 0.0
    %2294 = vmatprep.mubr.f32.mxu0 0.0
    %2295 = vmatmul.mubr.f32.gmra.mrb[0].mxu0 %v2228
    %v2296 = vpop.f32.mrb[0].mxu0
    %v2297 = vadd.f32 %v2097, %v2296
    %v2298 = vpop.f32.mrb[0].mxu0
    %2299 = vdwg.mxu0
    %v2301 = vsel %vm905, %v2076, 0
    %2303 = vmatprep.subr.mxu0 0.0
    %2304 = vmatpush1.msra.mxu0 %v418
    %2305 = vmatprep.subr.mxu0 0.0
    %2306 = vmatpush1.msra.mxu0 %v419
    %2307 = vmatprep.subr.mxu0 0.0
    %2308 = vmatpush1.msra.mxu0 %v420
    %2309 = vmatprep.subr.mxu0 0.0
    %2310 = vmatpush1.msra.mxu0 %v421
    %2311 = vmatprep.subr.mxu0 0.0
    %2312 = vmatpush1.msra.mxu0 0.0
    %2313 = vmatprep.subr.mxu0 0.0
    %2314 = vmatpush1.msra.mxu0 0.0
    %2315 = vmatprep.subr.mxu0 0.0
    %2316 = vmatpush1.msra.mxu0 0.0
    %2317 = vmatprep.subr.mxu0 0.0
    %2318 = vmatpush1.msra.mxu0 0.0
    %2319 = vmatprep.subr.mxu0 0.0
    %2320 = vmatpush1.msra.mxu0 0.0
    %2321 = vmatprep.subr.mxu0 0.0
    %2322 = vmatpush1.msra.mxu0 0.0
    %2323 = vmatprep.subr.mxu0 0.0
    %2324 = vmatpush1.msra.mxu0 0.0
    %2325 = vmatprep.subr.mxu0 0.0
    %2326 = vmatpush1.msra.mxu0 0.0
    %2327 = vmatprep.subr.mxu0 0.0
    %2328 = vmatpush1.msra.mxu0 0.0
    %2329 = vmatprep.subr.mxu0 0.0
    %2330 = vmatpush1.msra.mxu0 0.0
    %2331 = vmatprep.subr.mxu0 0.0
    %2332 = vmatpush1.msra.mxu0 0.0
    %2333 = vmatprep.subr.mxu0 0.0
    %2334 = vmatpush1.msra.mxu0 0.0
    %2335 = vmatprep.subr.mxu0 0.0
    %2336 = vmatpush1.msra.mxu0 0.0
    %2337 = vmatprep.subr.mxu0 0.0
    %2338 = vmatpush1.msra.mxu0 0.0
    %2339 = vmatprep.subr.mxu0 0.0
    %2340 = vmatpush1.msra.mxu0 0.0
    %2341 = vmatprep.subr.mxu0 0.0
    %2342 = vmatpush1.msra.mxu0 0.0
    %2343 = vmatprep.subr.mxu0 0.0
    %2344 = vmatpush1.msra.mxu0 0.0
    %2345 = vmatprep.subr.mxu0 0.0
    %2346 = vmatpush1.msra.mxu0 0.0
    %2347 = vmatprep.subr.mxu0 0.0
    %2348 = vmatpush1.msra.mxu0 0.0
    %2349 = vmatprep.subr.mxu0 0.0
    %2350 = vmatpush1.msra.mxu0 0.0
    %2351 = vmatprep.subr.mxu0 0.0
    %2352 = vmatpush1.msra.mxu0 0.0
    %2353 = vmatprep.subr.mxu0 0.0
    %2354 = vmatpush1.msra.mxu0 0.0
    %2355 = vmatprep.subr.mxu0 0.0
    %2356 = vmatpush1.msra.mxu0 0.0
    %2357 = vmatprep.subr.mxu0 0.0
    %2358 = vmatpush1.msra.mxu0 0.0
    %2359 = vmatprep.subr.mxu0 0.0
    %2360 = vmatpush1.msra.mxu0 0.0
    %2361 = vmatprep.subr.mxu0 0.0
    %2362 = vmatpush1.msra.mxu0 0.0
    %2363 = vmatprep.subr.mxu0 0.0
    %2364 = vmatpush1.msra.mxu0 0.0
    %2365 = vmatprep.subr.mxu0 0.0
    %2366 = vmatpush1.msra.mxu0 0.0
    %2367 = vmatprep.mubr.f32.mxu0 0.0
    %2368 = vmatmul.mubr.f32.gmra.mrb[0].mxu0 %v2301
    %v2369 = vpop.f32.mrb[0].mxu0
    %v2370 = vadd.f32 %v2101, %v2369
    %v2371 = vpop.f32.mrb[0].mxu0
    %2372 = vdwg.mxu0
    %v2374 = vsel %vm905, %v2077, 0
    %2376 = vmatprep.subr.mxu0 0.0
    %2377 = vmatpush1.msra.mxu0 %v429
    %2378 = vmatprep.subr.mxu0 0.0
    %2379 = vmatpush1.msra.mxu0 %v430
    %2380 = vmatprep.subr.mxu0 0.0
    %2381 = vmatpush1.msra.mxu0 %v431
    %2382 = vmatprep.subr.mxu0 0.0
    %2383 = vmatpush1.msra.mxu0 %v432
    %2384 = vmatprep.subr.mxu0 0.0
    %2385 = vmatpush1.msra.mxu0 0.0
    %2386 = vmatprep.subr.mxu0 0.0
    %2387 = vmatpush1.msra.mxu0 0.0
    %2388 = vmatprep.subr.mxu0 0.0
    %2389 = vmatpush1.msra.mxu0 0.0
    %2390 = vmatprep.subr.mxu0 0.0
    %2391 = vmatpush1.msra.mxu0 0.0
    %2392 = vmatprep.subr.mxu0 0.0
    %2393 = vmatpush1.msra.mxu0 0.0
    %2394 = vmatprep.subr.mxu0 0.0
    %2395 = vmatpush1.msra.mxu0 0.0
    %2396 = vmatprep.subr.mxu0 0.0
    %2397 = vmatpush1.msra.mxu0 0.0
    %2398 = vmatprep.subr.mxu0 0.0
    %2399 = vmatpush1.msra.mxu0 0.0
    %2400 = vmatprep.subr.mxu0 0.0
    %2401 = vmatpush1.msra.mxu0 0.0
    %2402 = vmatprep.subr.mxu0 0.0
    %2403 = vmatpush1.msra.mxu0 0.0
    %2404 = vmatprep.subr.mxu0 0.0
    %2405 = vmatpush1.msra.mxu0 0.0
    %2406 = vmatprep.subr.mxu0 0.0
    %2407 = vmatpush1.msra.mxu0 0.0
    %2408 = vmatprep.subr.mxu0 0.0
    %2409 = vmatpush1.msra.mxu0 0.0
    %2410 = vmatprep.subr.mxu0 0.0
    %2411 = vmatpush1.msra.mxu0 0.0
    %2412 = vmatprep.subr.mxu0 0.0
    %2413 = vmatpush1.msra.mxu0 0.0
    %2414 = vmatprep.subr.mxu0 0.0
    %2415 = vmatpush1.msra.mxu0 0.0
    %2416 = vmatprep.subr.mxu0 0.0
    %2417 = vmatpush1.msra.mxu0 0.0
    %2418 = vmatprep.subr.mxu0 0.0
    %2419 = vmatpush1.msra.mxu0 0.0
    %2420 = vmatprep.subr.mxu0 0.0
    %2421 = vmatpush1.msra.mxu0 0.0
    %2422 = vmatprep.subr.mxu0 0.0
    %2423 = vmatpush1.msra.mxu0 0.0
    %2424 = vmatprep.subr.mxu0 0.0
    %2425 = vmatpush1.msra.mxu0 0.0
    %2426 = vmatprep.subr.mxu0 0.0
    %2427 = vmatpush1.msra.mxu0 0.0
    %2428 = vmatprep.subr.mxu0 0.0
    %2429 = vmatpush1.msra.mxu0 0.0
    %2430 = vmatprep.subr.mxu0 0.0
    %2431 = vmatpush1.msra.mxu0 0.0
    %2432 = vmatprep.subr.mxu0 0.0
    %2433 = vmatpush1.msra.mxu0 0.0
    %2434 = vmatprep.subr.mxu0 0.0
    %2435 = vmatpush1.msra.mxu0 0.0
    %2436 = vmatprep.subr.mxu0 0.0
    %2437 = vmatpush1.msra.mxu0 0.0
    %2438 = vmatprep.subr.mxu0 0.0
    %2439 = vmatpush1.msra.mxu0 0.0
    %2440 = vmatprep.mubr.f32.mxu0 0.0
    %2441 = vmatmul.mubr.f32.gmra.mrb[0].mxu0 %v2374
    %v2442 = vpop.f32.mrb[0].mxu0
    %v2443 = vadd.f32 %v2105, %v2442
    %v2444 = vpop.f32.mrb[0].mxu0
    %2445 = vdwg.mxu0
    %v2447 = vsel %vm905, %v2078, 0
    %2449 = vmatprep.subr.mxu0 0.0
    %2450 = vmatpush1.msra.mxu0 %v440
    %2451 = vmatprep.subr.mxu0 0.0
    %2452 = vmatpush1.msra.mxu0 %v441
    %2453 = vmatprep.subr.mxu0 0.0
    %2454 = vmatpush1.msra.mxu0 %v442
    %2455 = vmatprep.subr.mxu0 0.0
    %2456 = vmatpush1.msra.mxu0 %v443
    %2457 = vmatprep.subr.mxu0 0.0
    %2458 = vmatpush1.msra.mxu0 0.0
    %2459 = vmatprep.subr.mxu0 0.0
    %2460 = vmatpush1.msra.mxu0 0.0
    %2461 = vmatprep.subr.mxu0 0.0
    %2462 = vmatpush1.msra.mxu0 0.0
    %2463 = vmatprep.subr.mxu0 0.0
    %2464 = vmatpush1.msra.mxu0 0.0
    %2465 = vmatprep.subr.mxu0 0.0
    %2466 = vmatpush1.msra.mxu0 0.0
    %2467 = vmatprep.subr.mxu0 0.0
    %2468 = vmatpush1.msra.mxu0 0.0
    %2469 = vmatprep.subr.mxu0 0.0
    %2470 = vmatpush1.msra.mxu0 0.0
    %2471 = vmatprep.subr.mxu0 0.0
    %2472 = vmatpush1.msra.mxu0 0.0
    %2473 = vmatprep.subr.mxu0 0.0
    %2474 = vmatpush1.msra.mxu0 0.0
    %2475 = vmatprep.subr.mxu0 0.0
    %2476 = vmatpush1.msra.mxu0 0.0
    %2477 = vmatprep.subr.mxu0 0.0
    %2478 = vmatpush1.msra.mxu0 0.0
    %2479 = vmatprep.subr.mxu0 0.0
    %2480 = vmatpush1.msra.mxu0 0.0
    %2481 = vmatprep.subr.mxu0 0.0
    %2482 = vmatpush1.msra.mxu0 0.0
    %2483 = vmatprep.subr.mxu0 0.0
    %2484 = vmatpush1.msra.mxu0 0.0
    %2485 = vmatprep.subr.mxu0 0.0
    %2486 = vmatpush1.msra.mxu0 0.0
    %2487 = vmatprep.subr.mxu0 0.0
    %2488 = vmatpush1.msra.mxu0 0.0
    %2489 = vmatprep.subr.mxu0 0.0
    %2490 = vmatpush1.msra.mxu0 0.0
    %2491 = vmatprep.subr.mxu0 0.0
    %2492 = vmatpush1.msra.mxu0 0.0
    %2493 = vmatprep.subr.mxu0 0.0
    %2494 = vmatpush1.msra.mxu0 0.0
    %2495 = vmatprep.subr.mxu0 0.0
    %2496 = vmatpush1.msra.mxu0 0.0
    %2497 = vmatprep.subr.mxu0 0.0
    %2498 = vmatpush1.msra.mxu0 0.0
    %2499 = vmatprep.subr.mxu0 0.0
    %2500 = vmatpush1.msra.mxu0 0.0
    %2501 = vmatprep.subr.mxu0 0.0
    %2502 = vmatpush1.msra.mxu0 0.0
    %2503 = vmatprep.subr.mxu0 0.0
    %2504 = vmatpush1.msra.mxu0 0.0
    %2505 = vmatprep.subr.mxu0 0.0
    %2506 = vmatpush1.msra.mxu0 0.0
    %2507 = vmatprep.subr.mxu0 0.0
    %2508 = vmatpush1.msra.mxu0 0.0
    %2509 = vmatprep.subr.mxu0 0.0
    %2510 = vmatpush1.msra.mxu0 0.0
    %2511 = vmatprep.subr.mxu0 0.0
    %2512 = vmatpush1.msra.mxu0 0.0
    %2513 = vmatprep.mubr.f32.mxu0 0.0
    %2514 = vmatmul.mubr.f32.gmra.mrb[0].mxu0 %v2447
    %v2515 = vpop.f32.mrb[0].mxu0
    %v2516 = vadd.f32 %v2109, %v2515
    %v2517 = vpop.f32.mrb[0].mxu0
    %2518 = vdwg.mxu0
    %v2520 = vsel %vm905, %v2079, 0
    %2522 = vmatprep.subr.mxu0 0.0
    %2523 = vmatpush1.msra.mxu0 %v451
    %2524 = vmatprep.subr.mxu0 0.0
    %2525 = vmatpush1.msra.mxu0 %v452
    %2526 = vmatprep.subr.mxu0 0.0
    %2527 = vmatpush1.msra.mxu0 %v453
    %2528 = vmatprep.subr.mxu0 0.0
    %2529 = vmatpush1.msra.mxu0 %v454
    %2530 = vmatprep.subr.mxu0 0.0
    %2531 = vmatpush1.msra.mxu0 0.0
    %2532 = vmatprep.subr.mxu0 0.0
    %2533 = vmatpush1.msra.mxu0 0.0
    %2534 = vmatprep.subr.mxu0 0.0
    %2535 = vmatpush1.msra.mxu0 0.0
    %2536 = vmatprep.subr.mxu0 0.0
    %2537 = vmatpush1.msra.mxu0 0.0
    %2538 = vmatprep.subr.mxu0 0.0
    %2539 = vmatpush1.msra.mxu0 0.0
    %2540 = vmatprep.subr.mxu0 0.0
    %2541 = vmatpush1.msra.mxu0 0.0
    %2542 = vmatprep.subr.mxu0 0.0
    %2543 = vmatpush1.msra.mxu0 0.0
    %2544 = vmatprep.subr.mxu0 0.0
    %2545 = vmatpush1.msra.mxu0 0.0
    %2546 = vmatprep.subr.mxu0 0.0
    %2547 = vmatpush1.msra.mxu0 0.0
    %2548 = vmatprep.subr.mxu0 0.0
    %2549 = vmatpush1.msra.mxu0 0.0
    %2550 = vmatprep.subr.mxu0 0.0
    %2551 = vmatpush1.msra.mxu0 0.0
    %2552 = vmatprep.subr.mxu0 0.0
    %2553 = vmatpush1.msra.mxu0 0.0
    %2554 = vmatprep.subr.mxu0 0.0
    %2555 = vmatpush1.msra.mxu0 0.0
    %2556 = vmatprep.subr.mxu0 0.0
    %2557 = vmatpush1.msra.mxu0 0.0
    %2558 = vmatprep.subr.mxu0 0.0
    %2559 = vmatpush1.msra.mxu0 0.0
    %2560 = vmatprep.subr.mxu0 0.0
    %2561 = vmatpush1.msra.mxu0 0.0
    %2562 = vmatprep.subr.mxu0 0.0
    %2563 = vmatpush1.msra.mxu0 0.0
    %2564 = vmatprep.subr.mxu0 0.0
    %2565 = vmatpush1.msra.mxu0 0.0
    %2566 = vmatprep.subr.mxu0 0.0
    %2567 = vmatpush1.msra.mxu0 0.0
    %2568 = vmatprep.subr.mxu0 0.0
    %2569 = vmatpush1.msra.mxu0 0.0
    %2570 = vmatprep.subr.mxu0 0.0
    %2571 = vmatpush1.msra.mxu0 0.0
    %2572 = vmatprep.subr.mxu0 0.0
    %2573 = vmatpush1.msra.mxu0 0.0
    %2574 = vmatprep.subr.mxu0 0.0
    %2575 = vmatpush1.msra.mxu0 0.0
    %2576 = vmatprep.subr.mxu0 0.0
    %2577 = vmatpush1.msra.mxu0 0.0
    %2578 = vmatprep.subr.mxu0 0.0
    %2579 = vmatpush1.msra.mxu0 0.0
    %2580 = vmatprep.subr.mxu0 0.0
    %2581 = vmatpush1.msra.mxu0 0.0
    %2582 = vmatprep.subr.mxu0 0.0
    %2583 = vmatpush1.msra.mxu0 0.0
    %2584 = vmatprep.subr.mxu0 0.0
    %2585 = vmatpush1.msra.mxu0 0.0
    %2586 = vmatprep.mubr.f32.mxu0 0.0
    %2587 = vmatmul.mubr.f32.gmra.mrb[0].mxu0 %v2520
    %v2588 = vpop.f32.mrb[0].mxu0
    %v2589 = vadd.f32 %v2113, %v2588
    %v2590 = vpop.f32.mrb[0].mxu0
    %2591 = vdwg.mxu0
    %v2593 = vsel %vm905, %v2080, 0
    %2595 = vmatprep.subr.mxu0 0.0
    %2596 = vmatpush1.msra.mxu0 %v462
    %2597 = vmatprep.subr.mxu0 0.0
    %2598 = vmatpush1.msra.mxu0 %v463
    %2599 = vmatprep.subr.mxu0 0.0
    %2600 = vmatpush1.msra.mxu0 %v464
    %2601 = vmatprep.subr.mxu0 0.0
    %2602 = vmatpush1.msra.mxu0 %v465
    %2603 = vmatprep.subr.mxu0 0.0
    %2604 = vmatpush1.msra.mxu0 0.0
    %2605 = vmatprep.subr.mxu0 0.0
    %2606 = vmatpush1.msra.mxu0 0.0
    %2607 = vmatprep.subr.mxu0 0.0
    %2608 = vmatpush1.msra.mxu0 0.0
    %2609 = vmatprep.subr.mxu0 0.0
    %2610 = vmatpush1.msra.mxu0 0.0
    %2611 = vmatprep.subr.mxu0 0.0
    %2612 = vmatpush1.msra.mxu0 0.0
    %2613 = vmatprep.subr.mxu0 0.0
    %2614 = vmatpush1.msra.mxu0 0.0
    %2615 = vmatprep.subr.mxu0 0.0
    %2616 = vmatpush1.msra.mxu0 0.0
    %2617 = vmatprep.subr.mxu0 0.0
    %2618 = vmatpush1.msra.mxu0 0.0
    %2619 = vmatprep.subr.mxu0 0.0
    %2620 = vmatpush1.msra.mxu0 0.0
    %2621 = vmatprep.subr.mxu0 0.0
    %2622 = vmatpush1.msra.mxu0 0.0
    %2623 = vmatprep.subr.mxu0 0.0
    %2624 = vmatpush1.msra.mxu0 0.0
    %2625 = vmatprep.subr.mxu0 0.0
    %2626 = vmatpush1.msra.mxu0 0.0
    %2627 = vmatprep.subr.mxu0 0.0
    %2628 = vmatpush1.msra.mxu0 0.0
    %2629 = vmatprep.subr.mxu0 0.0
    %2630 = vmatpush1.msra.mxu0 0.0
    %2631 = vmatprep.subr.mxu0 0.0
    %2632 = vmatpush1.msra.mxu0 0.0
    %2633 = vmatprep.subr.mxu0 0.0
    %2634 = vmatpush1.msra.mxu0 0.0
    %2635 = vmatprep.subr.mxu0 0.0
    %2636 = vmatpush1.msra.mxu0 0.0
    %2637 = vmatprep.subr.mxu0 0.0
    %2638 = vmatpush1.msra.mxu0 0.0
    %2639 = vmatprep.subr.mxu0 0.0
    %2640 = vmatpush1.msra.mxu0 0.0
    %2641 = vmatprep.subr.mxu0 0.0
    %2642 = vmatpush1.msra.mxu0 0.0
    %2643 = vmatprep.subr.mxu0 0.0
    %2644 = vmatpush1.msra.mxu0 0.0
    %2645 = vmatprep.subr.mxu0 0.0
    %2646 = vmatpush1.msra.mxu0 0.0
    %2647 = vmatprep.subr.mxu0 0.0
    %2648 = vmatpush1.msra.mxu0 0.0
    %2649 = vmatprep.subr.mxu0 0.0
    %2650 = vmatpush1.msra.mxu0 0.0
    %2651 = vmatprep.subr.mxu0 0.0
    %2652 = vmatpush1.msra.mxu0 0.0
    %2653 = vmatprep.subr.mxu0 0.0
    %2654 = vmatpush1.msra.mxu0 0.0
    %2655 = vmatprep.subr.mxu0 0.0
    %2656 = vmatpush1.msra.mxu0 0.0
    %2657 = vmatprep.subr.mxu0 0.0
    %2658 = vmatpush1.msra.mxu0 0.0
    %2659 = vmatprep.mubr.f32.mxu0 0.0
    %2660 = vmatmul.mubr.f32.gmra.mrb[0].mxu0 %v2593
    %v2661 = vpop.f32.mrb[0].mxu0
    %v2662 = vadd.f32 %v2117, %v2661
    %v2663 = vpop.f32.mrb[0].mxu0
    %2664 = vdwg.mxu0
    %v2666 = vsel %vm905, %v2081, 0
    %2668 = vmatprep.subr.mxu0 0.0
    %2669 = vmatpush1.msra.mxu0 %v473
    %2670 = vmatprep.subr.mxu0 0.0
    %2671 = vmatpush1.msra.mxu0 %v474
    %2672 = vmatprep.subr.mxu0 0.0
    %2673 = vmatpush1.msra.mxu0 %v475
    %2674 = vmatprep.subr.mxu0 0.0
    %2675 = vmatpush1.msra.mxu0 %v476
    %2676 = vmatprep.subr.mxu0 0.0
    %2677 = vmatpush1.msra.mxu0 0.0
    %2678 = vmatprep.subr.mxu0 0.0
    %2679 = vmatpush1.msra.mxu0 0.0
    %2680 = vmatprep.subr.mxu0 0.0
    %2681 = vmatpush1.msra.mxu0 0.0
    %2682 = vmatprep.subr.mxu0 0.0
    %2683 = vmatpush1.msra.mxu0 0.0
    %2684 = vmatprep.subr.mxu0 0.0
    %2685 = vmatpush1.msra.mxu0 0.0
    %2686 = vmatprep.subr.mxu0 0.0
    %2687 = vmatpush1.msra.mxu0 0.0
    %2688 = vmatprep.subr.mxu0 0.0
    %2689 = vmatpush1.msra.mxu0 0.0
    %2690 = vmatprep.subr.mxu0 0.0
    %2691 = vmatpush1.msra.mxu0 0.0
    %2692 = vmatprep.subr.mxu0 0.0
    %2693 = vmatpush1.msra.mxu0 0.0
    %2694 = vmatprep.subr.mxu0 0.0
    %2695 = vmatpush1.msra.mxu0 0.0
    %2696 = vmatprep.subr.mxu0 0.0
    %2697 = vmatpush1.msra.mxu0 0.0
    %2698 = vmatprep.subr.mxu0 0.0
    %2699 = vmatpush1.msra.mxu0 0.0
    %2700 = vmatprep.subr.mxu0 0.0
    %2701 = vmatpush1.msra.mxu0 0.0
    %2702 = vmatprep.subr.mxu0 0.0
    %2703 = vmatpush1.msra.mxu0 0.0
    %2704 = vmatprep.subr.mxu0 0.0
    %2705 = vmatpush1.msra.mxu0 0.0
    %2706 = vmatprep.subr.mxu0 0.0
    %2707 = vmatpush1.msra.mxu0 0.0
    %2708 = vmatprep.subr.mxu0 0.0
    %2709 = vmatpush1.msra.mxu0 0.0
    %2710 = vmatprep.subr.mxu0 0.0
    %2711 = vmatpush1.msra.mxu0 0.0
    %2712 = vmatprep.subr.mxu0 0.0
    %2713 = vmatpush1.msra.mxu0 0.0
    %2714 = vmatprep.subr.mxu0 0.0
    %2715 = vmatpush1.msra.mxu0 0.0
    %2716 = vmatprep.subr.mxu0 0.0
    %2717 = vmatpush1.msra.mxu0 0.0
    %2718 = vmatprep.subr.mxu0 0.0
    %2719 = vmatpush1.msra.mxu0 0.0
    %2720 = vmatprep.subr.mxu0 0.0
    %2721 = vmatpush1.msra.mxu0 0.0
    %2722 = vmatprep.subr.mxu0 0.0
    %2723 = vmatpush1.msra.mxu0 0.0
    %2724 = vmatprep.subr.mxu0 0.0
    %2725 = vmatpush1.msra.mxu0 0.0
    %2726 = vmatprep.subr.mxu0 0.0
    %2727 = vmatpush1.msra.mxu0 0.0
    %2728 = vmatprep.subr.mxu0 0.0
    %2729 = vmatpush1.msra.mxu0 0.0
    %2730 = vmatprep.subr.mxu0 0.0
    %2731 = vmatpush1.msra.mxu0 0.0
    %2732 = vmatprep.mubr.f32.mxu0 0.0
    %2733 = vmatmul.mubr.f32.gmra.mrb[0].mxu0 %v2666
    %v2734 = vpop.f32.mrb[0].mxu0
    %v2735 = vadd.f32 %v2121, %v2734
    %v2736 = vpop.f32.mrb[0].mxu0
    %2737 = vdwg.mxu0
    %v2739 = vsel %vm905, %v2082, 0
    %2741 = vmatprep.subr.mxu0 0.0
    %2742 = vmatpush1.msra.mxu0 %v484
    %2743 = vmatprep.subr.mxu0 0.0
    %2744 = vmatpush1.msra.mxu0 %v485
    %2745 = vmatprep.subr.mxu0 0.0
    %2746 = vmatpush1.msra.mxu0 %v486
    %2747 = vmatprep.subr.mxu0 0.0
    %2748 = vmatpush1.msra.mxu0 %v487
    %2749 = vmatprep.subr.mxu0 0.0
    %2750 = vmatpush1.msra.mxu0 0.0
    %2751 = vmatprep.subr.mxu0 0.0
    %2752 = vmatpush1.msra.mxu0 0.0
    %2753 = vmatprep.subr.mxu0 0.0
    %2754 = vmatpush1.msra.mxu0 0.0
    %2755 = vmatprep.subr.mxu0 0.0
    %2756 = vmatpush1.msra.mxu0 0.0
    %2757 = vmatprep.subr.mxu0 0.0
    %2758 = vmatpush1.msra.mxu0 0.0
    %2759 = vmatprep.subr.mxu0 0.0
    %2760 = vmatpush1.msra.mxu0 0.0
    %2761 = vmatprep.subr.mxu0 0.0
    %2762 = vmatpush1.msra.mxu0 0.0
    %2763 = vmatprep.subr.mxu0 0.0
    %2764 = vmatpush1.msra.mxu0 0.0
    %2765 = vmatprep.subr.mxu0 0.0
    %2766 = vmatpush1.msra.mxu0 0.0
    %2767 = vmatprep.subr.mxu0 0.0
    %2768 = vmatpush1.msra.mxu0 0.0
    %2769 = vmatprep.subr.mxu0 0.0
    %2770 = vmatpush1.msra.mxu0 0.0
    %2771 = vmatprep.subr.mxu0 0.0
    %2772 = vmatpush1.msra.mxu0 0.0
    %2773 = vmatprep.subr.mxu0 0.0
    %2774 = vmatpush1.msra.mxu0 0.0
    %2775 = vmatprep.subr.mxu0 0.0
    %2776 = vmatpush1.msra.mxu0 0.0
    %2777 = vmatprep.subr.mxu0 0.0
    %2778 = vmatpush1.msra.mxu0 0.0
    %2779 = vmatprep.subr.mxu0 0.0
    %2780 = vmatpush1.msra.mxu0 0.0
    %2781 = vmatprep.subr.mxu0 0.0
    %2782 = vmatpush1.msra.mxu0 0.0
    %2783 = vmatprep.subr.mxu0 0.0
    %2784 = vmatpush1.msra.mxu0 0.0
    %2785 = vmatprep.subr.mxu0 0.0
    %2786 = vmatpush1.msra.mxu0 0.0
    %2787 = vmatprep.subr.mxu0 0.0
    %2788 = vmatpush1.msra.mxu0 0.0
    %2789 = vmatprep.subr.mxu0 0.0
    %2790 = vmatpush1.msra.mxu0 0.0
    %2791 = vmatprep.subr.mxu0 0.0
    %2792 = vmatpush1.msra.mxu0 0.0
    %2793 = vmatprep.subr.mxu0 0.0
    %2794 = vmatpush1.msra.mxu0 0.0
    %2795 = vmatprep.subr.mxu0 0.0
    %2796 = vmatpush1.msra.mxu0 0.0
    %2797 = vmatprep.subr.mxu0 0.0
    %2798 = vmatpush1.msra.mxu0 0.0
    %2799 = vmatprep.subr.mxu0 0.0
    %2800 = vmatpush1.msra.mxu0 0.0
    %2801 = vmatprep.subr.mxu0 0.0
    %2802 = vmatpush1.msra.mxu0 0.0
    %2803 = vmatprep.subr.mxu0 0.0
    %2804 = vmatpush1.msra.mxu0 0.0
    %2805 = vmatprep.mubr.f32.mxu0 0.0
    %2806 = vmatmul.mubr.f32.gmra.mrb[0].mxu0 %v2739
    %v2807 = vpop.f32.mrb[0].mxu0
    %v2808 = vadd.f32 %v2125, %v2807
    %v2809 = vpop.f32.mrb[0].mxu0
    %2810 = vdwg.mxu0
    %v2812 = vsel %vm905, %v2083, 0
    %2814 = vmatprep.subr.mxu0 0.0
    %2815 = vmatpush1.msra.mxu0 %v495
    %2816 = vmatprep.subr.mxu0 0.0
    %2817 = vmatpush1.msra.mxu0 %v496
    %2818 = vmatprep.subr.mxu0 0.0
    %2819 = vmatpush1.msra.mxu0 %v497
    %2820 = vmatprep.subr.mxu0 0.0
    %2821 = vmatpush1.msra.mxu0 %v498
    %2822 = vmatprep.subr.mxu0 0.0
    %2823 = vmatpush1.msra.mxu0 0.0
    %2824 = vmatprep.subr.mxu0 0.0
    %2825 = vmatpush1.msra.mxu0 0.0
    %2826 = vmatprep.subr.mxu0 0.0
    %2827 = vmatpush1.msra.mxu0 0.0
    %2828 = vmatprep.subr.mxu0 0.0
    %2829 = vmatpush1.msra.mxu0 0.0
    %2830 = vmatprep.subr.mxu0 0.0
    %2831 = vmatpush1.msra.mxu0 0.0
    %2832 = vmatprep.subr.mxu0 0.0
    %2833 = vmatpush1.msra.mxu0 0.0
    %2834 = vmatprep.subr.mxu0 0.0
    %2835 = vmatpush1.msra.mxu0 0.0
    %2836 = vmatprep.subr.mxu0 0.0
    %2837 = vmatpush1.msra.mxu0 0.0
    %2838 = vmatprep.subr.mxu0 0.0
    %2839 = vmatpush1.msra.mxu0 0.0
    %2840 = vmatprep.subr.mxu0 0.0
    %2841 = vmatpush1.msra.mxu0 0.0
    %2842 = vmatprep.subr.mxu0 0.0
    %2843 = vmatpush1.msra.mxu0 0.0
    %2844 = vmatprep.subr.mxu0 0.0
    %2845 = vmatpush1.msra.mxu0 0.0
    %2846 = vmatprep.subr.mxu0 0.0
    %2847 = vmatpush1.msra.mxu0 0.0
    %2848 = vmatprep.subr.mxu0 0.0
    %2849 = vmatpush1.msra.mxu0 0.0
    %2850 = vmatprep.subr.mxu0 0.0
    %2851 = vmatpush1.msra.mxu0 0.0
    %2852 = vmatprep.subr.mxu0 0.0
    %2853 = vmatpush1.msra.mxu0 0.0
    %2854 = vmatprep.subr.mxu0 0.0
    %2855 = vmatpush1.msra.mxu0 0.0
    %2856 = vmatprep.subr.mxu0 0.0
    %2857 = vmatpush1.msra.mxu0 0.0
    %2858 = vmatprep.subr.mxu0 0.0
    %2859 = vmatpush1.msra.mxu0 0.0
    %2860 = vmatprep.subr.mxu0 0.0
    %2861 = vmatpush1.msra.mxu0 0.0
    %2862 = vmatprep.subr.mxu0 0.0
    %2863 = vmatpush1.msra.mxu0 0.0
    %2864 = vmatprep.subr.mxu0 0.0
    %2865 = vmatpush1.msra.mxu0 0.0
    %2866 = vmatprep.subr.mxu0 0.0
    %2867 = vmatpush1.msra.mxu0 0.0
    %2868 = vmatprep.subr.mxu0 0.0
    %2869 = vmatpush1.msra.mxu0 0.0
    %2870 = vmatprep.subr.mxu0 0.0
    %2871 = vmatpush1.msra.mxu0 0.0
    %2872 = vmatprep.subr.mxu0 0.0
    %2873 = vmatpush1.msra.mxu0 0.0
    %2874 = vmatprep.subr.mxu0 0.0
    %2875 = vmatpush1.msra.mxu0 0.0
    %2876 = vmatprep.subr.mxu0 0.0
    %2877 = vmatpush1.msra.mxu0 0.0
    %2878 = vmatprep.mubr.f32.mxu0 0.0
    %2879 = vmatmul.mubr.f32.gmra.mrb[0].mxu0 %v2812
    %v2880 = vpop.f32.mrb[0].mxu0
    %v2881 = vadd.f32 %v2129, %v2880
    %v2882 = vpop.f32.mrb[0].mxu0
    %2883 = vdwg.mxu0
    %v2885 = vsel %vm905, %v2084, 0
    %2887 = vmatprep.subr.mxu0 0.0
    %2888 = vmatpush1.msra.mxu0 %v506
    %2889 = vmatprep.subr.mxu0 0.0
    %2890 = vmatpush1.msra.mxu0 %v507
    %2891 = vmatprep.subr.mxu0 0.0
    %2892 = vmatpush1.msra.mxu0 %v508
    %2893 = vmatprep.subr.mxu0 0.0
    %2894 = vmatpush1.msra.mxu0 %v509
    %2895 = vmatprep.subr.mxu0 0.0
    %2896 = vmatpush1.msra.mxu0 0.0
    %2897 = vmatprep.subr.mxu0 0.0
    %2898 = vmatpush1.msra.mxu0 0.0
    %2899 = vmatprep.subr.mxu0 0.0
    %2900 = vmatpush1.msra.mxu0 0.0
    %2901 = vmatprep.subr.mxu0 0.0
    %2902 = vmatpush1.msra.mxu0 0.0
    %2903 = vmatprep.subr.mxu0 0.0
    %2904 = vmatpush1.msra.mxu0 0.0
    %2905 = vmatprep.subr.mxu0 0.0
    %2906 = vmatpush1.msra.mxu0 0.0
    %2907 = vmatprep.subr.mxu0 0.0
    %2908 = vmatpush1.msra.mxu0 0.0
    %2909 = vmatprep.subr.mxu0 0.0
    %2910 = vmatpush1.msra.mxu0 0.0
    %2911 = vmatprep.subr.mxu0 0.0
    %2912 = vmatpush1.msra.mxu0 0.0
    %2913 = vmatprep.subr.mxu0 0.0
    %2914 = vmatpush1.msra.mxu0 0.0
    %2915 = vmatprep.subr.mxu0 0.0
    %2916 = vmatpush1.msra.mxu0 0.0
    %2917 = vmatprep.subr.mxu0 0.0
    %2918 = vmatpush1.msra.mxu0 0.0
    %2919 = vmatprep.subr.mxu0 0.0
    %2920 = vmatpush1.msra.mxu0 0.0
    %2921 = vmatprep.subr.mxu0 0.0
    %2922 = vmatpush1.msra.mxu0 0.0
    %2923 = vmatprep.subr.mxu0 0.0
    %2924 = vmatpush1.msra.mxu0 0.0
    %2925 = vmatprep.subr.mxu0 0.0
    %2926 = vmatpush1.msra.mxu0 0.0
    %2927 = vmatprep.subr.mxu0 0.0
    %2928 = vmatpush1.msra.mxu0 0.0
    %2929 = vmatprep.subr.mxu0 0.0
    %2930 = vmatpush1.msra.mxu0 0.0
    %2931 = vmatprep.subr.mxu0 0.0
    %2932 = vmatpush1.msra.mxu0 0.0
    %2933 = vmatprep.subr.mxu0 0.0
    %2934 = vmatpush1.msra.mxu0 0.0
    %2935 = vmatprep.subr.mxu0 0.0
    %2936 = vmatpush1.msra.mxu0 0.0
    %2937 = vmatprep.subr.mxu0 0.0
    %2938 = vmatpush1.msra.mxu0 0.0
    %2939 = vmatprep.subr.mxu0 0.0
    %2940 = vmatpush1.msra.mxu0 0.0
    %2941 = vmatprep.subr.mxu0 0.0
    %2942 = vmatpush1.msra.mxu0 0.0
    %2943 = vmatprep.subr.mxu0 0.0
    %2944 = vmatpush1.msra.mxu0 0.0
    %2945 = vmatprep.subr.mxu0 0.0
    %2946 = vmatpush1.msra.mxu0 0.0
    %2947 = vmatprep.subr.mxu0 0.0
    %2948 = vmatpush1.msra.mxu0 0.0
    %2949 = vmatprep.subr.mxu0 0.0
    %2950 = vmatpush1.msra.mxu0 0.0
    %2951 = vmatprep.mubr.f32.mxu0 0.0
    %2952 = vmatmul.mubr.f32.gmra.mrb[0].mxu0 %v2885
    %v2953 = vpop.f32.mrb[0].mxu0
    %v2954 = vadd.f32 %v2133, %v2953
    %v2955 = vpop.f32.mrb[0].mxu0
    %2956 = vdwg.mxu0
    %v2958 = vsel %vm905, %v2085, 0
    %2960 = vmatprep.subr.mxu0 0.0
    %2961 = vmatpush1.msra.mxu0 %v517
    %2962 = vmatprep.subr.mxu0 0.0
    %2963 = vmatpush1.msra.mxu0 %v518
    %2964 = vmatprep.subr.mxu0 0.0
    %2965 = vmatpush1.msra.mxu0 %v519
    %2966 = vmatprep.subr.mxu0 0.0
    %2967 = vmatpush1.msra.mxu0 %v520
    %2968 = vmatprep.subr.mxu0 0.0
    %2969 = vmatpush1.msra.mxu0 0.0
    %2970 = vmatprep.subr.mxu0 0.0
    %2971 = vmatpush1.msra.mxu0 0.0
    %2972 = vmatprep.subr.mxu0 0.0
    %2973 = vmatpush1.msra.mxu0 0.0
    %2974 = vmatprep.subr.mxu0 0.0
    %2975 = vmatpush1.msra.mxu0 0.0
    %2976 = vmatprep.subr.mxu0 0.0
    %2977 = vmatpush1.msra.mxu0 0.0
    %2978 = vmatprep.subr.mxu0 0.0
    %2979 = vmatpush1.msra.mxu0 0.0
    %2980 = vmatprep.subr.mxu0 0.0
    %2981 = vmatpush1.msra.mxu0 0.0
    %2982 = vmatprep.subr.mxu0 0.0
    %2983 = vmatpush1.msra.mxu0 0.0
    %2984 = vmatprep.subr.mxu0 0.0
    %2985 = vmatpush1.msra.mxu0 0.0
    %2986 = vmatprep.subr.mxu0 0.0
    %2987 = vmatpush1.msra.mxu0 0.0
    %2988 = vmatprep.subr.mxu0 0.0
    %2989 = vmatpush1.msra.mxu0 0.0
    %2990 = vmatprep.subr.mxu0 0.0
    %2991 = vmatpush1.msra.mxu0 0.0
    %2992 = vmatprep.subr.mxu0 0.0
    %2993 = vmatpush1.msra.mxu0 0.0
    %2994 = vmatprep.subr.mxu0 0.0
    %2995 = vmatpush1.msra.mxu0 0.0
    %2996 = vmatprep.subr.mxu0 0.0
    %2997 = vmatpush1.msra.mxu0 0.0
    %2998 = vmatprep.subr.mxu0 0.0
    %2999 = vmatpush1.msra.mxu0 0.0
    %3000 = vmatprep.subr.mxu0 0.0
    %3001 = vmatpush1.msra.mxu0 0.0
    %3002 = vmatprep.subr.mxu0 0.0
    %3003 = vmatpush1.msra.mxu0 0.0
    %3004 = vmatprep.subr.mxu0 0.0
    %3005 = vmatpush1.msra.mxu0 0.0
    %3006 = vmatprep.subr.mxu0 0.0
    %3007 = vmatpush1.msra.mxu0 0.0
    %3008 = vmatprep.subr.mxu0 0.0
    %3009 = vmatpush1.msra.mxu0 0.0
    %3010 = vmatprep.subr.mxu0 0.0
    %3011 = vmatpush1.msra.mxu0 0.0
    %3012 = vmatprep.subr.mxu0 0.0
    %3013 = vmatpush1.msra.mxu0 0.0
    %3014 = vmatprep.subr.mxu0 0.0
    %3015 = vmatpush1.msra.mxu0 0.0
    %3016 = vmatprep.subr.mxu0 0.0
    %3017 = vmatpush1.msra.mxu0 0.0
    %3018 = vmatprep.subr.mxu0 0.0
    %3019 = vmatpush1.msra.mxu0 0.0
    %3020 = vmatprep.subr.mxu0 0.0
    %3021 = vmatpush1.msra.mxu0 0.0
    %3022 = vmatprep.subr.mxu0 0.0
    %3023 = vmatpush1.msra.mxu0 0.0
    %3024 = vmatprep.mubr.f32.mxu0 0.0
    %3025 = vmatmul.mubr.f32.gmra.mrb[0].mxu0 %v2958
    %v3026 = vpop.f32.mrb[0].mxu0
    %v3027 = vadd.f32 %v2137, %v3026
    %v3028 = vpop.f32.mrb[0].mxu0
    %3029 = vdwg.mxu0
    %v3031 = vsel %vm905, %v2086, 0
    %3033 = vmatprep.subr.mxu0 0.0
    %3034 = vmatpush1.msra.mxu0 %v528
    %3035 = vmatprep.subr.mxu0 0.0
    %3036 = vmatpush1.msra.mxu0 %v529
    %3037 = vmatprep.subr.mxu0 0.0
    %3038 = vmatpush1.msra.mxu0 %v530
    %3039 = vmatprep.subr.mxu0 0.0
    %3040 = vmatpush1.msra.mxu0 %v531
    %3041 = vmatprep.subr.mxu0 0.0
    %3042 = vmatpush1.msra.mxu0 0.0
    %3043 = vmatprep.subr.mxu0 0.0
    %3044 = vmatpush1.msra.mxu0 0.0
    %3045 = vmatprep.subr.mxu0 0.0
    %3046 = vmatpush1.msra.mxu0 0.0
    %3047 = vmatprep.subr.mxu0 0.0
    %3048 = vmatpush1.msra.mxu0 0.0
    %3049 = vmatprep.subr.mxu0 0.0
    %3050 = vmatpush1.msra.mxu0 0.0
    %3051 = vmatprep.subr.mxu0 0.0
    %3052 = vmatpush1.msra.mxu0 0.0
    %3053 = vmatprep.subr.mxu0 0.0
    %3054 = vmatpush1.msra.mxu0 0.0
    %3055 = vmatprep.subr.mxu0 0.0
    %3056 = vmatpush1.msra.mxu0 0.0
    %3057 = vmatprep.subr.mxu0 0.0
    %3058 = vmatpush1.msra.mxu0 0.0
    %3059 = vmatprep.subr.mxu0 0.0
    %3060 = vmatpush1.msra.mxu0 0.0
    %3061 = vmatprep.subr.mxu0 0.0
    %3062 = vmatpush1.msra.mxu0 0.0
    %3063 = vmatprep.subr.mxu0 0.0
    %3064 = vmatpush1.msra.mxu0 0.0
    %3065 = vmatprep.subr.mxu0 0.0
    %3066 = vmatpush1.msra.mxu0 0.0
    %3067 = vmatprep.subr.mxu0 0.0
    %3068 = vmatpush1.msra.mxu0 0.0
    %3069 = vmatprep.subr.mxu0 0.0
    %3070 = vmatpush1.msra.mxu0 0.0
    %3071 = vmatprep.subr.mxu0 0.0
    %3072 = vmatpush1.msra.mxu0 0.0
    %3073 = vmatprep.subr.mxu0 0.0
    %3074 = vmatpush1.msra.mxu0 0.0
    %3075 = vmatprep.subr.mxu0 0.0
    %3076 = vmatpush1.msra.mxu0 0.0
    %3077 = vmatprep.subr.mxu0 0.0
    %3078 = vmatpush1.msra.mxu0 0.0
    %3079 = vmatprep.subr.mxu0 0.0
    %3080 = vmatpush1.msra.mxu0 0.0
    %3081 = vmatprep.subr.mxu0 0.0
    %3082 = vmatpush1.msra.mxu0 0.0
    %3083 = vmatprep.subr.mxu0 0.0
    %3084 = vmatpush1.msra.mxu0 0.0
    %3085 = vmatprep.subr.mxu0 0.0
    %3086 = vmatpush1.msra.mxu0 0.0
    %3087 = vmatprep.subr.mxu0 0.0
    %3088 = vmatpush1.msra.mxu0 0.0
    %3089 = vmatprep.subr.mxu0 0.0
    %3090 = vmatpush1.msra.mxu0 0.0
    %3091 = vmatprep.subr.mxu0 0.0
    %3092 = vmatpush1.msra.mxu0 0.0
    %3093 = vmatprep.subr.mxu0 0.0
    %3094 = vmatpush1.msra.mxu0 0.0
    %3095 = vmatprep.subr.mxu0 0.0
    %3096 = vmatpush1.msra.mxu0 0.0
    %3097 = vmatprep.mubr.f32.mxu0 0.0
    %3098 = vmatmul.mubr.f32.gmra.mrb[0].mxu0 %v3031
    %v3099 = vpop.f32.mrb[0].mxu0
    %v3100 = vadd.f32 %v2141, %v3099
    %v3101 = vpop.f32.mrb[0].mxu0
    %3102 = vdwg.mxu0
    %v3104 = vsel %vm905, %v2087, 0
    %3106 = vmatprep.subr.mxu0 0.0
    %3107 = vmatpush1.msra.mxu0 %v539
    %3108 = vmatprep.subr.mxu0 0.0
    %3109 = vmatpush1.msra.mxu0 %v540
    %3110 = vmatprep.subr.mxu0 0.0
    %3111 = vmatpush1.msra.mxu0 %v541
    %3112 = vmatprep.subr.mxu0 0.0
    %3113 = vmatpush1.msra.mxu0 %v542
    %3114 = vmatprep.subr.mxu0 0.0
    %3115 = vmatpush1.msra.mxu0 0.0
    %3116 = vmatprep.subr.mxu0 0.0
    %3117 = vmatpush1.msra.mxu0 0.0
    %3118 = vmatprep.subr.mxu0 0.0
    %3119 = vmatpush1.msra.mxu0 0.0
    %3120 = vmatprep.subr.mxu0 0.0
    %3121 = vmatpush1.msra.mxu0 0.0
    %3122 = vmatprep.subr.mxu0 0.0
    %3123 = vmatpush1.msra.mxu0 0.0
    %3124 = vmatprep.subr.mxu0 0.0
    %3125 = vmatpush1.msra.mxu0 0.0
    %3126 = vmatprep.subr.mxu0 0.0
    %3127 = vmatpush1.msra.mxu0 0.0
    %3128 = vmatprep.subr.mxu0 0.0
    %3129 = vmatpush1.msra.mxu0 0.0
    %3130 = vmatprep.subr.mxu0 0.0
    %3131 = vmatpush1.msra.mxu0 0.0
    %3132 = vmatprep.subr.mxu0 0.0
    %3133 = vmatpush1.msra.mxu0 0.0
    %3134 = vmatprep.subr.mxu0 0.0
    %3135 = vmatpush1.msra.mxu0 0.0
    %3136 = vmatprep.subr.mxu0 0.0
    %3137 = vmatpush1.msra.mxu0 0.0
    %3138 = vmatprep.subr.mxu0 0.0
    %3139 = vmatpush1.msra.mxu0 0.0
    %3140 = vmatprep.subr.mxu0 0.0
    %3141 = vmatpush1.msra.mxu0 0.0
    %3142 = vmatprep.subr.mxu0 0.0
    %3143 = vmatpush1.msra.mxu0 0.0
    %3144 = vmatprep.subr.mxu0 0.0
    %3145 = vmatpush1.msra.mxu0 0.0
    %3146 = vmatprep.subr.mxu0 0.0
    %3147 = vmatpush1.msra.mxu0 0.0
    %3148 = vmatprep.subr.mxu0 0.0
    %3149 = vmatpush1.msra.mxu0 0.0
    %3150 = vmatprep.subr.mxu0 0.0
    %3151 = vmatpush1.msra.mxu0 0.0
    %3152 = vmatprep.subr.mxu0 0.0
    %3153 = vmatpush1.msra.mxu0 0.0
    %3154 = vmatprep.subr.mxu0 0.0
    %3155 = vmatpush1.msra.mxu0 0.0
    %3156 = vmatprep.subr.mxu0 0.0
    %3157 = vmatpush1.msra.mxu0 0.0
    %3158 = vmatprep.subr.mxu0 0.0
    %3159 = vmatpush1.msra.mxu0 0.0
    %3160 = vmatprep.subr.mxu0 0.0
    %3161 = vmatpush1.msra.mxu0 0.0
    %3162 = vmatprep.subr.mxu0 0.0
    %3163 = vmatpush1.msra.mxu0 0.0
    %3164 = vmatprep.subr.mxu0 0.0
    %3165 = vmatpush1.msra.mxu0 0.0
    %3166 = vmatprep.subr.mxu0 0.0
    %3167 = vmatpush1.msra.mxu0 0.0
    %3168 = vmatprep.subr.mxu0 0.0
    %3169 = vmatpush1.msra.mxu0 0.0
    %3170 = vmatprep.mubr.f32.mxu0 0.0
    %3171 = vmatmul.mubr.f32.gmra.mrb[0].mxu0 %v3104
    %v3172 = vpop.f32.mrb[0].mxu0
    %v3173 = vadd.f32 %v2145, %v3172
    %v3174 = vpop.f32.mrb[0].mxu0
    %3175 = vdwg.mxu0
    %v3177 = vsel %vm905, %v2088, 0
    %3179 = vmatprep.subr.mxu0 0.0
    %3180 = vmatpush1.msra.mxu0 %v550
    %3181 = vmatprep.subr.mxu0 0.0
    %3182 = vmatpush1.msra.mxu0 %v551
    %3183 = vmatprep.subr.mxu0 0.0
    %3184 = vmatpush1.msra.mxu0 %v552
    %3185 = vmatprep.subr.mxu0 0.0
    %3186 = vmatpush1.msra.mxu0 %v553
    %3187 = vmatprep.subr.mxu0 0.0
    %3188 = vmatpush1.msra.mxu0 0.0
    %3189 = vmatprep.subr.mxu0 0.0
    %3190 = vmatpush1.msra.mxu0 0.0
    %3191 = vmatprep.subr.mxu0 0.0
    %3192 = vmatpush1.msra.mxu0 0.0
    %3193 = vmatprep.subr.mxu0 0.0
    %3194 = vmatpush1.msra.mxu0 0.0
    %3195 = vmatprep.subr.mxu0 0.0
    %3196 = vmatpush1.msra.mxu0 0.0
    %3197 = vmatprep.subr.mxu0 0.0
    %3198 = vmatpush1.msra.mxu0 0.0
    %3199 = vmatprep.subr.mxu0 0.0
    %3200 = vmatpush1.msra.mxu0 0.0
    %3201 = vmatprep.subr.mxu0 0.0
    %3202 = vmatpush1.msra.mxu0 0.0
    %3203 = vmatprep.subr.mxu0 0.0
    %3204 = vmatpush1.msra.mxu0 0.0
    %3205 = vmatprep.subr.mxu0 0.0
    %3206 = vmatpush1.msra.mxu0 0.0
    %3207 = vmatprep.subr.mxu0 0.0
    %3208 = vmatpush1.msra.mxu0 0.0
    %3209 = vmatprep.subr.mxu0 0.0
    %3210 = vmatpush1.msra.mxu0 0.0
    %3211 = vmatprep.subr.mxu0 0.0
    %3212 = vmatpush1.msra.mxu0 0.0
    %3213 = vmatprep.subr.mxu0 0.0
    %3214 = vmatpush1.msra.mxu0 0.0
    %3215 = vmatprep.subr.mxu0 0.0
    %3216 = vmatpush1.msra.mxu0 0.0
    %3217 = vmatprep.subr.mxu0 0.0
    %3218 = vmatpush1.msra.mxu0 0.0
    %3219 = vmatprep.subr.mxu0 0.0
    %3220 = vmatpush1.msra.mxu0 0.0
    %3221 = vmatprep.subr.mxu0 0.0
    %3222 = vmatpush1.msra.mxu0 0.0
    %3223 = vmatprep.subr.mxu0 0.0
    %3224 = vmatpush1.msra.mxu0 0.0
    %3225 = vmatprep.subr.mxu0 0.0
    %3226 = vmatpush1.msra.mxu0 0.0
    %3227 = vmatprep.subr.mxu0 0.0
    %3228 = vmatpush1.msra.mxu0 0.0
    %3229 = vmatprep.subr.mxu0 0.0
    %3230 = vmatpush1.msra.mxu0 0.0
    %3231 = vmatprep.subr.mxu0 0.0
    %3232 = vmatpush1.msra.mxu0 0.0
    %3233 = vmatprep.subr.mxu0 0.0
    %3234 = vmatpush1.msra.mxu0 0.0
    %3235 = vmatprep.subr.mxu0 0.0
    %3236 = vmatpush1.msra.mxu0 0.0
    %3237 = vmatprep.subr.mxu0 0.0
    %3238 = vmatpush1.msra.mxu0 0.0
    %3239 = vmatprep.subr.mxu0 0.0
    %3240 = vmatpush1.msra.mxu0 0.0
    %3241 = vmatprep.subr.mxu0 0.0
    %3242 = vmatpush1.msra.mxu0 0.0
    %3243 = vmatprep.mubr.f32.mxu0 0.0
    %3244 = vmatmul.mubr.f32.gmra.mrb[0].mxu0 %v3177
    %v3245 = vpop.f32.mrb[0].mxu0
    %v3246 = vadd.f32 %v2149, %v3245
    %v3247 = vpop.f32.mrb[0].mxu0
    %3248 = vdwg.mxu0
    %v3250 = vsel %vm905, %v2089, 0
    %3252 = vmatprep.subr.mxu0 0.0
    %3253 = vmatpush1.msra.mxu0 %v561
    %3254 = vmatprep.subr.mxu0 0.0
    %3255 = vmatpush1.msra.mxu0 %v562
    %3256 = vmatprep.subr.mxu0 0.0
    %3257 = vmatpush1.msra.mxu0 %v563
    %3258 = vmatprep.subr.mxu0 0.0
    %3259 = vmatpush1.msra.mxu0 %v564
    %3260 = vmatprep.subr.mxu0 0.0
    %3261 = vmatpush1.msra.mxu0 0.0
    %3262 = vmatprep.subr.mxu0 0.0
    %3263 = vmatpush1.msra.mxu0 0.0
    %3264 = vmatprep.subr.mxu0 0.0
    %3265 = vmatpush1.msra.mxu0 0.0
    %3266 = vmatprep.subr.mxu0 0.0
    %3267 = vmatpush1.msra.mxu0 0.0
    %3268 = vmatprep.subr.mxu0 0.0
    %3269 = vmatpush1.msra.mxu0 0.0
    %3270 = vmatprep.subr.mxu0 0.0
    %3271 = vmatpush1.msra.mxu0 0.0
    %3272 = vmatprep.subr.mxu0 0.0
    %3273 = vmatpush1.msra.mxu0 0.0
    %3274 = vmatprep.subr.mxu0 0.0
    %3275 = vmatpush1.msra.mxu0 0.0
    %3276 = vmatprep.subr.mxu0 0.0
    %3277 = vmatpush1.msra.mxu0 0.0
    %3278 = vmatprep.subr.mxu0 0.0
    %3279 = vmatpush1.msra.mxu0 0.0
    %3280 = vmatprep.subr.mxu0 0.0
    %3281 = vmatpush1.msra.mxu0 0.0
    %3282 = vmatprep.subr.mxu0 0.0
    %3283 = vmatpush1.msra.mxu0 0.0
    %3284 = vmatprep.subr.mxu0 0.0
    %3285 = vmatpush1.msra.mxu0 0.0
    %3286 = vmatprep.subr.mxu0 0.0
    %3287 = vmatpush1.msra.mxu0 0.0
    %3288 = vmatprep.subr.mxu0 0.0
    %3289 = vmatpush1.msra.mxu0 0.0
    %3290 = vmatprep.subr.mxu0 0.0
    %3291 = vmatpush1.msra.mxu0 0.0
    %3292 = vmatprep.subr.mxu0 0.0
    %3293 = vmatpush1.msra.mxu0 0.0
    %3294 = vmatprep.subr.mxu0 0.0
    %3295 = vmatpush1.msra.mxu0 0.0
    %3296 = vmatprep.subr.mxu0 0.0
    %3297 = vmatpush1.msra.mxu0 0.0
    %3298 = vmatprep.subr.mxu0 0.0
    %3299 = vmatpush1.msra.mxu0 0.0
    %3300 = vmatprep.subr.mxu0 0.0
    %3301 = vmatpush1.msra.mxu0 0.0
    %3302 = vmatprep.subr.mxu0 0.0
    %3303 = vmatpush1.msra.mxu0 0.0
    %3304 = vmatprep.subr.mxu0 0.0
    %3305 = vmatpush1.msra.mxu0 0.0
    %3306 = vmatprep.subr.mxu0 0.0
    %3307 = vmatpush1.msra.mxu0 0.0
    %3308 = vmatprep.subr.mxu0 0.0
    %3309 = vmatpush1.msra.mxu0 0.0
    %3310 = vmatprep.subr.mxu0 0.0
    %3311 = vmatpush1.msra.mxu0 0.0
    %3312 = vmatprep.subr.mxu0 0.0
    %3313 = vmatpush1.msra.mxu0 0.0
    %3314 = vmatprep.subr.mxu0 0.0
    %3315 = vmatpush1.msra.mxu0 0.0
    %3316 = vmatprep.mubr.f32.mxu0 0.0
    %3317 = vmatmul.mubr.f32.gmra.mrb[0].mxu0 %v3250
    %v3318 = vpop.f32.mrb[0].mxu0
    %v3319 = vadd.f32 %v2153, %v3318
    %v3320 = vpop.f32.mrb[0].mxu0
    %3321 = vdwg.mxu0
    %3322 = vst.msk [vmem:[#allocation2] sm:$0xff] %vm905, %v2224
    %3323 = vst.msk [vmem:[#allocation2 + $0x8] sm:$0xff] %vm905, %v2297
    %3324 = vst.msk [vmem:[#allocation2 + $0x10] sm:$0xff] %vm905, %v2370
    %3325 = vst.msk [vmem:[#allocation2 + $0x18] sm:$0xff] %vm905, %v2443
    %3326 = vst.msk [vmem:[#allocation2 + $0x20] sm:$0xff] %vm905, %v2516
    %3327 = vst.msk [vmem:[#allocation2 + $0x28] sm:$0xff] %vm905, %v2589
    %3328 = vst.msk [vmem:[#allocation2 + $0x30] sm:$0xff] %vm905, %v2662
    %3329 = vst.msk [vmem:[#allocation2 + $0x38] sm:$0xff] %vm905, %v2735
    %3330 = vst.msk [vmem:[#allocation2 + $0x40] sm:$0xff] %vm905, %v2808
    %3331 = vst.msk [vmem:[#allocation2 + $0x48] sm:$0xff] %vm905, %v2881
    %3332 = vst.msk [vmem:[#allocation2 + $0x50] sm:$0xff] %vm905, %v2954
    %3333 = vst.msk [vmem:[#allocation2 + $0x58] sm:$0xff] %vm905, %v3027
    %3334 = vst.msk [vmem:[#allocation2 + $0x60] sm:$0xff] %vm905, %v3100
    %3335 = vst.msk [vmem:[#allocation2 + $0x68] sm:$0xff] %vm905, %v3173
    %3336 = vst.msk [vmem:[#allocation2 + $0x70] sm:$0xff] %vm905, %v3246
    %3337 = vst.msk [vmem:[#allocation2 + $0x78] sm:$0xff] %vm905, %v3319
    // Predicated region
    $region14: #{tpu_custom_call.1} parent=1 // pred_check
      _
    $region15: #{tpu_custom_call.1} parent=1 // pred_check_branch
      %3339 = sbr.rel (0) target = $region17
    $region16: #{tpu_custom_call.1} parent=1 // pred_region
      %s3341 = ssub.s32 2048, 2048
      %3342 = vsyncadd [#allocation3], %s3341
      %s3343 = sshll.u32 [#allocation2], 4
      %s3344 = int_to_ptr.vmem [resolvable:$true] %s3343
      %3349 = dma.vmem_to_hbm [thread:$0]  %s3344, 2048, %s3, [#allocation3], 128, 128, 8
    $region17: #{tpu_custom_call.1} parent=1 // pred_fallthru
      _
    // Predicated region
    $region18: #{tpu_custom_call.1} parent=1 // pred_check
      _
    $region19: #{tpu_custom_call.1} parent=1 // pred_check_branch
      %3351 = sbr.rel (0) target = $region21
    $region20: #{tpu_custom_call.1} parent=1 // pred_region
      %3352 = dma.done [#allocation3], 2048
    $region21: #{tpu_custom_call.1} parent=1 // pred_fallthru
      _
    %3353 = vsyncpa [#allocation3], 1

</llo_original>
